<compile_context>
chip_gen: v7x
topology: tpu7x:2x2x1
jax: 0.10.0
libtpu: 0.0.40
codegen_flags: <defaults>
</compile_context>

<pallas_src>
import functools

import numpy as np
import jax
import jax.numpy as jnp
from jax.experimental import pallas as pl
from jax.experimental.pallas import tpu as pltpu

BN_EPS = 1e-3


# ----------------------------- fused Pallas kernel -----------------------------

def _fused_kernel(x_ref, matA_ref, matB_ref, cw_ref, sw_ref, o_ref, *, W, md, se):
    """pool -> depthwise+foldedBN+ReLU -> SE squeeze/project -> upsample -> x*mask."""
    bb, C, D, HW = x_ref.shape
    Mo = md - 2
    C3 = 3 * C
    CD = C * D
    HI = jax.lax.Precision.HIGHEST

    # ---- packed constants (loaded once, hoisted out of the batch loop) ----
    rA = matA_ref[0:HW, :]                   # (HW, W)  : sum over H / (D*H), keep W
    pdT = matA_ref[HW:HW + D, :]             # (D,  W)  : adaptive pool D->md (lane-padded)
    pwT = matA_ref[HW + D:HW + D + W, :]     # (W,  W)  : adaptive pool W->md (lane-padded)
    uw = matB_ref[:, 0:HW]                   # (Mo, HW) : nearest upsample W, tiled over H
    ud = matB_ref[:, HW:HW + D]              # (Mo, D)  : nearest upsample D
    dw0 = cw_ref[:, 0:1]                     # (3C, 1)  depthwise taps (BN-folded)
    dw1 = cw_ref[:, 1:2]
    dw2 = cw_ref[:, 2:3]
    bfold = cw_ref[:, 3:4]                   # (3C, 1)  BN-folded bias
    wp = cw_ref[:, 4:4 + se]                 # (3C, SE) project weight
    bp = cw_ref[:, 4 + se:5 + se]            # (3C, 1)  project bias
    wr = sw_ref[:, 0:C3]                     # (SE, 3C) squeeze weight
    br = sw_ref[:, C3:C3 + 1]                # (SE, 1)  squeeze bias

    # ---- ONE MXU pass over the whole x block (x read once for pooling) ----
    xall = x_ref[...].reshape(bb * CD, HW)                        # layout-free reshape
    z_all = jnp.dot(xall, rA, preferred_element_type=jnp.float32,
                    precision=HI)                                 # (bb*C*D, W)
    # z_all[(b,c,d), w] = sum_h x[b,c,d,h,w] / (D*H)

    for b in range(bb):                      # bb is 1 (gridded) or B (single step)
        zr = z_all[b * CD:(b + 1) * CD].reshape(C, D, W)
        ph = jnp.sum(zr, axis=1)                                  # (C, W): mean over (D, H)
        pd = jnp.sum(zr, axis=2) * (float(D) / float(W))          # (C, D): mean over (H, W)

        # ---- adaptive pooling to min_dim (tiny MXU dots) ----
        d_pool = jnp.dot(pd, pdT, preferred_element_type=jnp.float32, precision=HI)
        h_pool = jnp.dot(ph, pwT, preferred_element_type=jnp.float32, precision=HI)
        # torch 'w' branch pools identically to the 'd' branch (verified vs module)
        pcat = jnp.concatenate([d_pool, h_pool, d_pool], axis=0)  # (3C, W)

        # ---- depthwise (3,1,1) conv + folded BatchNorm(eval) + ReLU ----
        y = (pcat[:, 0:Mo] * dw0 + pcat[:, 1:Mo + 1] * dw1
             + pcat[:, 2:Mo + 2] * dw2 + bfold)                   # (3C, Mo)
        y = jnp.maximum(y, 0.0)

        # ---- SE squeeze + project (batched over the 3 branches) ----
        zq = jnp.maximum(
            jnp.dot(wr, y, preferred_element_type=jnp.float32, precision=HI) + br,
            0.0)                                                  # (SE, Mo)
        gates = jax.nn.sigmoid(
            jnp.dot(wp, zq, preferred_element_type=jnp.float32, precision=HI) + bp)

        gdw = gates[0:C] * gates[2 * C:3 * C]                     # (C, Mo) d*w gate
        hs = gates[C:2 * C]                                       # (C, Mo) h gate

        # ---- nearest-neighbour upsample as one-hot matmuls ----
        A = jnp.dot(gdw, ud, preferred_element_type=jnp.float32, precision=HI)   # (C, D)
        Bhw = jnp.dot(hs, uw, preferred_element_type=jnp.float32, precision=HI)  # (C, HW)

        # ---- apply mask with one full-slab, lane-dense store (x re-read here) ----
        o_ref[b] = x_ref[b] * A[:, :, None] * Bhw[:, None, :]


# ----------------------------- host-side helpers -----------------------------

def _adaptive_pool_matrix(in_size, out_size):
    """PyTorch adaptive_avg_pool segmentation as an (out, in) averaging matrix."""
    P = np.zeros((out_size, in_size), dtype=np.float32)
    for i in range(out_size):
        start = (i * in_size) // out_size
        end = -((-(i + 1) * in_size) // out_size)      # ceil
        P[i, start:end] = 1.0 / (end - start)
    return P


def _nearest_matrix(out_size, in_size):
    """PyTorch F.interpolate(mode='nearest') as a one-hot (out, in) matrix."""
    idx = np.minimum((np.arange(out_size) * in_size) // out_size, in_size - 1)
    U = np.zeros((out_size, in_size), dtype=np.float32)
    U[np.arange(out_size), idx] = 1.0
    return U


def _build_matrix_slabs(D, H, W):
    """Pack all structural constants into two arrays (matA, matB)."""
    md = min(D, H, W)
    Mo = md - 2
    HW = H * W
    # pooling matrix: R[h*W+w, w'] = (w == w') / (D*H)
    eyeW = np.tile(np.eye(W, dtype=np.float32), (H, 1))           # (HW, W)
    R = eyeW / (D * H)
    # adaptive-pool matrices, transposed, lane-padded to width W (zeros beyond md;
    # the garbage-free padded columns are killed by the zero rows of the upsample)
    PdT = np.zeros((D, W), dtype=np.float32)
    PdT[:, :md] = _adaptive_pool_matrix(D, md).T
    PwT = np.zeros((W, W), dtype=np.float32)
    PwT[:, :md] = _adaptive_pool_matrix(W, md).T
    matA = np.concatenate([R, PdT, PwT], axis=0)                  # (HW + D + W, W)
    # upsample matrices: UwT tiled over H (ST folded in host-side), UdT
    UdT = _nearest_matrix(D, Mo).T                                # (Mo, D)
    UwT = _nearest_matrix(W, Mo).T                                # (Mo, W)
    UwT_hw = np.tile(UwT, (1, H))                                 # (Mo, HW)
    matB = np.concatenate([UwT_hw, UdT], axis=1)                  # (Mo, HW + D)
    return matA, matB


def _single_core_chip():
    """True on single-TensorCore chips (v5e / v6e / lite): fold B into one step."""
    try:
        kind = jax.devices()[0].device_kind.lower()
    except Exception:
        return False
    return any(s in kind for s in ("v5e", "v6e", "lite"))


@functools.partial(jax.jit, static_argnames=("single_step",))
def _forward_impl(x, params, *, single_step):
    dww, g, be, rm, rv, wr, br, wp, bp = params
    B, C, D, H, W = x.shape
    md = min(D, H, W)
    assert md > 2, "min(D, H, W) must exceed the depthwise kernel size (3)"
    HW = H * W
    SE = wr.shape[0]

    # Structural constants (trace-time numpy, DMA'd once, stay VMEM-resident).
    matA_np, matB_np = _build_matrix_slabs(D, H, W)
    matA = jnp.asarray(matA_np)
    matB = jnp.asarray(matB_np)

    # Fold BatchNorm (eval) into the depthwise conv; pack per-channel params.
    scale = g[:, 0] * jax.lax.rsqrt(rv[:, 0] + BN_EPS)            # (3C,)
    dws = dww * scale[:, None]                                    # (3C, 3)
    bfold = be[:, 0] - rm[:, 0] * scale                           # (3C,)
    cw = jnp.concatenate([dws, bfold[:, None], wp, bp], axis=1)   # (3C, 5 + SE)
    sw = jnp.concatenate([wr, br], axis=1)                        # (SE, 3C + 1)

    xf = x.reshape(B, C, D, HW)        # lane-dense view: minor dim = H*W

    # Grid choice: one step for the whole batch on single-core chips, else one
    # step per batch element marked "parallel" (v7x: shards across TensorCores).
    bb = B if single_step else 1
    grid = (B // bb,)

    small = [matA, matB, cw, sw]
    small_specs = [pl.BlockSpec(tuple(int(s) for s in t.shape), lambda i: (0, 0))
                   for t in small]

    out = pl.pallas_call(
        functools.partial(_fused_kernel, W=W, md=md, se=SE),
        out_shape=jax.ShapeDtypeStruct((B, C, D, HW), jnp.float32),
        grid=grid,
        in_specs=[pl.BlockSpec((bb, C, D, HW), lambda i: (i, 0, 0, 0))] + small_specs,
        out_specs=pl.BlockSpec((bb, C, D, HW), lambda i: (i, 0, 0, 0)),
        compiler_params=pltpu.CompilerParams(dimension_semantics=("parallel",)),
    )(xf, *small)
    return out.reshape(B, C, D, H, W)


def attention3d_forward(x, params):
    return _forward_impl(x, params, single_step=_single_core_chip())


# ----------------------------- pure-JAX reference -----------------------------

@jax.jit
def reference_forward(x, params):
    dww, g, be, rm, rv, wr, br, wp, bp = params
    B, C, D, H, W = x.shape
    md = min(D, H, W)
    HI = jax.lax.Precision.HIGHEST
    Pd = jnp.asarray(_adaptive_pool_matrix(D, md))
    Pw = jnp.asarray(_adaptive_pool_matrix(W, md))
    d = jnp.einsum('bcdhw,md->bcm', x, Pd, precision=HI) / (H * W)
    h = jnp.einsum('bcdhw,mw->bcm', x, Pw, precision=HI) / (D * H)
    w = d                                                        # torch w-branch == d-branch pooling
    xcat = jnp.concatenate([d, h, w], axis=1)                    # (B, 3C, md)
    M = xcat.shape[-1]
    y = (xcat[:, :, 0:M - 2] * dww[:, 0][None, :, None]
         + xcat[:, :, 1:M - 1] * dww[:, 1][None, :, None]
         + xcat[:, :, 2:M] * dww[:, 2][None, :, None])
    y = (y - rm[:, 0][None, :, None]) \
        * (g[:, 0] * jax.lax.rsqrt(rv[:, 0] + BN_EPS))[None, :, None] \
        + be[:, 0][None, :, None]
    y = jnp.maximum(y, 0.0)
    z = jnp.einsum('sc,bcm->bsm', wr, y, precision=HI) + br[:, 0][None, :, None]
    z = jnp.maximum(z, 0.0)
    o = jax.nn.sigmoid(jnp.einsum('cs,bsm->bcm', wp, z, precision=HI)
                       + bp[:, 0][None, :, None])
    ds, hs, ws = o[:, 0:C], o[:, C:2 * C], o[:, 2 * C:3 * C]
    Mo = M - 2
    idx_d = jnp.asarray(np.minimum((np.arange(D) * Mo) // D, Mo - 1).astype(np.int32))
    idx_w = jnp.asarray(np.minimum((np.arange(W) * Mo) // W, Mo - 1).astype(np.int32))
    mask = (jnp.take(ds * ws, idx_d, axis=2)[:, :, :, None, None]
            * jnp.take(hs, idx_w, axis=2)[:, :, None, None, :])
    return x * mask


# ----------------------------- main -----------------------------

if __name__ == "__main__":
    key = jax.random.PRNGKey(0)
    keys = jax.random.split(key, 10)

    B, C, D, H, W = 2, 4, 16, 16, 16
    C3 = 3 * C
    SE = max(1, C3 // 48)   # reduction=48

    x = jax.random.normal(keys[0], (B, C, D, H, W), jnp.float32)

    # Deterministic synthetic parameters (shapes follow the module's __init__).
    dww = 0.3 * jax.random.normal(keys[1], (C3, 3), jnp.float32)            # depthwise (3,1,1), no bias
    g = 1.0 + 0.1 * jax.random.normal(keys[2], (C3, 1), jnp.float32)        # BN gamma
    be = 0.1 * jax.random.normal(keys[3], (C3, 1), jnp.float32)             # BN beta
    rm = 0.1 * jax.random.normal(keys[4], (C3, 1), jnp.float32)             # BN running mean
    rv = 1.0 + 0.1 * jnp.abs(jax.random.normal(keys[5], (C3, 1), jnp.float32))  # BN running var
    wr = 0.3 * jax.random.normal(keys[6], (SE, C3), jnp.float32)            # se_reduce weight
    br = 0.1 * jax.random.normal(keys[7], (SE, 1), jnp.float32)             # se_reduce bias
    wp = 0.3 * jax.random.normal(keys[8], (C3, SE), jnp.float32)            # project weight
    bp = 0.1 * jax.random.normal(keys[9], (C3, 1), jnp.float32)             # project bias
    params = (dww, g, be, rm, rv, wr, br, wp, bp)

    out = jax.block_until_ready(attention3d_forward(x, params))

    ref = reference_forward(x, params)
    # Tolerance leaves headroom for MXU pass / accumulation-order differences;
    # observed error is expected to be far below this.
    np.testing.assert_allclose(np.asarray(out), np.asarray(ref), rtol=1e-3, atol=1e-3)

    print("KERNEL_OK")
</pallas_src>

<mosaic_0001>
module attributes {stable_mosaic.version = 11 : i64} {
  func.func @_fused_kernel(%arg0: i32, %arg1: memref<1x4x16x256xf32, #tpu.memory_space<vmem>>, %arg2: memref<288x16xf32, #tpu.memory_space<vmem>>, %arg3: memref<14x272xf32, #tpu.memory_space<vmem>>, %arg4: memref<12x6xf32, #tpu.memory_space<vmem>>, %arg5: memref<1x13xf32, #tpu.memory_space<vmem>>, %arg6: memref<1x4x16x256xf32, #tpu.memory_space<vmem>>) attributes {dimension_semantics = [#tpu.dimension_semantics<parallel>], iteration_bounds = array<i64: 2>, scalar_prefetch = 0 : i64, scratch_operands = 0 : i64, tpu.core_type = #tpu.core_type<tc>, window_params = [{transform_indices = @transform_0, window_bounds = array<i64: 1, 4, 16, 256>}, {pipeline_mode = #tpu.pipeline_mode<synchronous>, transform_indices = @transform_1, window_bounds = array<i64: 288, 16>}, {pipeline_mode = #tpu.pipeline_mode<synchronous>, transform_indices = @transform_2, window_bounds = array<i64: 14, 272>}, {pipeline_mode = #tpu.pipeline_mode<synchronous>, transform_indices = @transform_3, window_bounds = array<i64: 12, 6>}, {pipeline_mode = #tpu.pipeline_mode<synchronous>, transform_indices = @transform_4, window_bounds = array<i64: 1, 13>}, {transform_indices = @transform_5, window_bounds = array<i64: 1, 4, 16, 256>}]} {
    %c0 = arith.constant 0 : index
    %c0_0 = arith.constant 0 : index
    %0 = vector.load %arg2[%c0, %c0_0] : memref<288x16xf32, #tpu.memory_space<vmem>>, vector<256x16xf32>
    %c256 = arith.constant 256 : index
    %c0_1 = arith.constant 0 : index
    %1 = vector.load %arg2[%c256, %c0_1] : memref<288x16xf32, #tpu.memory_space<vmem>>, vector<16x16xf32>
    %c272 = arith.constant 272 : index
    %c0_2 = arith.constant 0 : index
    %2 = vector.load %arg2[%c272, %c0_2] : memref<288x16xf32, #tpu.memory_space<vmem>>, vector<16x16xf32>
    %c0_3 = arith.constant 0 : index
    %c0_4 = arith.constant 0 : index
    %3 = vector.load %arg3[%c0_3, %c0_4] : memref<14x272xf32, #tpu.memory_space<vmem>>, vector<14x256xf32>
    %c0_5 = arith.constant 0 : index
    %c256_6 = arith.constant 256 : index
    %4 = vector.load %arg3[%c0_5, %c256_6] : memref<14x272xf32, #tpu.memory_space<vmem>>, vector<14x16xf32>
    %c0_7 = arith.constant 0 : index
    %c0_8 = arith.constant 0 : index
    %5 = vector.load %arg4[%c0_7, %c0_8] : memref<12x6xf32, #tpu.memory_space<vmem>>, vector<12x1xf32>
    %c0_9 = arith.constant 0 : index
    %c1 = arith.constant 1 : index
    %6 = vector.load %arg4[%c0_9, %c1] : memref<12x6xf32, #tpu.memory_space<vmem>>, vector<12x1xf32>
    %c0_10 = arith.constant 0 : index
    %c2 = arith.constant 2 : index
    %7 = vector.load %arg4[%c0_10, %c2] : memref<12x6xf32, #tpu.memory_space<vmem>>, vector<12x1xf32>
    %c0_11 = arith.constant 0 : index
    %c3 = arith.constant 3 : index
    %8 = vector.load %arg4[%c0_11, %c3] : memref<12x6xf32, #tpu.memory_space<vmem>>, vector<12x1xf32>
    %c0_12 = arith.constant 0 : index
    %c4 = arith.constant 4 : index
    %9 = vector.load %arg4[%c0_12, %c4] : memref<12x6xf32, #tpu.memory_space<vmem>>, vector<12x1xf32>
    %c0_13 = arith.constant 0 : index
    %c5 = arith.constant 5 : index
    %10 = vector.load %arg4[%c0_13, %c5] : memref<12x6xf32, #tpu.memory_space<vmem>>, vector<12x1xf32>
    %c0_14 = arith.constant 0 : index
    %c0_15 = arith.constant 0 : index
    %11 = vector.load %arg5[%c0_14, %c0_15] : memref<1x13xf32, #tpu.memory_space<vmem>>, vector<1x12xf32>
    %c0_16 = arith.constant 0 : index
    %c12 = arith.constant 12 : index
    %12 = vector.load %arg5[%c0_16, %c12] : memref<1x13xf32, #tpu.memory_space<vmem>>, vector<1x1xf32>
    %c0_17 = arith.constant 0 : index
    %c0_18 = arith.constant 0 : index
    %c0_19 = arith.constant 0 : index
    %c0_20 = arith.constant 0 : index
    %13 = vector.load %arg1[%c0_17, %c0_18, %c0_19, %c0_20] : memref<1x4x16x256xf32, #tpu.memory_space<vmem>>, vector<1x4x16x256xf32>
    %14 = vector.shape_cast %13 : vector<1x4x16x256xf32> to vector<64x256xf32>
    %cst = arith.constant dense<0.000000e+00> : vector<64x16xf32>
    %15 = tpu.matmul %14, %0, %cst {dimension_numbers = #tpu.dot_dimension_numbers<[1], [0], [0], [1], [0, 0, 1, 1], [], []>, precision = #tpu.contract_precision<fp32>} : vector<64x256xf32>, vector<256x16xf32>, vector<64x16xf32> -> vector<64x16xf32>
    %16 = vector.shape_cast %15 : vector<64x16xf32> to vector<4x16x16xf32>
    %cst_21 = arith.constant dense<0.000000e+00> : vector<4x16xf32>
    %17 = vector.multi_reduction <add>, %16, %cst_21 [1] : vector<4x16x16xf32> to vector<4x16xf32>
    %cst_22 = arith.constant dense<0.000000e+00> : vector<4x16xf32>
    %18 = vector.multi_reduction <add>, %16, %cst_22 [2] : vector<4x16x16xf32> to vector<4x16xf32>
    %cst_23 = arith.constant 1.000000e+00 : f32
    %19 = vector.broadcast %cst_23 : f32 to vector<4x16xf32>
    %20 = arith.mulf %18, %19 : vector<4x16xf32>
    %cst_24 = arith.constant dense<0.000000e+00> : vector<4x16xf32>
    %21 = tpu.matmul %20, %1, %cst_24 {dimension_numbers = #tpu.dot_dimension_numbers<[1], [0], [0], [1], [0, 0, 1, 1], [], []>, precision = #tpu.contract_precision<fp32>} : vector<4x16xf32>, vector<16x16xf32>, vector<4x16xf32> -> vector<4x16xf32>
    %cst_25 = arith.constant dense<0.000000e+00> : vector<4x16xf32>
    %22 = tpu.matmul %17, %2, %cst_25 {dimension_numbers = #tpu.dot_dimension_numbers<[1], [0], [0], [1], [0, 0, 1, 1], [], []>, precision = #tpu.contract_precision<fp32>} : vector<4x16xf32>, vector<16x16xf32>, vector<4x16xf32> -> vector<4x16xf32>
    %23 = tpu.concatenate %21, %22, %21 in 0 : vector<4x16xf32>, vector<4x16xf32>, vector<4x16xf32> -> vector<12x16xf32>
    %24 = vector.extract_strided_slice %23 {offsets = [0, 0], sizes = [12, 14], strides = [1, 1]} : vector<12x16xf32> to vector<12x14xf32>
    %25 = vector.broadcast %5 : vector<12x1xf32> to vector<12x14xf32>
    %26 = arith.mulf %24, %25 : vector<12x14xf32>
    %27 = vector.extract_strided_slice %23 {offsets = [0, 1], sizes = [12, 14], strides = [1, 1]} : vector<12x16xf32> to vector<12x14xf32>
    %28 = vector.broadcast %6 : vector<12x1xf32> to vector<12x14xf32>
    %29 = arith.mulf %27, %28 : vector<12x14xf32>
    %30 = arith.addf %26, %29 : vector<12x14xf32>
    %31 = vector.extract_strided_slice %23 {offsets = [0, 2], sizes = [12, 14], strides = [1, 1]} : vector<12x16xf32> to vector<12x14xf32>
    %32 = vector.broadcast %7 : vector<12x1xf32> to vector<12x14xf32>
    %33 = arith.mulf %31, %32 : vector<12x14xf32>
    %34 = arith.addf %30, %33 : vector<12x14xf32>
    %35 = vector.broadcast %8 : vector<12x1xf32> to vector<12x14xf32>
    %36 = arith.addf %34, %35 : vector<12x14xf32>
    %cst_26 = arith.constant 0.000000e+00 : f32
    %37 = vector.broadcast %cst_26 : f32 to vector<12x14xf32>
    %38 = arith.maximumf %36, %37 : vector<12x14xf32>
    %cst_27 = arith.constant dense<0.000000e+00> : vector<1x14xf32>
    %39 = tpu.matmul %11, %38, %cst_27 {dimension_numbers = #tpu.dot_dimension_numbers<[1], [0], [0], [1], [0, 0, 1, 1], [], []>, precision = #tpu.contract_precision<fp32>} : vector<1x12xf32>, vector<12x14xf32>, vector<1x14xf32> -> vector<1x14xf32>
    %40 = vector.broadcast %12 : vector<1x1xf32> to vector<1x14xf32>
    %41 = arith.addf %39, %40 : vector<1x14xf32>
    %cst_28 = arith.constant 0.000000e+00 : f32
    %42 = vector.broadcast %cst_28 : f32 to vector<1x14xf32>
    %43 = arith.maximumf %41, %42 : vector<1x14xf32>
    %cst_29 = arith.constant dense<0.000000e+00> : vector<12x14xf32>
    %44 = tpu.matmul %9, %43, %cst_29 {dimension_numbers = #tpu.dot_dimension_numbers<[1], [0], [0], [1], [0, 0, 1, 1], [], []>, precision = #tpu.contract_precision<fp32>} : vector<12x1xf32>, vector<1x14xf32>, vector<12x14xf32> -> vector<12x14xf32>
    %45 = vector.broadcast %10 : vector<12x1xf32> to vector<12x14xf32>
    %46 = arith.addf %44, %45 : vector<12x14xf32>
    %47 = arith.negf %46 : vector<12x14xf32>
    %48 = math.exp %47 : vector<12x14xf32>
    %cst_30 = arith.constant 1.000000e+00 : f32
    %49 = vector.broadcast %cst_30 : f32 to vector<12x14xf32>
    %50 = arith.addf %49, %48 : vector<12x14xf32>
    %51 = arith.divf %49, %50 : vector<12x14xf32>
    %52 = vector.extract_strided_slice %51 {offsets = [0, 0], sizes = [4, 14], strides = [1, 1]} : vector<12x14xf32> to vector<4x14xf32>
    %53 = vector.extract_strided_slice %51 {offsets = [8, 0], sizes = [4, 14], strides = [1, 1]} : vector<12x14xf32> to vector<4x14xf32>
    %54 = arith.mulf %52, %53 : vector<4x14xf32>
    %55 = vector.extract_strided_slice %51 {offsets = [4, 0], sizes = [4, 14], strides = [1, 1]} : vector<12x14xf32> to vector<4x14xf32>
    %cst_31 = arith.constant dense<0.000000e+00> : vector<4x16xf32>
    %56 = tpu.matmul %54, %4, %cst_31 {dimension_numbers = #tpu.dot_dimension_numbers<[1], [0], [0], [1], [0, 0, 1, 1], [], []>, precision = #tpu.contract_precision<fp32>} : vector<4x14xf32>, vector<14x16xf32>, vector<4x16xf32> -> vector<4x16xf32>
    %cst_32 = arith.constant dense<0.000000e+00> : vector<4x256xf32>
    %57 = tpu.matmul %55, %3, %cst_32 {dimension_numbers = #tpu.dot_dimension_numbers<[1], [0], [0], [1], [0, 0, 1, 1], [], []>, precision = #tpu.contract_precision<fp32>} : vector<4x14xf32>, vector<14x256xf32>, vector<4x256xf32> -> vector<4x256xf32>
    %c0_33 = arith.constant 0 : index
    %c0_34 = arith.constant 0 : index
    %c0_35 = arith.constant 0 : index
    %c0_36 = arith.constant 0 : index
    %58 = vector.load %arg1[%c0_33, %c0_34, %c0_35, %c0_36] : memref<1x4x16x256xf32, #tpu.memory_space<vmem>>, vector<1x4x16x256xf32>
    %59 = vector.shape_cast %58 : vector<1x4x16x256xf32> to vector<4x16x256xf32>
    %60 = vector.shape_cast %56 : vector<4x16xf32> to vector<4x16x1xf32>
    %61 = vector.broadcast %60 : vector<4x16x1xf32> to vector<4x16x256xf32>
    %62 = arith.mulf %59, %61 : vector<4x16x256xf32>
    %63 = vector.shape_cast %57 : vector<4x256xf32> to vector<4x1x256xf32>
    %64 = vector.broadcast %63 : vector<4x1x256xf32> to vector<4x16x256xf32>
    %65 = arith.mulf %62, %64 : vector<4x16x256xf32>
    %c0_37 = arith.constant 0 : index
    %c0_38 = arith.constant 0 : index
    %c0_39 = arith.constant 0 : index
    %c0_40 = arith.constant 0 : index
    %66 = vector.load %arg6[%c0_37, %c0_38, %c0_39, %c0_40] : memref<1x4x16x256xf32, #tpu.memory_space<vmem>>, vector<1x4x16x256xf32>
    %67 = vector.shape_cast %66 : vector<1x4x16x256xf32> to vector<4x16x256xf32>
    %68 = vector.shape_cast %65 : vector<4x16x256xf32> to vector<1x4x16x256xf32>
    tpu.vector_store %arg6[%c0_37, %c0_38, %c0_39, %c0_40], %68 {strides = array<i32>} : memref<1x4x16x256xf32, #tpu.memory_space<vmem>>, vector<1x4x16x256xf32>,
    return
  }
  func.func @transform_0(%arg0: i32) -> (i32, i32, i32, i32) {
    %c0_i32 = arith.constant 0 : i32
    %c0_i32_0 = arith.constant 0 : i32
    %c0_i32_1 = arith.constant 0 : i32
    %c0_i32_2 = arith.constant 0 : i32
    return %arg0, %c0_i32, %c0_i32_0, %c0_i32_1 : i32, i32, i32, i32
  }
  func.func @transform_1(%arg0: i32) -> (i32, i32) {
    %c0_i32 = arith.constant 0 : i32
    %c0_i32_0 = arith.constant 0 : i32
    %c0_i32_1 = arith.constant 0 : i32
    return %c0_i32, %c0_i32_0 : i32, i32
  }
  func.func @transform_2(%arg0: i32) -> (i32, i32) {
    %c0_i32 = arith.constant 0 : i32
    %c0_i32_0 = arith.constant 0 : i32
    %c0_i32_1 = arith.constant 0 : i32
    return %c0_i32, %c0_i32_0 : i32, i32
  }
  func.func @transform_3(%arg0: i32) -> (i32, i32) {
    %c0_i32 = arith.constant 0 : i32
    %c0_i32_0 = arith.constant 0 : i32
    %c0_i32_1 = arith.constant 0 : i32
    return %c0_i32, %c0_i32_0 : i32, i32
  }
  func.func @transform_4(%arg0: i32) -> (i32, i32) {
    %c0_i32 = arith.constant 0 : i32
    %c0_i32_0 = arith.constant 0 : i32
    %c0_i32_1 = arith.constant 0 : i32
    return %c0_i32, %c0_i32_0 : i32, i32
  }
  func.func @transform_5(%arg0: i32) -> (i32, i32, i32, i32) {
    %c0_i32 = arith.constant 0 : i32
    %c0_i32_0 = arith.constant 0 : i32
    %c0_i32_1 = arith.constant 0 : i32
    %c0_i32_2 = arith.constant 0 : i32
    return %arg0, %c0_i32, %c0_i32_0, %c0_i32_1 : i32, i32, i32, i32
  }
}

</mosaic_0001>

<llo_original>
// kernel: _forward_impl.1
$region0: #{_forward_impl.1}
  #allocation0 [shape = 'u32[]', space=smem, size = 0x4, offset = 0x4, fixed_abs, tag = 'smem constant byte address 0x4 - core index']
  #allocation1 [shape = 'u32[144,128]{1,0:T(1,128)}', space=vmem, size = 0x12000, scoped, tag = 'internal scratch']
  %s0 = inlined_call_operand.vmem [shape: f32[2,4,16,256], index: 0, kind: input, shape index: {}]
  %s1 = inlined_call_operand.vmem [shape: f32[288,16], index: 1, kind: input, shape index: {}]
  %s2 = inlined_call_operand.vmem [shape: f32[14,272], index: 2, kind: input, shape index: {}]
  %s3 = inlined_call_operand.vmem [shape: f32[12,6], index: 3, kind: input, shape index: {}]
  %s4 = inlined_call_operand.vmem [shape: f32[1,13], index: 4, kind: input, shape index: {}]
  %s5 = inlined_call_operand.vmem [shape: f32[2,4,16,256], index: 5, kind: output, shape index: {}]
  %s6 = sld [smem:[#allocation0]]
  $region53: #{_forward_impl.1} parent=0
    _
  %s8 = ssub.s32 1, %s6
  %s9 = scalar_select 0, %s8, %s6
  loop: start=0, step=1, limit=4
  $region2: #{_forward_impl.1} parent=0 // loop_pre_header
    _
  $region3: #{_forward_impl.1} parent=0 // loop_header
    %s11 = sphi 0, %s15
    %p12 = scmp.ge.s32.totalorder %s11, 4
    %s21 = sphi 0, %s23
    %s24 = sphi 0, %s21
    %s25 = sphi 0, %s24
    %s41 = sphi 0, %s25
    %s45 = sphi 0, %s45
    %s47 = sphi 0, %s45
    %s48 = sphi 0, %s47
    %s62 = sphi 0, %s48
    %s66 = sphi 0, %s66
    %s68 = sphi 0, %s66
    %s69 = sphi 0, %s68
    %s83 = sphi 0, %s69
    %s87 = sphi 0, %s87
    %s89 = sphi 0, %s87
    %s90 = sphi 0, %s89
    %s104 = sphi 0, %s90
    %s108 = sphi 0, %s108
    %s110 = sphi 0, %s108
    %s111 = sphi 0, %s110
    %s125 = sphi 0, %s111
    %s131 = sphi 0, %s133
    %s134 = sphi 0, %s131
    %s135 = sphi 0, %s134
    %s151 = sphi 0, %s135
  $region4: #{_forward_impl.1} parent=0 // loop_header_branch
    %14 = sbr.rel (%p12) target = $region8
  $region5: #{_forward_impl.1} parent=0 // loop_body
    %s16 = ssub.s32 %s11, 1
    %s17 = ssub.s32 %s11, 2
    %s18 = sadd.s32 %s11, 1
    %s19 = ssub.s32 %s11, %s18
    %p20 = scmp.eq.s32.totalorder %s19, 0
    %s22 = sadd.s32 %s21, 1
    %s23 = scalar_select %p20, %s21, %s22
    %p26 = pneg %p20
    %p27 = scmp.eq.s32.totalorder %s11, 1
    %p28 = por %p26, %p27
    %p29 = scmp.ne.s32.totalorder %s21, %s24
    %p30 = scmp.eq.s32.totalorder %s11, 0
    %p31 = por %p29, %p30
    %p32 = scmp.ne.s32.totalorder %s21, %s24
    %p33 = scmp.eq.s32.totalorder %s16, 1
    %p34 = por %p32, %p33
    %p35 = scmp.ne.s32.totalorder %s24, %s25
    %p36 = scmp.eq.s32.totalorder %s16, 0
    %p37 = por %p35, %p36
    %p38 = scmp.ne.s32.totalorder %s24, %s25
    %p39 = scmp.eq.s32.totalorder %s17, 1
    %p40 = por %p38, %p39
    %p42 = scmp.ne.s32.totalorder %s25, %s41
    %p43 = scmp.eq.s32.totalorder %s17, 0
    %p44 = por %p42, %p43
    %s46 = sadd.s32 %s45, 1
    %p49 = scmp.eq.s32.totalorder %s11, 1
    %p50 = scmp.ne.s32.totalorder %s45, %s47
    %p51 = scmp.eq.s32.totalorder %s11, 0
    %p52 = por %p50, %p51
    %p53 = scmp.ne.s32.totalorder %s45, %s47
    %p54 = scmp.eq.s32.totalorder %s16, 1
    %p55 = por %p53, %p54
    %p56 = scmp.ne.s32.totalorder %s47, %s48
    %p57 = scmp.eq.s32.totalorder %s16, 0
    %p58 = por %p56, %p57
    %p59 = scmp.ne.s32.totalorder %s47, %s48
    %p60 = scmp.eq.s32.totalorder %s17, 1
    %p61 = por %p59, %p60
    %p63 = scmp.ne.s32.totalorder %s48, %s62
    %p64 = scmp.eq.s32.totalorder %s17, 0
    %p65 = por %p63, %p64
    %s67 = sadd.s32 %s66, 1
    %p70 = scmp.eq.s32.totalorder %s11, 1
    %p71 = scmp.ne.s32.totalorder %s66, %s68
    %p72 = scmp.eq.s32.totalorder %s11, 0
    %p73 = por %p71, %p72
    %p74 = scmp.ne.s32.totalorder %s66, %s68
    %p75 = scmp.eq.s32.totalorder %s16, 1
    %p76 = por %p74, %p75
    %p77 = scmp.ne.s32.totalorder %s68, %s69
    %p78 = scmp.eq.s32.totalorder %s16, 0
    %p79 = por %p77, %p78
    %p80 = scmp.ne.s32.totalorder %s68, %s69
    %p81 = scmp.eq.s32.totalorder %s17, 1
    %p82 = por %p80, %p81
    %p84 = scmp.ne.s32.totalorder %s69, %s83
    %p85 = scmp.eq.s32.totalorder %s17, 0
    %p86 = por %p84, %p85
    %s88 = sadd.s32 %s87, 1
    %p91 = scmp.eq.s32.totalorder %s11, 1
    %p92 = scmp.ne.s32.totalorder %s87, %s89
    %p93 = scmp.eq.s32.totalorder %s11, 0
    %p94 = por %p92, %p93
    %p95 = scmp.ne.s32.totalorder %s87, %s89
    %p96 = scmp.eq.s32.totalorder %s16, 1
    %p97 = por %p95, %p96
    %p98 = scmp.ne.s32.totalorder %s89, %s90
    %p99 = scmp.eq.s32.totalorder %s16, 0
    %p100 = por %p98, %p99
    %p101 = scmp.ne.s32.totalorder %s89, %s90
    %p102 = scmp.eq.s32.totalorder %s17, 1
    %p103 = por %p101, %p102
    %p105 = scmp.ne.s32.totalorder %s90, %s104
    %p106 = scmp.eq.s32.totalorder %s17, 0
    %p107 = por %p105, %p106
    %s109 = sadd.s32 %s108, 1
    %p112 = scmp.eq.s32.totalorder %s11, 1
    %p113 = scmp.ne.s32.totalorder %s108, %s110
    %p114 = scmp.eq.s32.totalorder %s11, 0
    %p115 = por %p113, %p114
    %p116 = scmp.ne.s32.totalorder %s108, %s110
    %p117 = scmp.eq.s32.totalorder %s16, 1
    %p118 = por %p116, %p117
    %p119 = scmp.ne.s32.totalorder %s110, %s111
    %p120 = scmp.eq.s32.totalorder %s16, 0
    %p121 = por %p119, %p120
    %p122 = scmp.ne.s32.totalorder %s110, %s111
    %p123 = scmp.eq.s32.totalorder %s17, 1
    %p124 = por %p122, %p123
    %p126 = scmp.ne.s32.totalorder %s111, %s125
    %p127 = scmp.eq.s32.totalorder %s17, 0
    %p128 = por %p126, %p127
    %s129 = ssub.s32 %s11, %s18
    %p130 = scmp.eq.s32.totalorder %s129, 0
    %s132 = sadd.s32 %s131, 1
    %s133 = scalar_select %p130, %s131, %s132
    %p136 = pneg %p130
    %p137 = scmp.eq.s32.totalorder %s11, 1
    %p138 = por %p136, %p137
    %p139 = scmp.ne.s32.totalorder %s131, %s134
    %p140 = scmp.eq.s32.totalorder %s11, 0
    %p141 = por %p139, %p140
    %p142 = scmp.ne.s32.totalorder %s131, %s134
    %p143 = scmp.eq.s32.totalorder %s16, 1
    %p144 = por %p142, %p143
    %p145 = scmp.ne.s32.totalorder %s134, %s135
    %p146 = scmp.eq.s32.totalorder %s16, 0
    %p147 = por %p145, %p146
    %p148 = scmp.ne.s32.totalorder %s134, %s135
    %p149 = scmp.eq.s32.totalorder %s17, 1
    %p150 = por %p148, %p149
    %p152 = scmp.ne.s32.totalorder %s135, %s151
    %p153 = scmp.eq.s32.totalorder %s17, 0
    %p154 = por %p152, %p153
    %p155 = scmp.le.s32.totalorder 1, %s11
    %p156 = scmp.lt.s32.totalorder %s11, 3
    %p157 = pnand %p155, %p156
    %p158 = pneg %p157
    // Predicated region
    $region9: #{_forward_impl.1} parent=5 // pred_check
      _
    $region10: #{_forward_impl.1} parent=5 // pred_check_branch
      %160 = sbr.rel (%p157) target = $region12
    $region11: #{_forward_impl.1} parent=5 // pred_region
      %s161 = ssub.s32 %s11, 1
      // Predicated region
      $region13: #{_forward_impl.1} parent=11 // pred_check
        %p162 = pneg %p58
      $region14: #{_forward_impl.1} parent=11 // pred_check_branch
        %164 = sbr.rel (%p162) target = $region16
      $region15: #{_forward_impl.1} parent=11 // pred_region
        _
      $region16: #{_forward_impl.1} parent=11 // pred_fallthru
        _
      // Predicated region
      $region17: #{_forward_impl.1} parent=11 // pred_check
        %p165 = pneg %p79
      $region18: #{_forward_impl.1} parent=11 // pred_check_branch
        %167 = sbr.rel (%p165) target = $region20
      $region19: #{_forward_impl.1} parent=11 // pred_region
        _
      $region20: #{_forward_impl.1} parent=11 // pred_fallthru
        _
      // Predicated region
      $region21: #{_forward_impl.1} parent=11 // pred_check
        %p168 = pneg %p100
      $region22: #{_forward_impl.1} parent=11 // pred_check_branch
        %170 = sbr.rel (%p168) target = $region24
      $region23: #{_forward_impl.1} parent=11 // pred_region
        _
      $region24: #{_forward_impl.1} parent=11 // pred_fallthru
        _
      // Predicated region
      $region25: #{_forward_impl.1} parent=11 // pred_check
        %p171 = pneg %p121
      $region26: #{_forward_impl.1} parent=11 // pred_check_branch
        %173 = sbr.rel (%p171) target = $region28
      $region27: #{_forward_impl.1} parent=11 // pred_region
        _
      $region28: #{_forward_impl.1} parent=11 // pred_fallthru
        _
    $region12: #{_forward_impl.1} parent=5 // pred_fallthru
      _
    %p174 = scmp.lt.s32.totalorder %s11, 2
    // Predicated region
    $region29: #{_forward_impl.1} parent=5 // pred_check
      %p175 = pneg %p174
    $region30: #{_forward_impl.1} parent=5 // pred_check_branch
      %177 = sbr.rel (%p175) target = $region32
    $region31: #{_forward_impl.1} parent=5 // pred_region
      // Predicated region
      $region33: #{_forward_impl.1} parent=31 // pred_check
        %p178 = pneg %p31
      $region34: #{_forward_impl.1} parent=31 // pred_check_branch
        %180 = sbr.rel (%p178) target = $region36
      $region35: #{_forward_impl.1} parent=31 // pred_region
        %p181 = scmp.lt.s32.totalorder %s11, 1
        %s182 = scalar_select %p181, %s11, 1
        %s183 = smul.addr %s182, 16
        %s184 = smul.addr %s183, 8
        %s185 = scalar_lea.vmem %s0, %s184
      $region36: #{_forward_impl.1} parent=31 // pred_fallthru
        _
    $region32: #{_forward_impl.1} parent=5 // pred_fallthru
      _
    %p186 = scmp.le.s32.totalorder 1, %s11
    %p187 = scmp.lt.s32.totalorder %s11, 3
    %p188 = pnand %p186, %p187
    %p189 = pneg %p188
    // Predicated region
    $region37: #{_forward_impl.1} parent=5 // pred_check
      _
    $region38: #{_forward_impl.1} parent=5 // pred_check_branch
      %191 = sbr.rel (%p188) target = $region40
    $region39: #{_forward_impl.1} parent=5 // pred_region
      %s192 = ssub.s32 %s11, 1
      %p193 = scmp.lt.s32.totalorder %s16, 1
      %s194 = scalar_select %p193, %s16, 1
      %s195 = smul.addr %s194, 16
      %s196 = smul.addr %s195, 8
      %s197 = scalar_lea.vmem %s0, %s196
      %p198 = pneg %p37
      %p199 = pneg %p34
      %p200 = pneg %p58
      %p201 = pneg %p55
      %p202 = pneg %p79
      %p203 = pneg %p76
      %p204 = pneg %p100
      %p205 = pneg %p97
      %p206 = pneg %p121
      %p207 = pneg %p118
      %p208 = pneg %p147
      %p209 = pneg %p144
      %p210 = scmp.lt.s32.totalorder %s16, 1
      %s211 = scalar_select %p210, %s16, 1
      %s212 = smul.addr %s211, 16
      %s213 = smul.addr %s212, 8
      %s214 = scalar_lea.vmem %s5, %s213
      %p215 = scmp.lt.s32.totalorder %s16, 1
      %s216 = scalar_select %p215, %s16, 1
      %s217 = smul.addr %s216, 16
      %s218 = smul.addr %s217, 8
      %s219 = scalar_lea.vmem %s0, %s218
      %p220 = scmp.lt.s32.totalorder %s16, 1
      %s221 = scalar_select %p220, %s16, 1
      %s222 = smul.addr %s221, 16
      %s223 = smul.addr %s222, 8
      %s224 = scalar_lea.vmem %s5, %s223
      %v225 = vld [vmem:[%s1] sm:$0xff]
      %v226 = vld [vmem:[%s1 + $0x8] sm:$0xff]
      %v227 = vld [vmem:[%s1 + $0x10] sm:$0xff]
      %v228 = vld [vmem:[%s1 + $0x18] sm:$0xff]
      %v229 = vld [vmem:[%s1 + $0x20] sm:$0xff]
      %v230 = vld [vmem:[%s1 + $0x28] sm:$0xff]
      %v231 = vld [vmem:[%s1 + $0x30] sm:$0xff]
      %v232 = vld [vmem:[%s1 + $0x38] sm:$0xff]
      %v233 = vld [vmem:[%s1 + $0x40] sm:$0xff]
      %v234 = vld [vmem:[%s1 + $0x48] sm:$0xff]
      %v235 = vld [vmem:[%s1 + $0x50] sm:$0xff]
      %v236 = vld [vmem:[%s1 + $0x58] sm:$0xff]
      %v237 = vld [vmem:[%s1 + $0x60] sm:$0xff]
      %v238 = vld [vmem:[%s1 + $0x68] sm:$0xff]
      %v239 = vld [vmem:[%s1 + $0x70] sm:$0xff]
      %v240 = vld [vmem:[%s1 + $0x78] sm:$0xff]
      %v241 = vld [vmem:[%s1 + $0x80] sm:$0xff]
      %v242 = vld [vmem:[%s1 + $0x88] sm:$0xff]
      %v243 = vld [vmem:[%s1 + $0x90] sm:$0xff]
      %v244 = vld [vmem:[%s1 + $0x98] sm:$0xff]
      %v245 = vld [vmem:[%s1 + $0xa0] sm:$0xff]
      %v246 = vld [vmem:[%s1 + $0xa8] sm:$0xff]
      %v247 = vld [vmem:[%s1 + $0xb0] sm:$0xff]
      %v248 = vld [vmem:[%s1 + $0xb8] sm:$0xff]
      %v249 = vld [vmem:[%s1 + $0xc0] sm:$0xff]
      %v250 = vld [vmem:[%s1 + $0xc8] sm:$0xff]
      %v251 = vld [vmem:[%s1 + $0xd0] sm:$0xff]
      %v252 = vld [vmem:[%s1 + $0xd8] sm:$0xff]
      %v253 = vld [vmem:[%s1 + $0xe0] sm:$0xff]
      %v254 = vld [vmem:[%s1 + $0xe8] sm:$0xff]
      %v255 = vld [vmem:[%s1 + $0xf0] sm:$0xff]
      %v256 = vld [vmem:[%s1 + $0xf8] sm:$0xff]
      %v257 = vld [vmem:[%s1 + $0x100] sm:$0xff]
      %v258 = vld [vmem:[%s1 + $0x108] sm:$0xff]
      %v259 = vld [vmem:[%s1 + $0x110] sm:$0xff]
      %v260 = vld [vmem:[%s1 + $0x118] sm:$0xff]
      %v261 = vld [vmem:[%s2] sm:$0xff]
      %v262 = vld [vmem:[%s2 + $0x8] sm:$0xff]
      %v263 = vld [vmem:[%s2 + $0x18] sm:$0x3f]
      %v264 = vld [vmem:[%s2 + $0x20] sm:$0x3f]
      %v265 = vld [vmem:[%s2 + $0x10] sm:$0xff]
      %v266 = vld [vmem:[%s2 + $0x28] sm:$0x3f]
      %v267 = vld [vmem:[%s3] sm:$0xff]
      %v268 = vld [vmem:[%s3 + $0x8] sm:$0xf]
      %v269 = vld [vmem:[%s4] sm:$0x1]
      %v270 = vld [vmem:[%s219] sm:$0xff]
      %v271 = vld [vmem:[%s219 + $0x8] sm:$0xff]
      %v272 = vld [vmem:[%s219 + $0x10] sm:$0xff]
      %v273 = vld [vmem:[%s219 + $0x18] sm:$0xff]
      %v274 = vld [vmem:[%s219 + $0x20] sm:$0xff]
      %v275 = vld [vmem:[%s219 + $0x28] sm:$0xff]
      %v276 = vld [vmem:[%s219 + $0x30] sm:$0xff]
      %v277 = vld [vmem:[%s219 + $0x38] sm:$0xff]
      %v278 = vld [vmem:[%s219 + $0x40] sm:$0xff]
      %v279 = vld [vmem:[%s219 + $0x48] sm:$0xff]
      %v280 = vld [vmem:[%s219 + $0x50] sm:$0xff]
      %v281 = vld [vmem:[%s219 + $0x58] sm:$0xff]
      %v282 = vld [vmem:[%s219 + $0x60] sm:$0xff]
      %v283 = vld [vmem:[%s219 + $0x68] sm:$0xff]
      %v284 = vld [vmem:[%s219 + $0x70] sm:$0xff]
      %v285 = vld [vmem:[%s219 + $0x78] sm:$0xff]
      %286 = vmatprep.subr.mxu0 0.0
      %v287 = vand.u32 %v225, 4294901760
      %288 = vmatpush1.msra.mxu0 %v287
      %289 = vmatprep.subr.mxu0 0.0
      %v290 = vand.u32 %v226, 4294901760
      %291 = vmatpush1.msra.mxu0 %v290
      %292 = vmatprep.subr.mxu0 0.0
      %v293 = vand.u32 %v227, 4294901760
      %294 = vmatpush1.msra.mxu0 %v293
      %295 = vmatprep.subr.mxu0 0.0
      %v296 = vand.u32 %v228, 4294901760
      %297 = vmatpush1.msra.mxu0 %v296
      %298 = vmatprep.subr.mxu0 0.0
      %v299 = vand.u32 %v229, 4294901760
      %300 = vmatpush1.msra.mxu0 %v299
      %301 = vmatprep.subr.mxu0 0.0
      %v302 = vand.u32 %v230, 4294901760
      %303 = vmatpush1.msra.mxu0 %v302
      %304 = vmatprep.subr.mxu0 0.0
      %v305 = vand.u32 %v231, 4294901760
      %306 = vmatpush1.msra.mxu0 %v305
      %307 = vmatprep.subr.mxu0 0.0
      %v308 = vand.u32 %v232, 4294901760
      %309 = vmatpush1.msra.mxu0 %v308
      %310 = vmatprep.subr.mxu0 0.0
      %v311 = vand.u32 %v233, 4294901760
      %312 = vmatpush1.msra.mxu0 %v311
      %313 = vmatprep.subr.mxu0 0.0
      %v314 = vand.u32 %v234, 4294901760
      %315 = vmatpush1.msra.mxu0 %v314
      %316 = vmatprep.subr.mxu0 0.0
      %v317 = vand.u32 %v235, 4294901760
      %318 = vmatpush1.msra.mxu0 %v317
      %319 = vmatprep.subr.mxu0 0.0
      %v320 = vand.u32 %v236, 4294901760
      %321 = vmatpush1.msra.mxu0 %v320
      %322 = vmatprep.subr.mxu0 0.0
      %v323 = vand.u32 %v237, 4294901760
      %324 = vmatpush1.msra.mxu0 %v323
      %325 = vmatprep.subr.mxu0 0.0
      %v326 = vand.u32 %v238, 4294901760
      %327 = vmatpush1.msra.mxu0 %v326
      %328 = vmatprep.subr.mxu0 0.0
      %v329 = vand.u32 %v239, 4294901760
      %330 = vmatpush1.msra.mxu0 %v329
      %331 = vmatprep.subr.mxu0 0.0
      %v332 = vand.u32 %v240, 4294901760
      %333 = vmatpush1.msra.mxu0 %v332
      %334 = vmatprep.subr.mxu0 0.0
      %v335 = vand.u32 %v241, 4294901760
      %336 = vmatpush1.msra.mxu0 %v335
      %337 = vmatprep.subr.mxu0 0.0
      %v338 = vand.u32 %v242, 4294901760
      %339 = vmatpush1.msra.mxu0 %v338
      %340 = vmatprep.subr.mxu0 0.0
      %v341 = vand.u32 %v243, 4294901760
      %342 = vmatpush1.msra.mxu0 %v341
      %343 = vmatprep.subr.mxu0 0.0
      %v344 = vand.u32 %v244, 4294901760
      %345 = vmatpush1.msra.mxu0 %v344
      %346 = vmatprep.subr.mxu0 0.0
      %v347 = vand.u32 %v245, 4294901760
      %348 = vmatpush1.msra.mxu0 %v347
      %349 = vmatprep.subr.mxu0 0.0
      %v350 = vand.u32 %v246, 4294901760
      %351 = vmatpush1.msra.mxu0 %v350
      %352 = vmatprep.subr.mxu0 0.0
      %v353 = vand.u32 %v247, 4294901760
      %354 = vmatpush1.msra.mxu0 %v353
      %355 = vmatprep.subr.mxu0 0.0
      %v356 = vand.u32 %v248, 4294901760
      %357 = vmatpush1.msra.mxu0 %v356
      %358 = vmatprep.subr.mxu0 0.0
      %v359 = vand.u32 %v249, 4294901760
      %360 = vmatpush1.msra.mxu0 %v359
      %361 = vmatprep.subr.mxu0 0.0
      %v362 = vand.u32 %v250, 4294901760
      %363 = vmatpush1.msra.mxu0 %v362
      %364 = vmatprep.subr.mxu0 0.0
      %v365 = vand.u32 %v251, 4294901760
      %366 = vmatpush1.msra.mxu0 %v365
      %367 = vmatprep.subr.mxu0 0.0
      %v368 = vand.u32 %v252, 4294901760
      %369 = vmatpush1.msra.mxu0 %v368
      %370 = vmatprep.subr.mxu0 0.0
      %v371 = vand.u32 %v253, 4294901760
      %372 = vmatpush1.msra.mxu0 %v371
      %373 = vmatprep.subr.mxu0 0.0
      %v374 = vand.u32 %v254, 4294901760
      %375 = vmatpush1.msra.mxu0 %v374
      %376 = vmatprep.subr.mxu0 0.0
      %v377 = vand.u32 %v255, 4294901760
      %378 = vmatpush1.msra.mxu0 %v377
      %379 = vmatprep.subr.mxu0 0.0
      %v380 = vand.u32 %v256, 4294901760
      %381 = vmatpush1.msra.mxu0 %v380
      %v382 = vand.u32 %v271, 4294901760
      %v383 = vsub.f32 %v271, %v382
      %v384 = vand.u32 %v383, 4294901760
      %v385 = vsub.f32 %v383, %v384
      %v386 = vand.u32 %v385, 4294901760
      %387 = vmatprep.mubr.f32.mxu0 %v386
      %v388 = vand.u32 %v270, 4294901760
      %v389 = vsub.f32 %v270, %v388
      %v390 = vand.u32 %v389, 4294901760
      %v391 = vsub.f32 %v389, %v390
      %v392 = vand.u32 %v391, 4294901760
      %393 = vmatmul.mubr.f32.gmra.mrb[0].mxu0 %v392
      %v394 = vpop.f32.mrb[0].mxu0
      %v395 = vadd.f32 0.0, %v394
      %v396 = vpop.f32.mrb[0].mxu0
      %v397 = vand.u32 %v273, 4294901760
      %v398 = vsub.f32 %v273, %v397
      %v399 = vand.u32 %v398, 4294901760
      %v400 = vsub.f32 %v398, %v399
      %v401 = vand.u32 %v400, 4294901760
      %402 = vmatprep.mubr.f32.mxu0 %v401
      %v403 = vand.u32 %v272, 4294901760
      %v404 = vsub.f32 %v272, %v403
      %v405 = vand.u32 %v404, 4294901760
      %v406 = vsub.f32 %v404, %v405
      %v407 = vand.u32 %v406, 4294901760
      %408 = vmatmul.mubr.f32.gmra.mrb[0].mxu0 %v407
      %v409 = vpop.f32.mrb[0].mxu0
      %v410 = vadd.f32 0.0, %v409
      %v411 = vpop.f32.mrb[0].mxu0
      %v412 = vand.u32 %v275, 4294901760
      %v413 = vsub.f32 %v275, %v412
      %v414 = vand.u32 %v413, 4294901760
      %v415 = vsub.f32 %v413, %v414
      %v416 = vand.u32 %v415, 4294901760
      %417 = vmatprep.mubr.f32.mxu0 %v416
      %v418 = vand.u32 %v274, 4294901760
      %v419 = vsub.f32 %v274, %v418
      %v420 = vand.u32 %v419, 4294901760
      %v421 = vsub.f32 %v419, %v420
      %v422 = vand.u32 %v421, 4294901760
      %423 = vmatmul.mubr.f32.gmra.mrb[0].mxu0 %v422
      %v424 = vpop.f32.mrb[0].mxu0
      %v425 = vadd.f32 0.0, %v424
      %v426 = vpop.f32.mrb[0].mxu0
      %v427 = vand.u32 %v277, 4294901760
      %v428 = vsub.f32 %v277, %v427
      %v429 = vand.u32 %v428, 4294901760
      %v430 = vsub.f32 %v428, %v429
      %v431 = vand.u32 %v430, 4294901760
      %432 = vmatprep.mubr.f32.mxu0 %v431
      %v433 = vand.u32 %v276, 4294901760
      %v434 = vsub.f32 %v276, %v433
      %v435 = vand.u32 %v434, 4294901760
      %v436 = vsub.f32 %v434, %v435
      %v437 = vand.u32 %v436, 4294901760
      %438 = vmatmul.mubr.f32.gmra.mrb[0].mxu0 %v437
      %v439 = vpop.f32.mrb[0].mxu0
      %v440 = vadd.f32 0.0, %v439
      %v441 = vpop.f32.mrb[0].mxu0
      %v442 = vand.u32 %v279, 4294901760
      %v443 = vsub.f32 %v279, %v442
      %v444 = vand.u32 %v443, 4294901760
      %v445 = vsub.f32 %v443, %v444
      %v446 = vand.u32 %v445, 4294901760
      %447 = vmatprep.mubr.f32.mxu0 %v446
      %v448 = vand.u32 %v278, 4294901760
      %v449 = vsub.f32 %v278, %v448
      %v450 = vand.u32 %v449, 4294901760
      %v451 = vsub.f32 %v449, %v450
      %v452 = vand.u32 %v451, 4294901760
      %453 = vmatmul.mubr.f32.gmra.mrb[0].mxu0 %v452
      %v454 = vpop.f32.mrb[0].mxu0
      %v455 = vadd.f32 0.0, %v454
      %v456 = vpop.f32.mrb[0].mxu0
      %v457 = vand.u32 %v281, 4294901760
      %v458 = vsub.f32 %v281, %v457
      %v459 = vand.u32 %v458, 4294901760
      %v460 = vsub.f32 %v458, %v459
      %v461 = vand.u32 %v460, 4294901760
      %462 = vmatprep.mubr.f32.mxu0 %v461
      %v463 = vand.u32 %v280, 4294901760
      %v464 = vsub.f32 %v280, %v463
      %v465 = vand.u32 %v464, 4294901760
      %v466 = vsub.f32 %v464, %v465
      %v467 = vand.u32 %v466, 4294901760
      %468 = vmatmul.mubr.f32.gmra.mrb[0].mxu0 %v467
      %v469 = vpop.f32.mrb[0].mxu0
      %v470 = vadd.f32 0.0, %v469
      %v471 = vpop.f32.mrb[0].mxu0
      %v472 = vand.u32 %v283, 4294901760
      %v473 = vsub.f32 %v283, %v472
      %v474 = vand.u32 %v473, 4294901760
      %v475 = vsub.f32 %v473, %v474
      %v476 = vand.u32 %v475, 4294901760
      %477 = vmatprep.mubr.f32.mxu0 %v476
      %v478 = vand.u32 %v282, 4294901760
      %v479 = vsub.f32 %v282, %v478
      %v480 = vand.u32 %v479, 4294901760
      %v481 = vsub.f32 %v479, %v480
      %v482 = vand.u32 %v481, 4294901760
      %483 = vmatmul.mubr.f32.gmra.mrb[0].mxu0 %v482
      %v484 = vpop.f32.mrb[0].mxu0
      %v485 = vadd.f32 0.0, %v484
      %v486 = vpop.f32.mrb[0].mxu0
      %v487 = vand.u32 %v285, 4294901760
      %v488 = vsub.f32 %v285, %v487
      %v489 = vand.u32 %v488, 4294901760
      %v490 = vsub.f32 %v488, %v489
      %v491 = vand.u32 %v490, 4294901760
      %492 = vmatprep.mubr.f32.mxu0 %v491
      %v493 = vand.u32 %v284, 4294901760
      %v494 = vsub.f32 %v284, %v493
      %v495 = vand.u32 %v494, 4294901760
      %v496 = vsub.f32 %v494, %v495
      %v497 = vand.u32 %v496, 4294901760
      %498 = vmatmul.mubr.f32.gmra.mrb[0].mxu0 %v497
      %v499 = vpop.f32.mrb[0].mxu0
      %v500 = vadd.f32 0.0, %v499
      %v501 = vpop.f32.mrb[0].mxu0
      %502 = vdwg.mxu0
      %503 = vmatprep.subr.mxu0 0.0
      %v504 = vand.u32 %v225, 4294901760
      %v505 = vsub.f32 %v225, %v504
      %v506 = vand.u32 %v505, 4294901760
      %v507 = vsub.f32 %v505, %v506
      %v508 = vand.u32 %v507, 4294901760
      %509 = vmatpush1.msra.mxu0 %v508
      %510 = vmatprep.subr.mxu0 0.0
      %v511 = vand.u32 %v226, 4294901760
      %v512 = vsub.f32 %v226, %v511
      %v513 = vand.u32 %v512, 4294901760
      %v514 = vsub.f32 %v512, %v513
      %v515 = vand.u32 %v514, 4294901760
      %516 = vmatpush1.msra.mxu0 %v515
      %517 = vmatprep.subr.mxu0 0.0
      %v518 = vand.u32 %v227, 4294901760
      %v519 = vsub.f32 %v227, %v518
      %v520 = vand.u32 %v519, 4294901760
      %v521 = vsub.f32 %v519, %v520
      %v522 = vand.u32 %v521, 4294901760
      %523 = vmatpush1.msra.mxu0 %v522
      %524 = vmatprep.subr.mxu0 0.0
      %v525 = vand.u32 %v228, 4294901760
      %v526 = vsub.f32 %v228, %v525
      %v527 = vand.u32 %v526, 4294901760
      %v528 = vsub.f32 %v526, %v527
      %v529 = vand.u32 %v528, 4294901760
      %530 = vmatpush1.msra.mxu0 %v529
      %531 = vmatprep.subr.mxu0 0.0
      %v532 = vand.u32 %v229, 4294901760
      %v533 = vsub.f32 %v229, %v532
      %v534 = vand.u32 %v533, 4294901760
      %v535 = vsub.f32 %v533, %v534
      %v536 = vand.u32 %v535, 4294901760
      %537 = vmatpush1.msra.mxu0 %v536
      %538 = vmatprep.subr.mxu0 0.0
      %v539 = vand.u32 %v230, 4294901760
      %v540 = vsub.f32 %v230, %v539
      %v541 = vand.u32 %v540, 4294901760
      %v542 = vsub.f32 %v540, %v541
      %v543 = vand.u32 %v542, 4294901760
      %544 = vmatpush1.msra.mxu0 %v543
      %545 = vmatprep.subr.mxu0 0.0
      %v546 = vand.u32 %v231, 4294901760
      %v547 = vsub.f32 %v231, %v546
      %v548 = vand.u32 %v547, 4294901760
      %v549 = vsub.f32 %v547, %v548
      %v550 = vand.u32 %v549, 4294901760
      %551 = vmatpush1.msra.mxu0 %v550
      %552 = vmatprep.subr.mxu0 0.0
      %v553 = vand.u32 %v232, 4294901760
      %v554 = vsub.f32 %v232, %v553
      %v555 = vand.u32 %v554, 4294901760
      %v556 = vsub.f32 %v554, %v555
      %v557 = vand.u32 %v556, 4294901760
      %558 = vmatpush1.msra.mxu0 %v557
      %559 = vmatprep.subr.mxu0 0.0
      %v560 = vand.u32 %v233, 4294901760
      %v561 = vsub.f32 %v233, %v560
      %v562 = vand.u32 %v561, 4294901760
      %v563 = vsub.f32 %v561, %v562
      %v564 = vand.u32 %v563, 4294901760
      %565 = vmatpush1.msra.mxu0 %v564
      %566 = vmatprep.subr.mxu0 0.0
      %v567 = vand.u32 %v234, 4294901760
      %v568 = vsub.f32 %v234, %v567
      %v569 = vand.u32 %v568, 4294901760
      %v570 = vsub.f32 %v568, %v569
      %v571 = vand.u32 %v570, 4294901760
      %572 = vmatpush1.msra.mxu0 %v571
      %573 = vmatprep.subr.mxu0 0.0
      %v574 = vand.u32 %v235, 4294901760
      %v575 = vsub.f32 %v235, %v574
      %v576 = vand.u32 %v575, 4294901760
      %v577 = vsub.f32 %v575, %v576
      %v578 = vand.u32 %v577, 4294901760
      %579 = vmatpush1.msra.mxu0 %v578
      %580 = vmatprep.subr.mxu0 0.0
      %v581 = vand.u32 %v236, 4294901760
      %v582 = vsub.f32 %v236, %v581
      %v583 = vand.u32 %v582, 4294901760
      %v584 = vsub.f32 %v582, %v583
      %v585 = vand.u32 %v584, 4294901760
      %586 = vmatpush1.msra.mxu0 %v585
      %587 = vmatprep.subr.mxu0 0.0
      %v588 = vand.u32 %v237, 4294901760
      %v589 = vsub.f32 %v237, %v588
      %v590 = vand.u32 %v589, 4294901760
      %v591 = vsub.f32 %v589, %v590
      %v592 = vand.u32 %v591, 4294901760
      %593 = vmatpush1.msra.mxu0 %v592
      %594 = vmatprep.subr.mxu0 0.0
      %v595 = vand.u32 %v238, 4294901760
      %v596 = vsub.f32 %v238, %v595
      %v597 = vand.u32 %v596, 4294901760
      %v598 = vsub.f32 %v596, %v597
      %v599 = vand.u32 %v598, 4294901760
      %600 = vmatpush1.msra.mxu0 %v599
      %601 = vmatprep.subr.mxu0 0.0
      %v602 = vand.u32 %v239, 4294901760
      %v603 = vsub.f32 %v239, %v602
      %v604 = vand.u32 %v603, 4294901760
      %v605 = vsub.f32 %v603, %v604
      %v606 = vand.u32 %v605, 4294901760
      %607 = vmatpush1.msra.mxu0 %v606
      %608 = vmatprep.subr.mxu0 0.0
      %v609 = vand.u32 %v240, 4294901760
      %v610 = vsub.f32 %v240, %v609
      %v611 = vand.u32 %v610, 4294901760
      %v612 = vsub.f32 %v610, %v611
      %v613 = vand.u32 %v612, 4294901760
      %614 = vmatpush1.msra.mxu0 %v613
      %615 = vmatprep.subr.mxu0 0.0
      %v616 = vand.u32 %v241, 4294901760
      %v617 = vsub.f32 %v241, %v616
      %v618 = vand.u32 %v617, 4294901760
      %v619 = vsub.f32 %v617, %v618
      %v620 = vand.u32 %v619, 4294901760
      %621 = vmatpush1.msra.mxu0 %v620
      %622 = vmatprep.subr.mxu0 0.0
      %v623 = vand.u32 %v242, 4294901760
      %v624 = vsub.f32 %v242, %v623
      %v625 = vand.u32 %v624, 4294901760
      %v626 = vsub.f32 %v624, %v625
      %v627 = vand.u32 %v626, 4294901760
      %628 = vmatpush1.msra.mxu0 %v627
      %629 = vmatprep.subr.mxu0 0.0
      %v630 = vand.u32 %v243, 4294901760
      %v631 = vsub.f32 %v243, %v630
      %v632 = vand.u32 %v631, 4294901760
      %v633 = vsub.f32 %v631, %v632
      %v634 = vand.u32 %v633, 4294901760
      %635 = vmatpush1.msra.mxu0 %v634
      %636 = vmatprep.subr.mxu0 0.0
      %v637 = vand.u32 %v244, 4294901760
      %v638 = vsub.f32 %v244, %v637
      %v639 = vand.u32 %v638, 4294901760
      %v640 = vsub.f32 %v638, %v639
      %v641 = vand.u32 %v640, 4294901760
      %642 = vmatpush1.msra.mxu0 %v641
      %643 = vmatprep.subr.mxu0 0.0
      %v644 = vand.u32 %v245, 4294901760
      %v645 = vsub.f32 %v245, %v644
      %v646 = vand.u32 %v645, 4294901760
      %v647 = vsub.f32 %v645, %v646
      %v648 = vand.u32 %v647, 4294901760
      %649 = vmatpush1.msra.mxu0 %v648
      %650 = vmatprep.subr.mxu0 0.0
      %v651 = vand.u32 %v246, 4294901760
      %v652 = vsub.f32 %v246, %v651
      %v653 = vand.u32 %v652, 4294901760
      %v654 = vsub.f32 %v652, %v653
      %v655 = vand.u32 %v654, 4294901760
      %656 = vmatpush1.msra.mxu0 %v655
      %657 = vmatprep.subr.mxu0 0.0
      %v658 = vand.u32 %v247, 4294901760
      %v659 = vsub.f32 %v247, %v658
      %v660 = vand.u32 %v659, 4294901760
      %v661 = vsub.f32 %v659, %v660
      %v662 = vand.u32 %v661, 4294901760
      %663 = vmatpush1.msra.mxu0 %v662
      %664 = vmatprep.subr.mxu0 0.0
      %v665 = vand.u32 %v248, 4294901760
      %v666 = vsub.f32 %v248, %v665
      %v667 = vand.u32 %v666, 4294901760
      %v668 = vsub.f32 %v666, %v667
      %v669 = vand.u32 %v668, 4294901760
      %670 = vmatpush1.msra.mxu0 %v669
      %671 = vmatprep.subr.mxu0 0.0
      %v672 = vand.u32 %v249, 4294901760
      %v673 = vsub.f32 %v249, %v672
      %v674 = vand.u32 %v673, 4294901760
      %v675 = vsub.f32 %v673, %v674
      %v676 = vand.u32 %v675, 4294901760
      %677 = vmatpush1.msra.mxu0 %v676
      %678 = vmatprep.subr.mxu0 0.0
      %v679 = vand.u32 %v250, 4294901760
      %v680 = vsub.f32 %v250, %v679
      %v681 = vand.u32 %v680, 4294901760
      %v682 = vsub.f32 %v680, %v681
      %v683 = vand.u32 %v682, 4294901760
      %684 = vmatpush1.msra.mxu0 %v683
      %685 = vmatprep.subr.mxu0 0.0
      %v686 = vand.u32 %v251, 4294901760
      %v687 = vsub.f32 %v251, %v686
      %v688 = vand.u32 %v687, 4294901760
      %v689 = vsub.f32 %v687, %v688
      %v690 = vand.u32 %v689, 4294901760
      %691 = vmatpush1.msra.mxu0 %v690
      %692 = vmatprep.subr.mxu0 0.0
      %v693 = vand.u32 %v252, 4294901760
      %v694 = vsub.f32 %v252, %v693
      %v695 = vand.u32 %v694, 4294901760
      %v696 = vsub.f32 %v694, %v695
      %v697 = vand.u32 %v696, 4294901760
      %698 = vmatpush1.msra.mxu0 %v697
      %699 = vmatprep.subr.mxu0 0.0
      %v700 = vand.u32 %v253, 4294901760
      %v701 = vsub.f32 %v253, %v700
      %v702 = vand.u32 %v701, 4294901760
      %v703 = vsub.f32 %v701, %v702
      %v704 = vand.u32 %v703, 4294901760
      %705 = vmatpush1.msra.mxu0 %v704
      %706 = vmatprep.subr.mxu0 0.0
      %v707 = vand.u32 %v254, 4294901760
      %v708 = vsub.f32 %v254, %v707
      %v709 = vand.u32 %v708, 4294901760
      %v710 = vsub.f32 %v708, %v709
      %v711 = vand.u32 %v710, 4294901760
      %712 = vmatpush1.msra.mxu0 %v711
      %713 = vmatprep.subr.mxu0 0.0
      %v714 = vand.u32 %v255, 4294901760
      %v715 = vsub.f32 %v255, %v714
      %v716 = vand.u32 %v715, 4294901760
      %v717 = vsub.f32 %v715, %v716
      %v718 = vand.u32 %v717, 4294901760
      %719 = vmatpush1.msra.mxu0 %v718
      %720 = vmatprep.subr.mxu0 0.0
      %v721 = vand.u32 %v256, 4294901760
      %v722 = vsub.f32 %v256, %v721
      %v723 = vand.u32 %v722, 4294901760
      %v724 = vsub.f32 %v722, %v723
      %v725 = vand.u32 %v724, 4294901760
      %726 = vmatpush1.msra.mxu0 %v725
      %v727 = vand.u32 %v271, 4294901760
      %728 = vmatprep.mubr.f32.mxu0 %v727
      %v729 = vand.u32 %v270, 4294901760
      %730 = vmatmul.mubr.f32.gmra.mrb[0].mxu0 %v729
      %v731 = vpop.f32.mrb[0].mxu0
      %v732 = vadd.f32 %v395, %v731
      %v733 = vpop.f32.mrb[0].mxu0
      %v734 = vand.u32 %v273, 4294901760
      %735 = vmatprep.mubr.f32.mxu0 %v734
      %v736 = vand.u32 %v272, 4294901760
      %737 = vmatmul.mubr.f32.gmra.mrb[0].mxu0 %v736
      %v738 = vpop.f32.mrb[0].mxu0
      %v739 = vadd.f32 %v410, %v738
      %v740 = vpop.f32.mrb[0].mxu0
      %v741 = vand.u32 %v275, 4294901760
      %742 = vmatprep.mubr.f32.mxu0 %v741
      %v743 = vand.u32 %v274, 4294901760
      %744 = vmatmul.mubr.f32.gmra.mrb[0].mxu0 %v743
      %v745 = vpop.f32.mrb[0].mxu0
      %v746 = vadd.f32 %v425, %v745
      %v747 = vpop.f32.mrb[0].mxu0
      %v748 = vand.u32 %v277, 4294901760
      %749 = vmatprep.mubr.f32.mxu0 %v748
      %v750 = vand.u32 %v276, 4294901760
      %751 = vmatmul.mubr.f32.gmra.mrb[0].mxu0 %v750
      %v752 = vpop.f32.mrb[0].mxu0
      %v753 = vadd.f32 %v440, %v752
      %v754 = vpop.f32.mrb[0].mxu0
      %v755 = vand.u32 %v279, 4294901760
      %756 = vmatprep.mubr.f32.mxu0 %v755
      %v757 = vand.u32 %v278, 4294901760
      %758 = vmatmul.mubr.f32.gmra.mrb[0].mxu0 %v757
      %v759 = vpop.f32.mrb[0].mxu0
      %v760 = vadd.f32 %v455, %v759
      %v761 = vpop.f32.mrb[0].mxu0
      %v762 = vand.u32 %v281, 4294901760
      %763 = vmatprep.mubr.f32.mxu0 %v762
      %v764 = vand.u32 %v280, 4294901760
      %765 = vmatmul.mubr.f32.gmra.mrb[0].mxu0 %v764
      %v766 = vpop.f32.mrb[0].mxu0
      %v767 = vadd.f32 %v470, %v766
      %v768 = vpop.f32.mrb[0].mxu0
      %v769 = vand.u32 %v283, 4294901760
      %770 = vmatprep.mubr.f32.mxu0 %v769
      %v771 = vand.u32 %v282, 4294901760
      %772 = vmatmul.mubr.f32.gmra.mrb[0].mxu0 %v771
      %v773 = vpop.f32.mrb[0].mxu0
      %v774 = vadd.f32 %v485, %v773
      %v775 = vpop.f32.mrb[0].mxu0
      %v776 = vand.u32 %v285, 4294901760
      %777 = vmatprep.mubr.f32.mxu0 %v776
      %v778 = vand.u32 %v284, 4294901760
      %779 = vmatmul.mubr.f32.gmra.mrb[0].mxu0 %v778
      %v780 = vpop.f32.mrb[0].mxu0
      %v781 = vadd.f32 %v500, %v780
      %v782 = vpop.f32.mrb[0].mxu0
      %783 = vdwg.mxu0
      %784 = vmatprep.subr.mxu0 0.0
      %v785 = vand.u32 %v225, 4294901760
      %v786 = vsub.f32 %v225, %v785
      %787 = vmatpush1.msra.mxu0 %v786
      %788 = vmatprep.subr.mxu0 0.0
      %v789 = vand.u32 %v226, 4294901760
      %v790 = vsub.f32 %v226, %v789
      %791 = vmatpush1.msra.mxu0 %v790
      %792 = vmatprep.subr.mxu0 0.0
      %v793 = vand.u32 %v227, 4294901760
      %v794 = vsub.f32 %v227, %v793
      %795 = vmatpush1.msra.mxu0 %v794
      %796 = vmatprep.subr.mxu0 0.0
      %v797 = vand.u32 %v228, 4294901760
      %v798 = vsub.f32 %v228, %v797
      %799 = vmatpush1.msra.mxu0 %v798
      %800 = vmatprep.subr.mxu0 0.0
      %v801 = vand.u32 %v229, 4294901760
      %v802 = vsub.f32 %v229, %v801
      %803 = vmatpush1.msra.mxu0 %v802
      %804 = vmatprep.subr.mxu0 0.0
      %v805 = vand.u32 %v230, 4294901760
      %v806 = vsub.f32 %v230, %v805
      %807 = vmatpush1.msra.mxu0 %v806
      %808 = vmatprep.subr.mxu0 0.0
      %v809 = vand.u32 %v231, 4294901760
      %v810 = vsub.f32 %v231, %v809
      %811 = vmatpush1.msra.mxu0 %v810
      %812 = vmatprep.subr.mxu0 0.0
      %v813 = vand.u32 %v232, 4294901760
      %v814 = vsub.f32 %v232, %v813
      %815 = vmatpush1.msra.mxu0 %v814
      %816 = vmatprep.subr.mxu0 0.0
      %v817 = vand.u32 %v233, 4294901760
      %v818 = vsub.f32 %v233, %v817
      %819 = vmatpush1.msra.mxu0 %v818
      %820 = vmatprep.subr.mxu0 0.0
      %v821 = vand.u32 %v234, 4294901760
      %v822 = vsub.f32 %v234, %v821
      %823 = vmatpush1.msra.mxu0 %v822
      %824 = vmatprep.subr.mxu0 0.0
      %v825 = vand.u32 %v235, 4294901760
      %v826 = vsub.f32 %v235, %v825
      %827 = vmatpush1.msra.mxu0 %v826
      %828 = vmatprep.subr.mxu0 0.0
      %v829 = vand.u32 %v236, 4294901760
      %v830 = vsub.f32 %v236, %v829
      %831 = vmatpush1.msra.mxu0 %v830
      %832 = vmatprep.subr.mxu0 0.0
      %v833 = vand.u32 %v237, 4294901760
      %v834 = vsub.f32 %v237, %v833
      %835 = vmatpush1.msra.mxu0 %v834
      %836 = vmatprep.subr.mxu0 0.0
      %v837 = vand.u32 %v238, 4294901760
      %v838 = vsub.f32 %v238, %v837
      %839 = vmatpush1.msra.mxu0 %v838
      %840 = vmatprep.subr.mxu0 0.0
      %v841 = vand.u32 %v239, 4294901760
      %v842 = vsub.f32 %v239, %v841
      %843 = vmatpush1.msra.mxu0 %v842
      %844 = vmatprep.subr.mxu0 0.0
      %v845 = vand.u32 %v240, 4294901760
      %v846 = vsub.f32 %v240, %v845
      %847 = vmatpush1.msra.mxu0 %v846
      %848 = vmatprep.subr.mxu0 0.0
      %v849 = vand.u32 %v241, 4294901760
      %v850 = vsub.f32 %v241, %v849
      %851 = vmatpush1.msra.mxu0 %v850
      %852 = vmatprep.subr.mxu0 0.0
      %v853 = vand.u32 %v242, 4294901760
      %v854 = vsub.f32 %v242, %v853
      %855 = vmatpush1.msra.mxu0 %v854
      %856 = vmatprep.subr.mxu0 0.0
      %v857 = vand.u32 %v243, 4294901760
      %v858 = vsub.f32 %v243, %v857
      %859 = vmatpush1.msra.mxu0 %v858
      %860 = vmatprep.subr.mxu0 0.0
      %v861 = vand.u32 %v244, 4294901760
      %v862 = vsub.f32 %v244, %v861
      %863 = vmatpush1.msra.mxu0 %v862
      %864 = vmatprep.subr.mxu0 0.0
      %v865 = vand.u32 %v245, 4294901760
      %v866 = vsub.f32 %v245, %v865
      %867 = vmatpush1.msra.mxu0 %v866
      %868 = vmatprep.subr.mxu0 0.0
      %v869 = vand.u32 %v246, 4294901760
      %v870 = vsub.f32 %v246, %v869
      %871 = vmatpush1.msra.mxu0 %v870
      %872 = vmatprep.subr.mxu0 0.0
      %v873 = vand.u32 %v247, 4294901760
      %v874 = vsub.f32 %v247, %v873
      %875 = vmatpush1.msra.mxu0 %v874
      %876 = vmatprep.subr.mxu0 0.0
      %v877 = vand.u32 %v248, 4294901760
      %v878 = vsub.f32 %v248, %v877
      %879 = vmatpush1.msra.mxu0 %v878
      %880 = vmatprep.subr.mxu0 0.0
      %v881 = vand.u32 %v249, 4294901760
      %v882 = vsub.f32 %v249, %v881
      %883 = vmatpush1.msra.mxu0 %v882
      %884 = vmatprep.subr.mxu0 0.0
      %v885 = vand.u32 %v250, 4294901760
      %v886 = vsub.f32 %v250, %v885
      %887 = vmatpush1.msra.mxu0 %v886
      %888 = vmatprep.subr.mxu0 0.0
      %v889 = vand.u32 %v251, 4294901760
      %v890 = vsub.f32 %v251, %v889
      %891 = vmatpush1.msra.mxu0 %v890
      %892 = vmatprep.subr.mxu0 0.0
      %v893 = vand.u32 %v252, 4294901760
      %v894 = vsub.f32 %v252, %v893
      %895 = vmatpush1.msra.mxu0 %v894
      %896 = vmatprep.subr.mxu0 0.0
      %v897 = vand.u32 %v253, 4294901760
      %v898 = vsub.f32 %v253, %v897
      %899 = vmatpush1.msra.mxu0 %v898
      %900 = vmatprep.subr.mxu0 0.0
      %v901 = vand.u32 %v254, 4294901760
      %v902 = vsub.f32 %v254, %v901
      %903 = vmatpush1.msra.mxu0 %v902
      %904 = vmatprep.subr.mxu0 0.0
      %v905 = vand.u32 %v255, 4294901760
      %v906 = vsub.f32 %v255, %v905
      %907 = vmatpush1.msra.mxu0 %v906
      %908 = vmatprep.subr.mxu0 0.0
      %v909 = vand.u32 %v256, 4294901760
      %v910 = vsub.f32 %v256, %v909
      %911 = vmatpush1.msra.mxu0 %v910
      %v912 = vand.u32 %v271, 4294901760
      %v913 = vsub.f32 %v271, %v912
      %914 = vmatprep.mubr.f32.mxu0 %v913
      %v915 = vand.u32 %v270, 4294901760
      %v916 = vsub.f32 %v270, %v915
      %917 = vmatmul.mubr.f32.gmra.mrb[0].mxu0 %v916
      %v918 = vpop.f32.mrb[0].mxu0
      %v919 = vadd.f32 %v732, %v918
      %v920 = vpop.f32.mrb[0].mxu0
      %v921 = vand.u32 %v273, 4294901760
      %v922 = vsub.f32 %v273, %v921
      %923 = vmatprep.mubr.f32.mxu0 %v922
      %v924 = vand.u32 %v272, 4294901760
      %v925 = vsub.f32 %v272, %v924
      %926 = vmatmul.mubr.f32.gmra.mrb[0].mxu0 %v925
      %v927 = vpop.f32.mrb[0].mxu0
      %v928 = vadd.f32 %v739, %v927
      %v929 = vpop.f32.mrb[0].mxu0
      %v930 = vand.u32 %v275, 4294901760
      %v931 = vsub.f32 %v275, %v930
      %932 = vmatprep.mubr.f32.mxu0 %v931
      %v933 = vand.u32 %v274, 4294901760
      %v934 = vsub.f32 %v274, %v933
      %935 = vmatmul.mubr.f32.gmra.mrb[0].mxu0 %v934
      %v936 = vpop.f32.mrb[0].mxu0
      %v937 = vadd.f32 %v746, %v936
      %v938 = vpop.f32.mrb[0].mxu0
      %v939 = vand.u32 %v277, 4294901760
      %v940 = vsub.f32 %v277, %v939
      %941 = vmatprep.mubr.f32.mxu0 %v940
      %v942 = vand.u32 %v276, 4294901760
      %v943 = vsub.f32 %v276, %v942
      %944 = vmatmul.mubr.f32.gmra.mrb[0].mxu0 %v943
      %v945 = vpop.f32.mrb[0].mxu0
      %v946 = vadd.f32 %v753, %v945
      %v947 = vpop.f32.mrb[0].mxu0
      %v948 = vand.u32 %v279, 4294901760
      %v949 = vsub.f32 %v279, %v948
      %950 = vmatprep.mubr.f32.mxu0 %v949
      %v951 = vand.u32 %v278, 4294901760
      %v952 = vsub.f32 %v278, %v951
      %953 = vmatmul.mubr.f32.gmra.mrb[0].mxu0 %v952
      %v954 = vpop.f32.mrb[0].mxu0
      %v955 = vadd.f32 %v760, %v954
      %v956 = vpop.f32.mrb[0].mxu0
      %v957 = vand.u32 %v281, 4294901760
      %v958 = vsub.f32 %v281, %v957
      %959 = vmatprep.mubr.f32.mxu0 %v958
      %v960 = vand.u32 %v280, 4294901760
      %v961 = vsub.f32 %v280, %v960
      %962 = vmatmul.mubr.f32.gmra.mrb[0].mxu0 %v961
      %v963 = vpop.f32.mrb[0].mxu0
      %v964 = vadd.f32 %v767, %v963
      %v965 = vpop.f32.mrb[0].mxu0
      %v966 = vand.u32 %v283, 4294901760
      %v967 = vsub.f32 %v283, %v966
      %968 = vmatprep.mubr.f32.mxu0 %v967
      %v969 = vand.u32 %v282, 4294901760
      %v970 = vsub.f32 %v282, %v969
      %971 = vmatmul.mubr.f32.gmra.mrb[0].mxu0 %v970
      %v972 = vpop.f32.mrb[0].mxu0
      %v973 = vadd.f32 %v774, %v972
      %v974 = vpop.f32.mrb[0].mxu0
      %v975 = vand.u32 %v285, 4294901760
      %v976 = vsub.f32 %v285, %v975
      %977 = vmatprep.mubr.f32.mxu0 %v976
      %v978 = vand.u32 %v284, 4294901760
      %v979 = vsub.f32 %v284, %v978
      %980 = vmatmul.mubr.f32.gmra.mrb[0].mxu0 %v979
      %v981 = vpop.f32.mrb[0].mxu0
      %v982 = vadd.f32 %v781, %v981
      %v983 = vpop.f32.mrb[0].mxu0
      %984 = vdwg.mxu0
      %985 = vmatprep.subr.mxu0 0.0
      %v986 = vand.u32 %v225, 4294901760
      %987 = vmatpush1.msra.mxu0 %v986
      %988 = vmatprep.subr.mxu0 0.0
      %v989 = vand.u32 %v226, 4294901760
      %990 = vmatpush1.msra.mxu0 %v989
      %991 = vmatprep.subr.mxu0 0.0
      %v992 = vand.u32 %v227, 4294901760
      %993 = vmatpush1.msra.mxu0 %v992
      %994 = vmatprep.subr.mxu0 0.0
      %v995 = vand.u32 %v228, 4294901760
      %996 = vmatpush1.msra.mxu0 %v995
      %997 = vmatprep.subr.mxu0 0.0
      %v998 = vand.u32 %v229, 4294901760
      %999 = vmatpush1.msra.mxu0 %v998
      %1000 = vmatprep.subr.mxu0 0.0
      %v1001 = vand.u32 %v230, 4294901760
      %1002 = vmatpush1.msra.mxu0 %v1001
      %1003 = vmatprep.subr.mxu0 0.0
      %v1004 = vand.u32 %v231, 4294901760
      %1005 = vmatpush1.msra.mxu0 %v1004
      %1006 = vmatprep.subr.mxu0 0.0
      %v1007 = vand.u32 %v232, 4294901760
      %1008 = vmatpush1.msra.mxu0 %v1007
      %1009 = vmatprep.subr.mxu0 0.0
      %v1010 = vand.u32 %v233, 4294901760
      %1011 = vmatpush1.msra.mxu0 %v1010
      %1012 = vmatprep.subr.mxu0 0.0
      %v1013 = vand.u32 %v234, 4294901760
      %1014 = vmatpush1.msra.mxu0 %v1013
      %1015 = vmatprep.subr.mxu0 0.0
      %v1016 = vand.u32 %v235, 4294901760
      %1017 = vmatpush1.msra.mxu0 %v1016
      %1018 = vmatprep.subr.mxu0 0.0
      %v1019 = vand.u32 %v236, 4294901760
      %1020 = vmatpush1.msra.mxu0 %v1019
      %1021 = vmatprep.subr.mxu0 0.0
      %v1022 = vand.u32 %v237, 4294901760
      %1023 = vmatpush1.msra.mxu0 %v1022
      %1024 = vmatprep.subr.mxu0 0.0
      %v1025 = vand.u32 %v238, 4294901760
      %1026 = vmatpush1.msra.mxu0 %v1025
      %1027 = vmatprep.subr.mxu0 0.0
      %v1028 = vand.u32 %v239, 4294901760
      %1029 = vmatpush1.msra.mxu0 %v1028
      %1030 = vmatprep.subr.mxu0 0.0
      %v1031 = vand.u32 %v240, 4294901760
      %1032 = vmatpush1.msra.mxu0 %v1031
      %1033 = vmatprep.subr.mxu0 0.0
      %v1034 = vand.u32 %v241, 4294901760
      %1035 = vmatpush1.msra.mxu0 %v1034
      %1036 = vmatprep.subr.mxu0 0.0
      %v1037 = vand.u32 %v242, 4294901760
      %1038 = vmatpush1.msra.mxu0 %v1037
      %1039 = vmatprep.subr.mxu0 0.0
      %v1040 = vand.u32 %v243, 4294901760
      %1041 = vmatpush1.msra.mxu0 %v1040
      %1042 = vmatprep.subr.mxu0 0.0
      %v1043 = vand.u32 %v244, 4294901760
      %1044 = vmatpush1.msra.mxu0 %v1043
      %1045 = vmatprep.subr.mxu0 0.0
      %v1046 = vand.u32 %v245, 4294901760
      %1047 = vmatpush1.msra.mxu0 %v1046
      %1048 = vmatprep.subr.mxu0 0.0
      %v1049 = vand.u32 %v246, 4294901760
      %1050 = vmatpush1.msra.mxu0 %v1049
      %1051 = vmatprep.subr.mxu0 0.0
      %v1052 = vand.u32 %v247, 4294901760
      %1053 = vmatpush1.msra.mxu0 %v1052
      %1054 = vmatprep.subr.mxu0 0.0
      %v1055 = vand.u32 %v248, 4294901760
      %1056 = vmatpush1.msra.mxu0 %v1055
      %1057 = vmatprep.subr.mxu0 0.0
      %v1058 = vand.u32 %v249, 4294901760
      %1059 = vmatpush1.msra.mxu0 %v1058
      %1060 = vmatprep.subr.mxu0 0.0
      %v1061 = vand.u32 %v250, 4294901760
      %1062 = vmatpush1.msra.mxu0 %v1061
      %1063 = vmatprep.subr.mxu0 0.0
      %v1064 = vand.u32 %v251, 4294901760
      %1065 = vmatpush1.msra.mxu0 %v1064
      %1066 = vmatprep.subr.mxu0 0.0
      %v1067 = vand.u32 %v252, 4294901760
      %1068 = vmatpush1.msra.mxu0 %v1067
      %1069 = vmatprep.subr.mxu0 0.0
      %v1070 = vand.u32 %v253, 4294901760
      %1071 = vmatpush1.msra.mxu0 %v1070
      %1072 = vmatprep.subr.mxu0 0.0
      %v1073 = vand.u32 %v254, 4294901760
      %1074 = vmatpush1.msra.mxu0 %v1073
      %1075 = vmatprep.subr.mxu0 0.0
      %v1076 = vand.u32 %v255, 4294901760
      %1077 = vmatpush1.msra.mxu0 %v1076
      %1078 = vmatprep.subr.mxu0 0.0
      %v1079 = vand.u32 %v256, 4294901760
      %1080 = vmatpush1.msra.mxu0 %v1079
      %v1081 = vand.u32 %v271, 4294901760
      %v1082 = vsub.f32 %v271, %v1081
      %v1083 = vand.u32 %v1082, 4294901760
      %1084 = vmatprep.mubr.f32.mxu0 %v1083
      %v1085 = vand.u32 %v270, 4294901760
      %v1086 = vsub.f32 %v270, %v1085
      %v1087 = vand.u32 %v1086, 4294901760
      %1088 = vmatmul.mubr.f32.gmra.mrb[0].mxu0 %v1087
      %v1089 = vpop.f32.mrb[0].mxu0
      %v1090 = vadd.f32 %v919, %v1089
      %v1091 = vpop.f32.mrb[0].mxu0
      %v1092 = vand.u32 %v273, 4294901760
      %v1093 = vsub.f32 %v273, %v1092
      %v1094 = vand.u32 %v1093, 4294901760
      %1095 = vmatprep.mubr.f32.mxu0 %v1094
      %v1096 = vand.u32 %v272, 4294901760
      %v1097 = vsub.f32 %v272, %v1096
      %v1098 = vand.u32 %v1097, 4294901760
      %1099 = vmatmul.mubr.f32.gmra.mrb[0].mxu0 %v1098
      %v1100 = vpop.f32.mrb[0].mxu0
      %v1101 = vadd.f32 %v928, %v1100
      %v1102 = vpop.f32.mrb[0].mxu0
      %v1103 = vand.u32 %v275, 4294901760
      %v1104 = vsub.f32 %v275, %v1103
      %v1105 = vand.u32 %v1104, 4294901760
      %1106 = vmatprep.mubr.f32.mxu0 %v1105
      %v1107 = vand.u32 %v274, 4294901760
      %v1108 = vsub.f32 %v274, %v1107
      %v1109 = vand.u32 %v1108, 4294901760
      %1110 = vmatmul.mubr.f32.gmra.mrb[0].mxu0 %v1109
      %v1111 = vpop.f32.mrb[0].mxu0
      %v1112 = vadd.f32 %v937, %v1111
      %v1113 = vpop.f32.mrb[0].mxu0
      %v1114 = vand.u32 %v277, 4294901760
      %v1115 = vsub.f32 %v277, %v1114
      %v1116 = vand.u32 %v1115, 4294901760
      %1117 = vmatprep.mubr.f32.mxu0 %v1116
      %v1118 = vand.u32 %v276, 4294901760
      %v1119 = vsub.f32 %v276, %v1118
      %v1120 = vand.u32 %v1119, 4294901760
      %1121 = vmatmul.mubr.f32.gmra.mrb[0].mxu0 %v1120
      %v1122 = vpop.f32.mrb[0].mxu0
      %v1123 = vadd.f32 %v946, %v1122
      %v1124 = vpop.f32.mrb[0].mxu0
      %v1125 = vand.u32 %v279, 4294901760
      %v1126 = vsub.f32 %v279, %v1125
      %v1127 = vand.u32 %v1126, 4294901760
      %1128 = vmatprep.mubr.f32.mxu0 %v1127
      %v1129 = vand.u32 %v278, 4294901760
      %v1130 = vsub.f32 %v278, %v1129
      %v1131 = vand.u32 %v1130, 4294901760
      %1132 = vmatmul.mubr.f32.gmra.mrb[0].mxu0 %v1131
      %v1133 = vpop.f32.mrb[0].mxu0
      %v1134 = vadd.f32 %v955, %v1133
      %v1135 = vpop.f32.mrb[0].mxu0
      %v1136 = vand.u32 %v281, 4294901760
      %v1137 = vsub.f32 %v281, %v1136
      %v1138 = vand.u32 %v1137, 4294901760
      %1139 = vmatprep.mubr.f32.mxu0 %v1138
      %v1140 = vand.u32 %v280, 4294901760
      %v1141 = vsub.f32 %v280, %v1140
      %v1142 = vand.u32 %v1141, 4294901760
      %1143 = vmatmul.mubr.f32.gmra.mrb[0].mxu0 %v1142
      %v1144 = vpop.f32.mrb[0].mxu0
      %v1145 = vadd.f32 %v964, %v1144
      %v1146 = vpop.f32.mrb[0].mxu0
      %v1147 = vand.u32 %v283, 4294901760
      %v1148 = vsub.f32 %v283, %v1147
      %v1149 = vand.u32 %v1148, 4294901760
      %1150 = vmatprep.mubr.f32.mxu0 %v1149
      %v1151 = vand.u32 %v282, 4294901760
      %v1152 = vsub.f32 %v282, %v1151
      %v1153 = vand.u32 %v1152, 4294901760
      %1154 = vmatmul.mubr.f32.gmra.mrb[0].mxu0 %v1153
      %v1155 = vpop.f32.mrb[0].mxu0
      %v1156 = vadd.f32 %v973, %v1155
      %v1157 = vpop.f32.mrb[0].mxu0
      %v1158 = vand.u32 %v285, 4294901760
      %v1159 = vsub.f32 %v285, %v1158
      %v1160 = vand.u32 %v1159, 4294901760
      %1161 = vmatprep.mubr.f32.mxu0 %v1160
      %v1162 = vand.u32 %v284, 4294901760
      %v1163 = vsub.f32 %v284, %v1162
      %v1164 = vand.u32 %v1163, 4294901760
      %1165 = vmatmul.mubr.f32.gmra.mrb[0].mxu0 %v1164
      %v1166 = vpop.f32.mrb[0].mxu0
      %v1167 = vadd.f32 %v982, %v1166
      %v1168 = vpop.f32.mrb[0].mxu0
      %1169 = vdwg.mxu0
      %1170 = vmatprep.subr.mxu0 0.0
      %v1171 = vand.u32 %v225, 4294901760
      %v1172 = vsub.f32 %v225, %v1171
      %v1173 = vand.u32 %v1172, 4294901760
      %1174 = vmatpush1.msra.mxu0 %v1173
      %1175 = vmatprep.subr.mxu0 0.0
      %v1176 = vand.u32 %v226, 4294901760
      %v1177 = vsub.f32 %v226, %v1176
      %v1178 = vand.u32 %v1177, 4294901760
      %1179 = vmatpush1.msra.mxu0 %v1178
      %1180 = vmatprep.subr.mxu0 0.0
      %v1181 = vand.u32 %v227, 4294901760
      %v1182 = vsub.f32 %v227, %v1181
      %v1183 = vand.u32 %v1182, 4294901760
      %1184 = vmatpush1.msra.mxu0 %v1183
      %1185 = vmatprep.subr.mxu0 0.0
      %v1186 = vand.u32 %v228, 4294901760
      %v1187 = vsub.f32 %v228, %v1186
      %v1188 = vand.u32 %v1187, 4294901760
      %1189 = vmatpush1.msra.mxu0 %v1188
      %1190 = vmatprep.subr.mxu0 0.0
      %v1191 = vand.u32 %v229, 4294901760
      %v1192 = vsub.f32 %v229, %v1191
      %v1193 = vand.u32 %v1192, 4294901760
      %1194 = vmatpush1.msra.mxu0 %v1193
      %1195 = vmatprep.subr.mxu0 0.0
      %v1196 = vand.u32 %v230, 4294901760
      %v1197 = vsub.f32 %v230, %v1196
      %v1198 = vand.u32 %v1197, 4294901760
      %1199 = vmatpush1.msra.mxu0 %v1198
      %1200 = vmatprep.subr.mxu0 0.0
      %v1201 = vand.u32 %v231, 4294901760
      %v1202 = vsub.f32 %v231, %v1201
      %v1203 = vand.u32 %v1202, 4294901760
      %1204 = vmatpush1.msra.mxu0 %v1203
      %1205 = vmatprep.subr.mxu0 0.0
      %v1206 = vand.u32 %v232, 4294901760
      %v1207 = vsub.f32 %v232, %v1206
      %v1208 = vand.u32 %v1207, 4294901760
      %1209 = vmatpush1.msra.mxu0 %v1208
      %1210 = vmatprep.subr.mxu0 0.0
      %v1211 = vand.u32 %v233, 4294901760
      %v1212 = vsub.f32 %v233, %v1211
      %v1213 = vand.u32 %v1212, 4294901760
      %1214 = vmatpush1.msra.mxu0 %v1213
      %1215 = vmatprep.subr.mxu0 0.0
      %v1216 = vand.u32 %v234, 4294901760
      %v1217 = vsub.f32 %v234, %v1216
      %v1218 = vand.u32 %v1217, 4294901760
      %1219 = vmatpush1.msra.mxu0 %v1218
      %1220 = vmatprep.subr.mxu0 0.0
      %v1221 = vand.u32 %v235, 4294901760
      %v1222 = vsub.f32 %v235, %v1221
      %v1223 = vand.u32 %v1222, 4294901760
      %1224 = vmatpush1.msra.mxu0 %v1223
      %1225 = vmatprep.subr.mxu0 0.0
      %v1226 = vand.u32 %v236, 4294901760
      %v1227 = vsub.f32 %v236, %v1226
      %v1228 = vand.u32 %v1227, 4294901760
      %1229 = vmatpush1.msra.mxu0 %v1228
      %1230 = vmatprep.subr.mxu0 0.0
      %v1231 = vand.u32 %v237, 4294901760
      %v1232 = vsub.f32 %v237, %v1231
      %v1233 = vand.u32 %v1232, 4294901760
      %1234 = vmatpush1.msra.mxu0 %v1233
      %1235 = vmatprep.subr.mxu0 0.0
      %v1236 = vand.u32 %v238, 4294901760
      %v1237 = vsub.f32 %v238, %v1236
      %v1238 = vand.u32 %v1237, 4294901760
      %1239 = vmatpush1.msra.mxu0 %v1238
      %1240 = vmatprep.subr.mxu0 0.0
      %v1241 = vand.u32 %v239, 4294901760
      %v1242 = vsub.f32 %v239, %v1241
      %v1243 = vand.u32 %v1242, 4294901760
      %1244 = vmatpush1.msra.mxu0 %v1243
      %1245 = vmatprep.subr.mxu0 0.0
      %v1246 = vand.u32 %v240, 4294901760
      %v1247 = vsub.f32 %v240, %v1246
      %v1248 = vand.u32 %v1247, 4294901760
      %1249 = vmatpush1.msra.mxu0 %v1248
      %1250 = vmatprep.subr.mxu0 0.0
      %v1251 = vand.u32 %v241, 4294901760
      %v1252 = vsub.f32 %v241, %v1251
      %v1253 = vand.u32 %v1252, 4294901760
      %1254 = vmatpush1.msra.mxu0 %v1253
      %1255 = vmatprep.subr.mxu0 0.0
      %v1256 = vand.u32 %v242, 4294901760
      %v1257 = vsub.f32 %v242, %v1256
      %v1258 = vand.u32 %v1257, 4294901760
      %1259 = vmatpush1.msra.mxu0 %v1258
      %1260 = vmatprep.subr.mxu0 0.0
      %v1261 = vand.u32 %v243, 4294901760
      %v1262 = vsub.f32 %v243, %v1261
      %v1263 = vand.u32 %v1262, 4294901760
      %1264 = vmatpush1.msra.mxu0 %v1263
      %1265 = vmatprep.subr.mxu0 0.0
      %v1266 = vand.u32 %v244, 4294901760
      %v1267 = vsub.f32 %v244, %v1266
      %v1268 = vand.u32 %v1267, 4294901760
      %1269 = vmatpush1.msra.mxu0 %v1268
      %1270 = vmatprep.subr.mxu0 0.0
      %v1271 = vand.u32 %v245, 4294901760
      %v1272 = vsub.f32 %v245, %v1271
      %v1273 = vand.u32 %v1272, 4294901760
      %1274 = vmatpush1.msra.mxu0 %v1273
      %1275 = vmatprep.subr.mxu0 0.0
      %v1276 = vand.u32 %v246, 4294901760
      %v1277 = vsub.f32 %v246, %v1276
      %v1278 = vand.u32 %v1277, 4294901760
      %1279 = vmatpush1.msra.mxu0 %v1278
      %1280 = vmatprep.subr.mxu0 0.0
      %v1281 = vand.u32 %v247, 4294901760
      %v1282 = vsub.f32 %v247, %v1281
      %v1283 = vand.u32 %v1282, 4294901760
      %1284 = vmatpush1.msra.mxu0 %v1283
      %1285 = vmatprep.subr.mxu0 0.0
      %v1286 = vand.u32 %v248, 4294901760
      %v1287 = vsub.f32 %v248, %v1286
      %v1288 = vand.u32 %v1287, 4294901760
      %1289 = vmatpush1.msra.mxu0 %v1288
      %1290 = vmatprep.subr.mxu0 0.0
      %v1291 = vand.u32 %v249, 4294901760
      %v1292 = vsub.f32 %v249, %v1291
      %v1293 = vand.u32 %v1292, 4294901760
      %1294 = vmatpush1.msra.mxu0 %v1293
      %1295 = vmatprep.subr.mxu0 0.0
      %v1296 = vand.u32 %v250, 4294901760
      %v1297 = vsub.f32 %v250, %v1296
      %v1298 = vand.u32 %v1297, 4294901760
      %1299 = vmatpush1.msra.mxu0 %v1298
      %1300 = vmatprep.subr.mxu0 0.0
      %v1301 = vand.u32 %v251, 4294901760
      %v1302 = vsub.f32 %v251, %v1301
      %v1303 = vand.u32 %v1302, 4294901760
      %1304 = vmatpush1.msra.mxu0 %v1303
      %1305 = vmatprep.subr.mxu0 0.0
      %v1306 = vand.u32 %v252, 4294901760
      %v1307 = vsub.f32 %v252, %v1306
      %v1308 = vand.u32 %v1307, 4294901760
      %1309 = vmatpush1.msra.mxu0 %v1308
      %1310 = vmatprep.subr.mxu0 0.0
      %v1311 = vand.u32 %v253, 4294901760
      %v1312 = vsub.f32 %v253, %v1311
      %v1313 = vand.u32 %v1312, 4294901760
      %1314 = vmatpush1.msra.mxu0 %v1313
      %1315 = vmatprep.subr.mxu0 0.0
      %v1316 = vand.u32 %v254, 4294901760
      %v1317 = vsub.f32 %v254, %v1316
      %v1318 = vand.u32 %v1317, 4294901760
      %1319 = vmatpush1.msra.mxu0 %v1318
      %1320 = vmatprep.subr.mxu0 0.0
      %v1321 = vand.u32 %v255, 4294901760
      %v1322 = vsub.f32 %v255, %v1321
      %v1323 = vand.u32 %v1322, 4294901760
      %1324 = vmatpush1.msra.mxu0 %v1323
      %1325 = vmatprep.subr.mxu0 0.0
      %v1326 = vand.u32 %v256, 4294901760
      %v1327 = vsub.f32 %v256, %v1326
      %v1328 = vand.u32 %v1327, 4294901760
      %1329 = vmatpush1.msra.mxu0 %v1328
      %v1330 = vand.u32 %v271, 4294901760
      %1331 = vmatprep.mubr.f32.mxu0 %v1330
      %v1332 = vand.u32 %v270, 4294901760
      %1333 = vmatmul.mubr.f32.gmra.mrb[0].mxu0 %v1332
      %v1334 = vpop.f32.mrb[0].mxu0
      %v1335 = vadd.f32 %v1090, %v1334
      %v1336 = vpop.f32.mrb[0].mxu0
      %v1337 = vand.u32 %v273, 4294901760
      %1338 = vmatprep.mubr.f32.mxu0 %v1337
      %v1339 = vand.u32 %v272, 4294901760
      %1340 = vmatmul.mubr.f32.gmra.mrb[0].mxu0 %v1339
      %v1341 = vpop.f32.mrb[0].mxu0
      %v1342 = vadd.f32 %v1101, %v1341
      %v1343 = vpop.f32.mrb[0].mxu0
      %v1344 = vand.u32 %v275, 4294901760
      %1345 = vmatprep.mubr.f32.mxu0 %v1344
      %v1346 = vand.u32 %v274, 4294901760
      %1347 = vmatmul.mubr.f32.gmra.mrb[0].mxu0 %v1346
      %v1348 = vpop.f32.mrb[0].mxu0
      %v1349 = vadd.f32 %v1112, %v1348
      %v1350 = vpop.f32.mrb[0].mxu0
      %v1351 = vand.u32 %v277, 4294901760
      %1352 = vmatprep.mubr.f32.mxu0 %v1351
      %v1353 = vand.u32 %v276, 4294901760
      %1354 = vmatmul.mubr.f32.gmra.mrb[0].mxu0 %v1353
      %v1355 = vpop.f32.mrb[0].mxu0
      %v1356 = vadd.f32 %v1123, %v1355
      %v1357 = vpop.f32.mrb[0].mxu0
      %v1358 = vand.u32 %v279, 4294901760
      %1359 = vmatprep.mubr.f32.mxu0 %v1358
      %v1360 = vand.u32 %v278, 4294901760
      %1361 = vmatmul.mubr.f32.gmra.mrb[0].mxu0 %v1360
      %v1362 = vpop.f32.mrb[0].mxu0
      %v1363 = vadd.f32 %v1134, %v1362
      %v1364 = vpop.f32.mrb[0].mxu0
      %v1365 = vand.u32 %v281, 4294901760
      %1366 = vmatprep.mubr.f32.mxu0 %v1365
      %v1367 = vand.u32 %v280, 4294901760
      %1368 = vmatmul.mubr.f32.gmra.mrb[0].mxu0 %v1367
      %v1369 = vpop.f32.mrb[0].mxu0
      %v1370 = vadd.f32 %v1145, %v1369
      %v1371 = vpop.f32.mrb[0].mxu0
      %v1372 = vand.u32 %v283, 4294901760
      %1373 = vmatprep.mubr.f32.mxu0 %v1372
      %v1374 = vand.u32 %v282, 4294901760
      %1375 = vmatmul.mubr.f32.gmra.mrb[0].mxu0 %v1374
      %v1376 = vpop.f32.mrb[0].mxu0
      %v1377 = vadd.f32 %v1156, %v1376
      %v1378 = vpop.f32.mrb[0].mxu0
      %v1379 = vand.u32 %v285, 4294901760
      %1380 = vmatprep.mubr.f32.mxu0 %v1379
      %v1381 = vand.u32 %v284, 4294901760
      %1382 = vmatmul.mubr.f32.gmra.mrb[0].mxu0 %v1381
      %v1383 = vpop.f32.mrb[0].mxu0
      %v1384 = vadd.f32 %v1167, %v1383
      %v1385 = vpop.f32.mrb[0].mxu0
      %1386 = vdwg.mxu0
      %1387 = vmatprep.subr.mxu0 0.0
      %v1388 = vand.u32 %v225, 4294901760
      %1389 = vmatpush1.msra.mxu0 %v1388
      %1390 = vmatprep.subr.mxu0 0.0
      %v1391 = vand.u32 %v226, 4294901760
      %1392 = vmatpush1.msra.mxu0 %v1391
      %1393 = vmatprep.subr.mxu0 0.0
      %v1394 = vand.u32 %v227, 4294901760
      %1395 = vmatpush1.msra.mxu0 %v1394
      %1396 = vmatprep.subr.mxu0 0.0
      %v1397 = vand.u32 %v228, 4294901760
      %1398 = vmatpush1.msra.mxu0 %v1397
      %1399 = vmatprep.subr.mxu0 0.0
      %v1400 = vand.u32 %v229, 4294901760
      %1401 = vmatpush1.msra.mxu0 %v1400
      %1402 = vmatprep.subr.mxu0 0.0
      %v1403 = vand.u32 %v230, 4294901760
      %1404 = vmatpush1.msra.mxu0 %v1403
      %1405 = vmatprep.subr.mxu0 0.0
      %v1406 = vand.u32 %v231, 4294901760
      %1407 = vmatpush1.msra.mxu0 %v1406
      %1408 = vmatprep.subr.mxu0 0.0
      %v1409 = vand.u32 %v232, 4294901760
      %1410 = vmatpush1.msra.mxu0 %v1409
      %1411 = vmatprep.subr.mxu0 0.0
      %v1412 = vand.u32 %v233, 4294901760
      %1413 = vmatpush1.msra.mxu0 %v1412
      %1414 = vmatprep.subr.mxu0 0.0
      %v1415 = vand.u32 %v234, 4294901760
      %1416 = vmatpush1.msra.mxu0 %v1415
      %1417 = vmatprep.subr.mxu0 0.0
      %v1418 = vand.u32 %v235, 4294901760
      %1419 = vmatpush1.msra.mxu0 %v1418
      %1420 = vmatprep.subr.mxu0 0.0
      %v1421 = vand.u32 %v236, 4294901760
      %1422 = vmatpush1.msra.mxu0 %v1421
      %1423 = vmatprep.subr.mxu0 0.0
      %v1424 = vand.u32 %v237, 4294901760
      %1425 = vmatpush1.msra.mxu0 %v1424
      %1426 = vmatprep.subr.mxu0 0.0
      %v1427 = vand.u32 %v238, 4294901760
      %1428 = vmatpush1.msra.mxu0 %v1427
      %1429 = vmatprep.subr.mxu0 0.0
      %v1430 = vand.u32 %v239, 4294901760
      %1431 = vmatpush1.msra.mxu0 %v1430
      %1432 = vmatprep.subr.mxu0 0.0
      %v1433 = vand.u32 %v240, 4294901760
      %1434 = vmatpush1.msra.mxu0 %v1433
      %1435 = vmatprep.subr.mxu0 0.0
      %v1436 = vand.u32 %v241, 4294901760
      %1437 = vmatpush1.msra.mxu0 %v1436
      %1438 = vmatprep.subr.mxu0 0.0
      %v1439 = vand.u32 %v242, 4294901760
      %1440 = vmatpush1.msra.mxu0 %v1439
      %1441 = vmatprep.subr.mxu0 0.0
      %v1442 = vand.u32 %v243, 4294901760
      %1443 = vmatpush1.msra.mxu0 %v1442
      %1444 = vmatprep.subr.mxu0 0.0
      %v1445 = vand.u32 %v244, 4294901760
      %1446 = vmatpush1.msra.mxu0 %v1445
      %1447 = vmatprep.subr.mxu0 0.0
      %v1448 = vand.u32 %v245, 4294901760
      %1449 = vmatpush1.msra.mxu0 %v1448
      %1450 = vmatprep.subr.mxu0 0.0
      %v1451 = vand.u32 %v246, 4294901760
      %1452 = vmatpush1.msra.mxu0 %v1451
      %1453 = vmatprep.subr.mxu0 0.0
      %v1454 = vand.u32 %v247, 4294901760
      %1455 = vmatpush1.msra.mxu0 %v1454
      %1456 = vmatprep.subr.mxu0 0.0
      %v1457 = vand.u32 %v248, 4294901760
      %1458 = vmatpush1.msra.mxu0 %v1457
      %1459 = vmatprep.subr.mxu0 0.0
      %v1460 = vand.u32 %v249, 4294901760
      %1461 = vmatpush1.msra.mxu0 %v1460
      %1462 = vmatprep.subr.mxu0 0.0
      %v1463 = vand.u32 %v250, 4294901760
      %1464 = vmatpush1.msra.mxu0 %v1463
      %1465 = vmatprep.subr.mxu0 0.0
      %v1466 = vand.u32 %v251, 4294901760
      %1467 = vmatpush1.msra.mxu0 %v1466
      %1468 = vmatprep.subr.mxu0 0.0
      %v1469 = vand.u32 %v252, 4294901760
      %1470 = vmatpush1.msra.mxu0 %v1469
      %1471 = vmatprep.subr.mxu0 0.0
      %v1472 = vand.u32 %v253, 4294901760
      %1473 = vmatpush1.msra.mxu0 %v1472
      %1474 = vmatprep.subr.mxu0 0.0
      %v1475 = vand.u32 %v254, 4294901760
      %1476 = vmatpush1.msra.mxu0 %v1475
      %1477 = vmatprep.subr.mxu0 0.0
      %v1478 = vand.u32 %v255, 4294901760
      %1479 = vmatpush1.msra.mxu0 %v1478
      %1480 = vmatprep.subr.mxu0 0.0
      %v1481 = vand.u32 %v256, 4294901760
      %1482 = vmatpush1.msra.mxu0 %v1481
      %v1483 = vand.u32 %v271, 4294901760
      %1484 = vmatprep.mubr.f32.mxu0 %v1483
      %v1485 = vand.u32 %v270, 4294901760
      %1486 = vmatmul.mubr.f32.gmra.mrb[0].mxu0 %v1485
      %v1487 = vpop.f32.mrb[0].mxu0
      %v1488 = vadd.f32 %v1335, %v1487
      %v1489 = vpop.f32.mrb[0].mxu0
      %v1490 = vand.u32 %v273, 4294901760
      %1491 = vmatprep.mubr.f32.mxu0 %v1490
      %v1492 = vand.u32 %v272, 4294901760
      %1493 = vmatmul.mubr.f32.gmra.mrb[0].mxu0 %v1492
      %v1494 = vpop.f32.mrb[0].mxu0
      %v1495 = vadd.f32 %v1342, %v1494
      %v1496 = vpop.f32.mrb[0].mxu0
      %v1497 = vand.u32 %v275, 4294901760
      %1498 = vmatprep.mubr.f32.mxu0 %v1497
      %v1499 = vand.u32 %v274, 4294901760
      %1500 = vmatmul.mubr.f32.gmra.mrb[0].mxu0 %v1499
      %v1501 = vpop.f32.mrb[0].mxu0
      %v1502 = vadd.f32 %v1349, %v1501
      %v1503 = vpop.f32.mrb[0].mxu0
      %v1504 = vand.u32 %v277, 4294901760
      %1505 = vmatprep.mubr.f32.mxu0 %v1504
      %v1506 = vand.u32 %v276, 4294901760
      %1507 = vmatmul.mubr.f32.gmra.mrb[0].mxu0 %v1506
      %v1508 = vpop.f32.mrb[0].mxu0
      %v1509 = vadd.f32 %v1356, %v1508
      %v1510 = vpop.f32.mrb[0].mxu0
      %v1511 = vand.u32 %v279, 4294901760
      %1512 = vmatprep.mubr.f32.mxu0 %v1511
      %v1513 = vand.u32 %v278, 4294901760
      %1514 = vmatmul.mubr.f32.gmra.mrb[0].mxu0 %v1513
      %v1515 = vpop.f32.mrb[0].mxu0
      %v1516 = vadd.f32 %v1363, %v1515
      %v1517 = vpop.f32.mrb[0].mxu0
      %v1518 = vand.u32 %v281, 4294901760
      %1519 = vmatprep.mubr.f32.mxu0 %v1518
      %v1520 = vand.u32 %v280, 4294901760
      %1521 = vmatmul.mubr.f32.gmra.mrb[0].mxu0 %v1520
      %v1522 = vpop.f32.mrb[0].mxu0
      %v1523 = vadd.f32 %v1370, %v1522
      %v1524 = vpop.f32.mrb[0].mxu0
      %v1525 = vand.u32 %v283, 4294901760
      %1526 = vmatprep.mubr.f32.mxu0 %v1525
      %v1527 = vand.u32 %v282, 4294901760
      %1528 = vmatmul.mubr.f32.gmra.mrb[0].mxu0 %v1527
      %v1529 = vpop.f32.mrb[0].mxu0
      %v1530 = vadd.f32 %v1377, %v1529
      %v1531 = vpop.f32.mrb[0].mxu0
      %v1532 = vand.u32 %v285, 4294901760
      %1533 = vmatprep.mubr.f32.mxu0 %v1532
      %v1534 = vand.u32 %v284, 4294901760
      %1535 = vmatmul.mubr.f32.gmra.mrb[0].mxu0 %v1534
      %v1536 = vpop.f32.mrb[0].mxu0
      %v1537 = vadd.f32 %v1384, %v1536
      %v1538 = vpop.f32.mrb[0].mxu0
      %1539 = vdwg.mxu0
      %vm1540 = vcmask 130048
      %v1541 = vsel %vm1540, %v1488, 0.0
      %v1542 = vsel %vm1540, %v1495, 0.0
      %v1543 = vadd.f32 %v1541, %v1542
      %v1544 = vrot.slane %v1543, 4
      %v1545 = vadd.f32 %v1543, %v1544
      %v1546 = vrot.slane %v1545, 2
      %v1547 = vadd.f32 %v1545, %v1546
      %v1548 = vrot.slane %v1547, 1
      %v1549 = vadd.f32 %v1547, %v1548
      %v1550 = vsel %vm1540, %v1502, 0.0
      %v1551 = vsel %vm1540, %v1509, 0.0
      %v1552 = vadd.f32 %v1550, %v1551
      %v1553 = vrot.slane %v1552, 4
      %v1554 = vadd.f32 %v1552, %v1553
      %v1555 = vrot.slane %v1554, 2
      %v1556 = vadd.f32 %v1554, %v1555
      %v1557 = vrot.slane %v1556, 1
      %v1558 = vadd.f32 %v1556, %v1557
      %v1559 = vsel %vm1540, %v1516, 0.0
      %v1560 = vsel %vm1540, %v1523, 0.0
      %v1561 = vadd.f32 %v1559, %v1560
      %v1562 = vrot.slane %v1561, 4
      %v1563 = vadd.f32 %v1561, %v1562
      %v1564 = vrot.slane %v1563, 2
      %v1565 = vadd.f32 %v1563, %v1564
      %v1566 = vrot.slane %v1565, 1
      %v1567 = vadd.f32 %v1565, %v1566
      %v1568 = vsel %vm1540, %v1530, 0.0
      %v1569 = vsel %vm1540, %v1537, 0.0
      %v1570 = vadd.f32 %v1568, %v1569
      %v1571 = vrot.slane %v1570, 4
      %v1572 = vadd.f32 %v1570, %v1571
      %v1573 = vrot.slane %v1572, 2
      %v1574 = vadd.f32 %v1572, %v1573
      %v1575 = vrot.slane %v1574, 1
      %v1576 = vadd.f32 %v1574, %v1575
      %1577 = vadd.xlane.f32.xlu0 %v1541
      %v1578 = vpop.xlane.xlu0 %1577
      %1579 = vadd.xlane.f32.xlu0 %v1542
      %v1580 = vpop.xlane.xlu0 %1579
      %1581 = vadd.xlane.f32.xlu0 %v1550
      %v1582 = vpop.xlane.xlu0 %1581
      %1583 = vadd.xlane.f32.xlu0 %v1551
      %v1584 = vpop.xlane.xlu0 %1583
      %1585 = vadd.xlane.f32.xlu0 %v1559
      %v1586 = vpop.xlane.xlu0 %1585
      %1587 = vadd.xlane.f32.xlu0 %v1560
      %v1588 = vpop.xlane.xlu0 %1587
      %1589 = vadd.xlane.f32.xlu0 %v1568
      %v1590 = vpop.xlane.xlu0 %1589
      %1591 = vadd.xlane.f32.xlu0 %v1569
      %v1592 = vpop.xlane.xlu0 %1591
      %v1601 = vlaneseq
      %v1602 = vand.u32 %v1601, 127
      %v1603 = vlaneseq
      %v1604 = vshrl.u32 %v1603, 7
      %v1605 = vsub.s32 %v1602, %v1604
      %v1606 = vrot.slane %v1578, %v1605
      %v1607 = vadd.s32 %v1602, 4294967288
      %v1608 = vlaneseq
      %v1609 = vshrl.u32 %v1608, 7
      %v1610 = vsub.s32 %v1607, %v1609
      %v1611 = vrot.slane %v1580, %v1610
      %vm1612 = vcmask 130112
      %v1613 = vsel %vm1612, %v1611, %v1606
      %v1614 = vlaneseq
      %v1615 = vshrl.u32 %v1614, 7
      %v1616 = vsub.s32 %v1602, %v1615
      %v1617 = vrot.slane %v1582, %v1616
      %v1618 = vlaneseq
      %v1619 = vshrl.u32 %v1618, 7
      %v1620 = vsub.s32 %v1607, %v1619
      %v1621 = vrot.slane %v1584, %v1620
      %v1622 = vsel %vm1612, %v1621, %v1617
      %v1623 = vlaneseq
      %v1624 = vshrl.u32 %v1623, 7
      %v1625 = vsub.s32 %v1602, %v1624
      %v1626 = vrot.slane %v1586, %v1625
      %v1627 = vlaneseq
      %v1628 = vshrl.u32 %v1627, 7
      %v1629 = vsub.s32 %v1607, %v1628
      %v1630 = vrot.slane %v1588, %v1629
      %v1631 = vsel %vm1612, %v1630, %v1626
      %v1632 = vlaneseq
      %v1633 = vshrl.u32 %v1632, 7
      %v1634 = vsub.s32 %v1602, %v1633
      %v1635 = vrot.slane %v1590, %v1634
      %v1636 = vlaneseq
      %v1637 = vshrl.u32 %v1636, 7
      %v1638 = vsub.s32 %v1607, %v1637
      %v1639 = vrot.slane %v1592, %v1638
      %v1640 = vsel %vm1612, %v1639, %v1635
      %vm1641 = vcmask 1041409
      %v1642 = vsel %vm1641, %v1622, %v1613
      %vm1643 = vcmask 1042434
      %v1644 = vsel %vm1643, %v1631, %v1642
      %vm1645 = vcmask 1043459
      %v1646 = vsel %vm1645, %v1640, %v1644
      %v1647 = vsel %vm1540, %v1646, 0
      %1649 = vmatprep.subr.mxu0 0.0
      %v1650 = vand.u32 %v257, 4294901760
      %1651 = vmatpush1.msra.mxu0 %v1650
      %1652 = vmatprep.subr.mxu0 0.0
      %v1653 = vand.u32 %v258, 4294901760
      %1654 = vmatpush1.msra.mxu0 %v1653
      %1655 = vmatprep.subr.mxu0 0.0
      %1656 = vmatpush1.msra.mxu0 0.0
      %1657 = vmatprep.subr.mxu0 0.0
      %1658 = vmatpush1.msra.mxu0 0.0
      %1659 = vmatprep.subr.mxu0 0.0
      %1660 = vmatpush1.msra.mxu0 0.0
      %1661 = vmatprep.subr.mxu0 0.0
      %1662 = vmatpush1.msra.mxu0 0.0
      %1663 = vmatprep.subr.mxu0 0.0
      %1664 = vmatpush1.msra.mxu0 0.0
      %1665 = vmatprep.subr.mxu0 0.0
      %1666 = vmatpush1.msra.mxu0 0.0
      %1667 = vmatprep.subr.mxu0 0.0
      %1668 = vmatpush1.msra.mxu0 0.0
      %1669 = vmatprep.subr.mxu0 0.0
      %1670 = vmatpush1.msra.mxu0 0.0
      %1671 = vmatprep.subr.mxu0 0.0
      %1672 = vmatpush1.msra.mxu0 0.0
      %1673 = vmatprep.subr.mxu0 0.0
      %1674 = vmatpush1.msra.mxu0 0.0
      %1675 = vmatprep.subr.mxu0 0.0
      %1676 = vmatpush1.msra.mxu0 0.0
      %1677 = vmatprep.subr.mxu0 0.0
      %1678 = vmatpush1.msra.mxu0 0.0
      %1679 = vmatprep.subr.mxu0 0.0
      %1680 = vmatpush1.msra.mxu0 0.0
      %1681 = vmatprep.subr.mxu0 0.0
      %1682 = vmatpush1.msra.mxu0 0.0
      %1683 = vmatprep.subr.mxu0 0.0
      %1684 = vmatpush1.msra.mxu0 0.0
      %1685 = vmatprep.subr.mxu0 0.0
      %1686 = vmatpush1.msra.mxu0 0.0
      %1687 = vmatprep.subr.mxu0 0.0
      %1688 = vmatpush1.msra.mxu0 0.0
      %1689 = vmatprep.subr.mxu0 0.0
      %1690 = vmatpush1.msra.mxu0 0.0
      %1691 = vmatprep.subr.mxu0 0.0
      %1692 = vmatpush1.msra.mxu0 0.0
      %1693 = vmatprep.subr.mxu0 0.0
      %1694 = vmatpush1.msra.mxu0 0.0
      %1695 = vmatprep.subr.mxu0 0.0
      %1696 = vmatpush1.msra.mxu0 0.0
      %1697 = vmatprep.subr.mxu0 0.0
      %1698 = vmatpush1.msra.mxu0 0.0
      %1699 = vmatprep.subr.mxu0 0.0
      %1700 = vmatpush1.msra.mxu0 0.0
      %1701 = vmatprep.subr.mxu0 0.0
      %1702 = vmatpush1.msra.mxu0 0.0
      %1703 = vmatprep.subr.mxu0 0.0
      %1704 = vmatpush1.msra.mxu0 0.0
      %1705 = vmatprep.subr.mxu0 0.0
      %1706 = vmatpush1.msra.mxu0 0.0
      %1707 = vmatprep.subr.mxu0 0.0
      %1708 = vmatpush1.msra.mxu0 0.0
      %1709 = vmatprep.subr.mxu0 0.0
      %1710 = vmatpush1.msra.mxu0 0.0
      %1711 = vmatprep.subr.mxu0 0.0
      %1712 = vmatpush1.msra.mxu0 0.0
      %1713 = vmatprep.subr.mxu0 0.0
      %1714 = vmatpush1.msra.mxu0 0.0
      %1715 = vmatprep.mubr.f32.mxu0 0.0
      %v1716 = vand.u32 %v1647, 4294901760
      %v1717 = vsub.f32 %v1647, %v1716
      %v1718 = vand.u32 %v1717, 4294901760
      %v1719 = vsub.f32 %v1717, %v1718
      %v1720 = vand.u32 %v1719, 4294901760
      %1721 = vmatmul.mubr.f32.gmra.mrb[0].mxu0 %v1720
      %v1722 = vpop.f32.mrb[0].mxu0
      %v1723 = vadd.f32 0.0, %v1722
      %v1724 = vpop.f32.mrb[0].mxu0
      %1725 = vdwg.mxu0
      %1726 = vmatprep.subr.mxu0 0.0
      %v1727 = vand.u32 %v257, 4294901760
      %v1728 = vsub.f32 %v257, %v1727
      %v1729 = vand.u32 %v1728, 4294901760
      %v1730 = vsub.f32 %v1728, %v1729
      %v1731 = vand.u32 %v1730, 4294901760
      %1732 = vmatpush1.msra.mxu0 %v1731
      %1733 = vmatprep.subr.mxu0 0.0
      %v1734 = vand.u32 %v258, 4294901760
      %v1735 = vsub.f32 %v258, %v1734
      %v1736 = vand.u32 %v1735, 4294901760
      %v1737 = vsub.f32 %v1735, %v1736
      %v1738 = vand.u32 %v1737, 4294901760
      %1739 = vmatpush1.msra.mxu0 %v1738
      %1740 = vmatprep.subr.mxu0 0.0
      %1741 = vmatpush1.msra.mxu0 0.0
      %1742 = vmatprep.subr.mxu0 0.0
      %1743 = vmatpush1.msra.mxu0 0.0
      %1744 = vmatprep.subr.mxu0 0.0
      %1745 = vmatpush1.msra.mxu0 0.0
      %1746 = vmatprep.subr.mxu0 0.0
      %1747 = vmatpush1.msra.mxu0 0.0
      %1748 = vmatprep.subr.mxu0 0.0
      %1749 = vmatpush1.msra.mxu0 0.0
      %1750 = vmatprep.subr.mxu0 0.0
      %1751 = vmatpush1.msra.mxu0 0.0
      %1752 = vmatprep.subr.mxu0 0.0
      %1753 = vmatpush1.msra.mxu0 0.0
      %1754 = vmatprep.subr.mxu0 0.0
      %1755 = vmatpush1.msra.mxu0 0.0
      %1756 = vmatprep.subr.mxu0 0.0
      %1757 = vmatpush1.msra.mxu0 0.0
      %1758 = vmatprep.subr.mxu0 0.0
      %1759 = vmatpush1.msra.mxu0 0.0
      %1760 = vmatprep.subr.mxu0 0.0
      %1761 = vmatpush1.msra.mxu0 0.0
      %1762 = vmatprep.subr.mxu0 0.0
      %1763 = vmatpush1.msra.mxu0 0.0
      %1764 = vmatprep.subr.mxu0 0.0
      %1765 = vmatpush1.msra.mxu0 0.0
      %1766 = vmatprep.subr.mxu0 0.0
      %1767 = vmatpush1.msra.mxu0 0.0
      %1768 = vmatprep.subr.mxu0 0.0
      %1769 = vmatpush1.msra.mxu0 0.0
      %1770 = vmatprep.subr.mxu0 0.0
      %1771 = vmatpush1.msra.mxu0 0.0
      %1772 = vmatprep.subr.mxu0 0.0
      %1773 = vmatpush1.msra.mxu0 0.0
      %1774 = vmatprep.subr.mxu0 0.0
      %1775 = vmatpush1.msra.mxu0 0.0
      %1776 = vmatprep.subr.mxu0 0.0
      %1777 = vmatpush1.msra.mxu0 0.0
      %1778 = vmatprep.subr.mxu0 0.0
      %1779 = vmatpush1.msra.mxu0 0.0
      %1780 = vmatprep.subr.mxu0 0.0
      %1781 = vmatpush1.msra.mxu0 0.0
      %1782 = vmatprep.subr.mxu0 0.0
      %1783 = vmatpush1.msra.mxu0 0.0
      %1784 = vmatprep.subr.mxu0 0.0
      %1785 = vmatpush1.msra.mxu0 0.0
      %1786 = vmatprep.subr.mxu0 0.0
      %1787 = vmatpush1.msra.mxu0 0.0
      %1788 = vmatprep.subr.mxu0 0.0
      %1789 = vmatpush1.msra.mxu0 0.0
      %1790 = vmatprep.subr.mxu0 0.0
      %1791 = vmatpush1.msra.mxu0 0.0
      %1792 = vmatprep.subr.mxu0 0.0
      %1793 = vmatpush1.msra.mxu0 0.0
      %1794 = vmatprep.subr.mxu0 0.0
      %1795 = vmatpush1.msra.mxu0 0.0
      %1796 = vmatprep.subr.mxu0 0.0
      %1797 = vmatpush1.msra.mxu0 0.0
      %1798 = vmatprep.subr.mxu0 0.0
      %1799 = vmatpush1.msra.mxu0 0.0
      %1800 = vmatprep.mubr.f32.mxu0 0.0
      %v1801 = vand.u32 %v1647, 4294901760
      %1802 = vmatmul.mubr.f32.gmra.mrb[0].mxu0 %v1801
      %v1803 = vpop.f32.mrb[0].mxu0
      %v1804 = vadd.f32 %v1723, %v1803
      %v1805 = vpop.f32.mrb[0].mxu0
      %1806 = vdwg.mxu0
      %1807 = vmatprep.subr.mxu0 0.0
      %v1808 = vand.u32 %v257, 4294901760
      %v1809 = vsub.f32 %v257, %v1808
      %1810 = vmatpush1.msra.mxu0 %v1809
      %1811 = vmatprep.subr.mxu0 0.0
      %v1812 = vand.u32 %v258, 4294901760
      %v1813 = vsub.f32 %v258, %v1812
      %1814 = vmatpush1.msra.mxu0 %v1813
      %1815 = vmatprep.subr.mxu0 0.0
      %1816 = vmatpush1.msra.mxu0 0.0
      %1817 = vmatprep.subr.mxu0 0.0
      %1818 = vmatpush1.msra.mxu0 0.0
      %1819 = vmatprep.subr.mxu0 0.0
      %1820 = vmatpush1.msra.mxu0 0.0
      %1821 = vmatprep.subr.mxu0 0.0
      %1822 = vmatpush1.msra.mxu0 0.0
      %1823 = vmatprep.subr.mxu0 0.0
      %1824 = vmatpush1.msra.mxu0 0.0
      %1825 = vmatprep.subr.mxu0 0.0
      %1826 = vmatpush1.msra.mxu0 0.0
      %1827 = vmatprep.subr.mxu0 0.0
      %1828 = vmatpush1.msra.mxu0 0.0
      %1829 = vmatprep.subr.mxu0 0.0
      %1830 = vmatpush1.msra.mxu0 0.0
      %1831 = vmatprep.subr.mxu0 0.0
      %1832 = vmatpush1.msra.mxu0 0.0
      %1833 = vmatprep.subr.mxu0 0.0
      %1834 = vmatpush1.msra.mxu0 0.0
      %1835 = vmatprep.subr.mxu0 0.0
      %1836 = vmatpush1.msra.mxu0 0.0
      %1837 = vmatprep.subr.mxu0 0.0
      %1838 = vmatpush1.msra.mxu0 0.0
      %1839 = vmatprep.subr.mxu0 0.0
      %1840 = vmatpush1.msra.mxu0 0.0
      %1841 = vmatprep.subr.mxu0 0.0
      %1842 = vmatpush1.msra.mxu0 0.0
      %1843 = vmatprep.subr.mxu0 0.0
      %1844 = vmatpush1.msra.mxu0 0.0
      %1845 = vmatprep.subr.mxu0 0.0
      %1846 = vmatpush1.msra.mxu0 0.0
      %1847 = vmatprep.subr.mxu0 0.0
      %1848 = vmatpush1.msra.mxu0 0.0
      %1849 = vmatprep.subr.mxu0 0.0
      %1850 = vmatpush1.msra.mxu0 0.0
      %1851 = vmatprep.subr.mxu0 0.0
      %1852 = vmatpush1.msra.mxu0 0.0
      %1853 = vmatprep.subr.mxu0 0.0
      %1854 = vmatpush1.msra.mxu0 0.0
      %1855 = vmatprep.subr.mxu0 0.0
      %1856 = vmatpush1.msra.mxu0 0.0
      %1857 = vmatprep.subr.mxu0 0.0
      %1858 = vmatpush1.msra.mxu0 0.0
      %1859 = vmatprep.subr.mxu0 0.0
      %1860 = vmatpush1.msra.mxu0 0.0
      %1861 = vmatprep.subr.mxu0 0.0
      %1862 = vmatpush1.msra.mxu0 0.0
      %1863 = vmatprep.subr.mxu0 0.0
      %1864 = vmatpush1.msra.mxu0 0.0
      %1865 = vmatprep.subr.mxu0 0.0
      %1866 = vmatpush1.msra.mxu0 0.0
      %1867 = vmatprep.subr.mxu0 0.0
      %1868 = vmatpush1.msra.mxu0 0.0
      %1869 = vmatprep.subr.mxu0 0.0
      %1870 = vmatpush1.msra.mxu0 0.0
      %1871 = vmatprep.subr.mxu0 0.0
      %1872 = vmatpush1.msra.mxu0 0.0
      %1873 = vmatprep.subr.mxu0 0.0
      %1874 = vmatpush1.msra.mxu0 0.0
      %1875 = vmatprep.mubr.f32.mxu0 0.0
      %v1876 = vand.u32 %v1647, 4294901760
      %v1877 = vsub.f32 %v1647, %v1876
      %1878 = vmatmul.mubr.f32.gmra.mrb[0].mxu0 %v1877
      %v1879 = vpop.f32.mrb[0].mxu0
      %v1880 = vadd.f32 %v1804, %v1879
      %v1881 = vpop.f32.mrb[0].mxu0
      %1882 = vdwg.mxu0
      %1883 = vmatprep.subr.mxu0 0.0
      %v1884 = vand.u32 %v257, 4294901760
      %1885 = vmatpush1.msra.mxu0 %v1884
      %1886 = vmatprep.subr.mxu0 0.0
      %v1887 = vand.u32 %v258, 4294901760
      %1888 = vmatpush1.msra.mxu0 %v1887
      %1889 = vmatprep.subr.mxu0 0.0
      %1890 = vmatpush1.msra.mxu0 0.0
      %1891 = vmatprep.subr.mxu0 0.0
      %1892 = vmatpush1.msra.mxu0 0.0
      %1893 = vmatprep.subr.mxu0 0.0
      %1894 = vmatpush1.msra.mxu0 0.0
      %1895 = vmatprep.subr.mxu0 0.0
      %1896 = vmatpush1.msra.mxu0 0.0
      %1897 = vmatprep.subr.mxu0 0.0
      %1898 = vmatpush1.msra.mxu0 0.0
      %1899 = vmatprep.subr.mxu0 0.0
      %1900 = vmatpush1.msra.mxu0 0.0
      %1901 = vmatprep.subr.mxu0 0.0
      %1902 = vmatpush1.msra.mxu0 0.0
      %1903 = vmatprep.subr.mxu0 0.0
      %1904 = vmatpush1.msra.mxu0 0.0
      %1905 = vmatprep.subr.mxu0 0.0
      %1906 = vmatpush1.msra.mxu0 0.0
      %1907 = vmatprep.subr.mxu0 0.0
      %1908 = vmatpush1.msra.mxu0 0.0
      %1909 = vmatprep.subr.mxu0 0.0
      %1910 = vmatpush1.msra.mxu0 0.0
      %1911 = vmatprep.subr.mxu0 0.0
      %1912 = vmatpush1.msra.mxu0 0.0
      %1913 = vmatprep.subr.mxu0 0.0
      %1914 = vmatpush1.msra.mxu0 0.0
      %1915 = vmatprep.subr.mxu0 0.0
      %1916 = vmatpush1.msra.mxu0 0.0
      %1917 = vmatprep.subr.mxu0 0.0
      %1918 = vmatpush1.msra.mxu0 0.0
      %1919 = vmatprep.subr.mxu0 0.0
      %1920 = vmatpush1.msra.mxu0 0.0
      %1921 = vmatprep.subr.mxu0 0.0
      %1922 = vmatpush1.msra.mxu0 0.0
      %1923 = vmatprep.subr.mxu0 0.0
      %1924 = vmatpush1.msra.mxu0 0.0
      %1925 = vmatprep.subr.mxu0 0.0
      %1926 = vmatpush1.msra.mxu0 0.0
      %1927 = vmatprep.subr.mxu0 0.0
      %1928 = vmatpush1.msra.mxu0 0.0
      %1929 = vmatprep.subr.mxu0 0.0
      %1930 = vmatpush1.msra.mxu0 0.0
      %1931 = vmatprep.subr.mxu0 0.0
      %1932 = vmatpush1.msra.mxu0 0.0
      %1933 = vmatprep.subr.mxu0 0.0
      %1934 = vmatpush1.msra.mxu0 0.0
      %1935 = vmatprep.subr.mxu0 0.0
      %1936 = vmatpush1.msra.mxu0 0.0
      %1937 = vmatprep.subr.mxu0 0.0
      %1938 = vmatpush1.msra.mxu0 0.0
      %1939 = vmatprep.subr.mxu0 0.0
      %1940 = vmatpush1.msra.mxu0 0.0
      %1941 = vmatprep.subr.mxu0 0.0
      %1942 = vmatpush1.msra.mxu0 0.0
      %1943 = vmatprep.subr.mxu0 0.0
      %1944 = vmatpush1.msra.mxu0 0.0
      %1945 = vmatprep.subr.mxu0 0.0
      %1946 = vmatpush1.msra.mxu0 0.0
      %1947 = vmatprep.subr.mxu0 0.0
      %1948 = vmatpush1.msra.mxu0 0.0
      %1949 = vmatprep.mubr.f32.mxu0 0.0
      %v1950 = vand.u32 %v1647, 4294901760
      %v1951 = vsub.f32 %v1647, %v1950
      %v1952 = vand.u32 %v1951, 4294901760
      %1953 = vmatmul.mubr.f32.gmra.mrb[0].mxu0 %v1952
      %v1954 = vpop.f32.mrb[0].mxu0
      %v1955 = vadd.f32 %v1880, %v1954
      %v1956 = vpop.f32.mrb[0].mxu0
      %1957 = vdwg.mxu0
      %1958 = vmatprep.subr.mxu0 0.0
      %v1959 = vand.u32 %v257, 4294901760
      %v1960 = vsub.f32 %v257, %v1959
      %v1961 = vand.u32 %v1960, 4294901760
      %1962 = vmatpush1.msra.mxu0 %v1961
      %1963 = vmatprep.subr.mxu0 0.0
      %v1964 = vand.u32 %v258, 4294901760
      %v1965 = vsub.f32 %v258, %v1964
      %v1966 = vand.u32 %v1965, 4294901760
      %1967 = vmatpush1.msra.mxu0 %v1966
      %1968 = vmatprep.subr.mxu0 0.0
      %1969 = vmatpush1.msra.mxu0 0.0
      %1970 = vmatprep.subr.mxu0 0.0
      %1971 = vmatpush1.msra.mxu0 0.0
      %1972 = vmatprep.subr.mxu0 0.0
      %1973 = vmatpush1.msra.mxu0 0.0
      %1974 = vmatprep.subr.mxu0 0.0
      %1975 = vmatpush1.msra.mxu0 0.0
      %1976 = vmatprep.subr.mxu0 0.0
      %1977 = vmatpush1.msra.mxu0 0.0
      %1978 = vmatprep.subr.mxu0 0.0
      %1979 = vmatpush1.msra.mxu0 0.0
      %1980 = vmatprep.subr.mxu0 0.0
      %1981 = vmatpush1.msra.mxu0 0.0
      %1982 = vmatprep.subr.mxu0 0.0
      %1983 = vmatpush1.msra.mxu0 0.0
      %1984 = vmatprep.subr.mxu0 0.0
      %1985 = vmatpush1.msra.mxu0 0.0
      %1986 = vmatprep.subr.mxu0 0.0
      %1987 = vmatpush1.msra.mxu0 0.0
      %1988 = vmatprep.subr.mxu0 0.0
      %1989 = vmatpush1.msra.mxu0 0.0
      %1990 = vmatprep.subr.mxu0 0.0
      %1991 = vmatpush1.msra.mxu0 0.0
      %1992 = vmatprep.subr.mxu0 0.0
      %1993 = vmatpush1.msra.mxu0 0.0
      %1994 = vmatprep.subr.mxu0 0.0
      %1995 = vmatpush1.msra.mxu0 0.0
      %1996 = vmatprep.subr.mxu0 0.0
      %1997 = vmatpush1.msra.mxu0 0.0
      %1998 = vmatprep.subr.mxu0 0.0
      %1999 = vmatpush1.msra.mxu0 0.0
      %2000 = vmatprep.subr.mxu0 0.0
      %2001 = vmatpush1.msra.mxu0 0.0
      %2002 = vmatprep.subr.mxu0 0.0
      %2003 = vmatpush1.msra.mxu0 0.0
      %2004 = vmatprep.subr.mxu0 0.0
      %2005 = vmatpush1.msra.mxu0 0.0
      %2006 = vmatprep.subr.mxu0 0.0
      %2007 = vmatpush1.msra.mxu0 0.0
      %2008 = vmatprep.subr.mxu0 0.0
      %2009 = vmatpush1.msra.mxu0 0.0
      %2010 = vmatprep.subr.mxu0 0.0
      %2011 = vmatpush1.msra.mxu0 0.0
      %2012 = vmatprep.subr.mxu0 0.0
      %2013 = vmatpush1.msra.mxu0 0.0
      %2014 = vmatprep.subr.mxu0 0.0
      %2015 = vmatpush1.msra.mxu0 0.0
      %2016 = vmatprep.subr.mxu0 0.0
      %2017 = vmatpush1.msra.mxu0 0.0
      %2018 = vmatprep.subr.mxu0 0.0
      %2019 = vmatpush1.msra.mxu0 0.0
      %2020 = vmatprep.subr.mxu0 0.0
      %2021 = vmatpush1.msra.mxu0 0.0
      %2022 = vmatprep.subr.mxu0 0.0
      %2023 = vmatpush1.msra.mxu0 0.0
      %2024 = vmatprep.subr.mxu0 0.0
      %2025 = vmatpush1.msra.mxu0 0.0
      %2026 = vmatprep.subr.mxu0 0.0
      %2027 = vmatpush1.msra.mxu0 0.0
      %2028 = vmatprep.mubr.f32.mxu0 0.0
      %v2029 = vand.u32 %v1647, 4294901760
      %2030 = vmatmul.mubr.f32.gmra.mrb[0].mxu0 %v2029
      %v2031 = vpop.f32.mrb[0].mxu0
      %v2032 = vadd.f32 %v1955, %v2031
      %v2033 = vpop.f32.mrb[0].mxu0
      %2034 = vdwg.mxu0
      %2035 = vmatprep.subr.mxu0 0.0
      %v2036 = vand.u32 %v257, 4294901760
      %2037 = vmatpush1.msra.mxu0 %v2036
      %2038 = vmatprep.subr.mxu0 0.0
      %v2039 = vand.u32 %v258, 4294901760
      %2040 = vmatpush1.msra.mxu0 %v2039
      %2041 = vmatprep.subr.mxu0 0.0
      %2042 = vmatpush1.msra.mxu0 0.0
      %2043 = vmatprep.subr.mxu0 0.0
      %2044 = vmatpush1.msra.mxu0 0.0
      %2045 = vmatprep.subr.mxu0 0.0
      %2046 = vmatpush1.msra.mxu0 0.0
      %2047 = vmatprep.subr.mxu0 0.0
      %2048 = vmatpush1.msra.mxu0 0.0
      %2049 = vmatprep.subr.mxu0 0.0
      %2050 = vmatpush1.msra.mxu0 0.0
      %2051 = vmatprep.subr.mxu0 0.0
      %2052 = vmatpush1.msra.mxu0 0.0
      %2053 = vmatprep.subr.mxu0 0.0
      %2054 = vmatpush1.msra.mxu0 0.0
      %2055 = vmatprep.subr.mxu0 0.0
      %2056 = vmatpush1.msra.mxu0 0.0
      %2057 = vmatprep.subr.mxu0 0.0
      %2058 = vmatpush1.msra.mxu0 0.0
      %2059 = vmatprep.subr.mxu0 0.0
      %2060 = vmatpush1.msra.mxu0 0.0
      %2061 = vmatprep.subr.mxu0 0.0
      %2062 = vmatpush1.msra.mxu0 0.0
      %2063 = vmatprep.subr.mxu0 0.0
      %2064 = vmatpush1.msra.mxu0 0.0
      %2065 = vmatprep.subr.mxu0 0.0
      %2066 = vmatpush1.msra.mxu0 0.0
      %2067 = vmatprep.subr.mxu0 0.0
      %2068 = vmatpush1.msra.mxu0 0.0
      %2069 = vmatprep.subr.mxu0 0.0
      %2070 = vmatpush1.msra.mxu0 0.0
      %2071 = vmatprep.subr.mxu0 0.0
      %2072 = vmatpush1.msra.mxu0 0.0
      %2073 = vmatprep.subr.mxu0 0.0
      %2074 = vmatpush1.msra.mxu0 0.0
      %2075 = vmatprep.subr.mxu0 0.0
      %2076 = vmatpush1.msra.mxu0 0.0
      %2077 = vmatprep.subr.mxu0 0.0
      %2078 = vmatpush1.msra.mxu0 0.0
      %2079 = vmatprep.subr.mxu0 0.0
      %2080 = vmatpush1.msra.mxu0 0.0
      %2081 = vmatprep.subr.mxu0 0.0
      %2082 = vmatpush1.msra.mxu0 0.0
      %2083 = vmatprep.subr.mxu0 0.0
      %2084 = vmatpush1.msra.mxu0 0.0
      %2085 = vmatprep.subr.mxu0 0.0
      %2086 = vmatpush1.msra.mxu0 0.0
      %2087 = vmatprep.subr.mxu0 0.0
      %2088 = vmatpush1.msra.mxu0 0.0
      %2089 = vmatprep.subr.mxu0 0.0
      %2090 = vmatpush1.msra.mxu0 0.0
      %2091 = vmatprep.subr.mxu0 0.0
      %2092 = vmatpush1.msra.mxu0 0.0
      %2093 = vmatprep.subr.mxu0 0.0
      %2094 = vmatpush1.msra.mxu0 0.0
      %2095 = vmatprep.subr.mxu0 0.0
      %2096 = vmatpush1.msra.mxu0 0.0
      %2097 = vmatprep.subr.mxu0 0.0
      %2098 = vmatpush1.msra.mxu0 0.0
      %2099 = vmatprep.subr.mxu0 0.0
      %2100 = vmatpush1.msra.mxu0 0.0
      %2101 = vmatprep.mubr.f32.mxu0 0.0
      %v2102 = vand.u32 %v1647, 4294901760
      %2103 = vmatmul.mubr.f32.gmra.mrb[0].mxu0 %v2102
      %v2104 = vpop.f32.mrb[0].mxu0
      %v2105 = vadd.f32 %v2032, %v2104
      %v2106 = vpop.f32.mrb[0].mxu0
      %2107 = vdwg.mxu0
      %v2112 = vsel %vm1641, %v1558, %v1549
      %v2113 = vsel %vm1643, %v1567, %v2112
      %v2114 = vsel %vm1645, %v1576, %v2113
      %v2115 = vsel %vm1540, %v2114, 0
      %2117 = vmatprep.subr.mxu0 0.0
      %v2118 = vand.u32 %v259, 4294901760
      %2119 = vmatpush1.msra.mxu0 %v2118
      %2120 = vmatprep.subr.mxu0 0.0
      %v2121 = vand.u32 %v260, 4294901760
      %2122 = vmatpush1.msra.mxu0 %v2121
      %2123 = vmatprep.subr.mxu0 0.0
      %2124 = vmatpush1.msra.mxu0 0.0
      %2125 = vmatprep.subr.mxu0 0.0
      %2126 = vmatpush1.msra.mxu0 0.0
      %2127 = vmatprep.subr.mxu0 0.0
      %2128 = vmatpush1.msra.mxu0 0.0
      %2129 = vmatprep.subr.mxu0 0.0
      %2130 = vmatpush1.msra.mxu0 0.0
      %2131 = vmatprep.subr.mxu0 0.0
      %2132 = vmatpush1.msra.mxu0 0.0
      %2133 = vmatprep.subr.mxu0 0.0
      %2134 = vmatpush1.msra.mxu0 0.0
      %2135 = vmatprep.subr.mxu0 0.0
      %2136 = vmatpush1.msra.mxu0 0.0
      %2137 = vmatprep.subr.mxu0 0.0
      %2138 = vmatpush1.msra.mxu0 0.0
      %2139 = vmatprep.subr.mxu0 0.0
      %2140 = vmatpush1.msra.mxu0 0.0
      %2141 = vmatprep.subr.mxu0 0.0
      %2142 = vmatpush1.msra.mxu0 0.0
      %2143 = vmatprep.subr.mxu0 0.0
      %2144 = vmatpush1.msra.mxu0 0.0
      %2145 = vmatprep.subr.mxu0 0.0
      %2146 = vmatpush1.msra.mxu0 0.0
      %2147 = vmatprep.subr.mxu0 0.0
      %2148 = vmatpush1.msra.mxu0 0.0
      %2149 = vmatprep.subr.mxu0 0.0
      %2150 = vmatpush1.msra.mxu0 0.0
      %2151 = vmatprep.subr.mxu0 0.0
      %2152 = vmatpush1.msra.mxu0 0.0
      %2153 = vmatprep.subr.mxu0 0.0
      %2154 = vmatpush1.msra.mxu0 0.0
      %2155 = vmatprep.subr.mxu0 0.0
      %2156 = vmatpush1.msra.mxu0 0.0
      %2157 = vmatprep.subr.mxu0 0.0
      %2158 = vmatpush1.msra.mxu0 0.0
      %2159 = vmatprep.subr.mxu0 0.0
      %2160 = vmatpush1.msra.mxu0 0.0
      %2161 = vmatprep.subr.mxu0 0.0
      %2162 = vmatpush1.msra.mxu0 0.0
      %2163 = vmatprep.subr.mxu0 0.0
      %2164 = vmatpush1.msra.mxu0 0.0
      %2165 = vmatprep.subr.mxu0 0.0
      %2166 = vmatpush1.msra.mxu0 0.0
      %2167 = vmatprep.subr.mxu0 0.0
      %2168 = vmatpush1.msra.mxu0 0.0
      %2169 = vmatprep.subr.mxu0 0.0
      %2170 = vmatpush1.msra.mxu0 0.0
      %2171 = vmatprep.subr.mxu0 0.0
      %2172 = vmatpush1.msra.mxu0 0.0
      %2173 = vmatprep.subr.mxu0 0.0
      %2174 = vmatpush1.msra.mxu0 0.0
      %2175 = vmatprep.subr.mxu0 0.0
      %2176 = vmatpush1.msra.mxu0 0.0
      %2177 = vmatprep.subr.mxu0 0.0
      %2178 = vmatpush1.msra.mxu0 0.0
      %2179 = vmatprep.subr.mxu0 0.0
      %2180 = vmatpush1.msra.mxu0 0.0
      %2181 = vmatprep.subr.mxu0 0.0
      %2182 = vmatpush1.msra.mxu0 0.0
      %2183 = vmatprep.mubr.f32.mxu0 0.0
      %v2184 = vand.u32 %v2115, 4294901760
      %v2185 = vsub.f32 %v2115, %v2184
      %v2186 = vand.u32 %v2185, 4294901760
      %v2187 = vsub.f32 %v2185, %v2186
      %v2188 = vand.u32 %v2187, 4294901760
      %2189 = vmatmul.mubr.f32.gmra.mrb[0].mxu0 %v2188
      %v2190 = vpop.f32.mrb[0].mxu0
      %v2191 = vadd.f32 0.0, %v2190
      %v2192 = vpop.f32.mrb[0].mxu0
      %2193 = vdwg.mxu0
      %2194 = vmatprep.subr.mxu0 0.0
      %v2195 = vand.u32 %v259, 4294901760
      %v2196 = vsub.f32 %v259, %v2195
      %v2197 = vand.u32 %v2196, 4294901760
      %v2198 = vsub.f32 %v2196, %v2197
      %v2199 = vand.u32 %v2198, 4294901760
      %2200 = vmatpush1.msra.mxu0 %v2199
      %2201 = vmatprep.subr.mxu0 0.0
      %v2202 = vand.u32 %v260, 4294901760
      %v2203 = vsub.f32 %v260, %v2202
      %v2204 = vand.u32 %v2203, 4294901760
      %v2205 = vsub.f32 %v2203, %v2204
      %v2206 = vand.u32 %v2205, 4294901760
      %2207 = vmatpush1.msra.mxu0 %v2206
      %2208 = vmatprep.subr.mxu0 0.0
      %2209 = vmatpush1.msra.mxu0 0.0
      %2210 = vmatprep.subr.mxu0 0.0
      %2211 = vmatpush1.msra.mxu0 0.0
      %2212 = vmatprep.subr.mxu0 0.0
      %2213 = vmatpush1.msra.mxu0 0.0
      %2214 = vmatprep.subr.mxu0 0.0
      %2215 = vmatpush1.msra.mxu0 0.0
      %2216 = vmatprep.subr.mxu0 0.0
      %2217 = vmatpush1.msra.mxu0 0.0
      %2218 = vmatprep.subr.mxu0 0.0
      %2219 = vmatpush1.msra.mxu0 0.0
      %2220 = vmatprep.subr.mxu0 0.0
      %2221 = vmatpush1.msra.mxu0 0.0
      %2222 = vmatprep.subr.mxu0 0.0
      %2223 = vmatpush1.msra.mxu0 0.0
      %2224 = vmatprep.subr.mxu0 0.0
      %2225 = vmatpush1.msra.mxu0 0.0
      %2226 = vmatprep.subr.mxu0 0.0
      %2227 = vmatpush1.msra.mxu0 0.0
      %2228 = vmatprep.subr.mxu0 0.0
      %2229 = vmatpush1.msra.mxu0 0.0
      %2230 = vmatprep.subr.mxu0 0.0
      %2231 = vmatpush1.msra.mxu0 0.0
      %2232 = vmatprep.subr.mxu0 0.0
      %2233 = vmatpush1.msra.mxu0 0.0
      %2234 = vmatprep.subr.mxu0 0.0
      %2235 = vmatpush1.msra.mxu0 0.0
      %2236 = vmatprep.subr.mxu0 0.0
      %2237 = vmatpush1.msra.mxu0 0.0
      %2238 = vmatprep.subr.mxu0 0.0
      %2239 = vmatpush1.msra.mxu0 0.0
      %2240 = vmatprep.subr.mxu0 0.0
      %2241 = vmatpush1.msra.mxu0 0.0
      %2242 = vmatprep.subr.mxu0 0.0
      %2243 = vmatpush1.msra.mxu0 0.0
      %2244 = vmatprep.subr.mxu0 0.0
      %2245 = vmatpush1.msra.mxu0 0.0
      %2246 = vmatprep.subr.mxu0 0.0
      %2247 = vmatpush1.msra.mxu0 0.0
      %2248 = vmatprep.subr.mxu0 0.0
      %2249 = vmatpush1.msra.mxu0 0.0
      %2250 = vmatprep.subr.mxu0 0.0
      %2251 = vmatpush1.msra.mxu0 0.0
      %2252 = vmatprep.subr.mxu0 0.0
      %2253 = vmatpush1.msra.mxu0 0.0
      %2254 = vmatprep.subr.mxu0 0.0
      %2255 = vmatpush1.msra.mxu0 0.0
      %2256 = vmatprep.subr.mxu0 0.0
      %2257 = vmatpush1.msra.mxu0 0.0
      %2258 = vmatprep.subr.mxu0 0.0
      %2259 = vmatpush1.msra.mxu0 0.0
      %2260 = vmatprep.subr.mxu0 0.0
      %2261 = vmatpush1.msra.mxu0 0.0
      %2262 = vmatprep.subr.mxu0 0.0
      %2263 = vmatpush1.msra.mxu0 0.0
      %2264 = vmatprep.subr.mxu0 0.0
      %2265 = vmatpush1.msra.mxu0 0.0
      %2266 = vmatprep.subr.mxu0 0.0
      %2267 = vmatpush1.msra.mxu0 0.0
      %2268 = vmatprep.mubr.f32.mxu0 0.0
      %v2269 = vand.u32 %v2115, 4294901760
      %2270 = vmatmul.mubr.f32.gmra.mrb[0].mxu0 %v2269
      %v2271 = vpop.f32.mrb[0].mxu0
      %v2272 = vadd.f32 %v2191, %v2271
      %v2273 = vpop.f32.mrb[0].mxu0
      %2274 = vdwg.mxu0
      %2275 = vmatprep.subr.mxu0 0.0
      %v2276 = vand.u32 %v259, 4294901760
      %v2277 = vsub.f32 %v259, %v2276
      %2278 = vmatpush1.msra.mxu0 %v2277
      %2279 = vmatprep.subr.mxu0 0.0
      %v2280 = vand.u32 %v260, 4294901760
      %v2281 = vsub.f32 %v260, %v2280
      %2282 = vmatpush1.msra.mxu0 %v2281
      %2283 = vmatprep.subr.mxu0 0.0
      %2284 = vmatpush1.msra.mxu0 0.0
      %2285 = vmatprep.subr.mxu0 0.0
      %2286 = vmatpush1.msra.mxu0 0.0
      %2287 = vmatprep.subr.mxu0 0.0
      %2288 = vmatpush1.msra.mxu0 0.0
      %2289 = vmatprep.subr.mxu0 0.0
      %2290 = vmatpush1.msra.mxu0 0.0
      %2291 = vmatprep.subr.mxu0 0.0
      %2292 = vmatpush1.msra.mxu0 0.0
      %2293 = vmatprep.subr.mxu0 0.0
      %2294 = vmatpush1.msra.mxu0 0.0
      %2295 = vmatprep.subr.mxu0 0.0
      %2296 = vmatpush1.msra.mxu0 0.0
      %2297 = vmatprep.subr.mxu0 0.0
      %2298 = vmatpush1.msra.mxu0 0.0
      %2299 = vmatprep.subr.mxu0 0.0
      %2300 = vmatpush1.msra.mxu0 0.0
      %2301 = vmatprep.subr.mxu0 0.0
      %2302 = vmatpush1.msra.mxu0 0.0
      %2303 = vmatprep.subr.mxu0 0.0
      %2304 = vmatpush1.msra.mxu0 0.0
      %2305 = vmatprep.subr.mxu0 0.0
      %2306 = vmatpush1.msra.mxu0 0.0
      %2307 = vmatprep.subr.mxu0 0.0
      %2308 = vmatpush1.msra.mxu0 0.0
      %2309 = vmatprep.subr.mxu0 0.0
      %2310 = vmatpush1.msra.mxu0 0.0
      %2311 = vmatprep.subr.mxu0 0.0
      %2312 = vmatpush1.msra.mxu0 0.0
      %2313 = vmatprep.subr.mxu0 0.0
      %2314 = vmatpush1.msra.mxu0 0.0
      %2315 = vmatprep.subr.mxu0 0.0
      %2316 = vmatpush1.msra.mxu0 0.0
      %2317 = vmatprep.subr.mxu0 0.0
      %2318 = vmatpush1.msra.mxu0 0.0
      %2319 = vmatprep.subr.mxu0 0.0
      %2320 = vmatpush1.msra.mxu0 0.0
      %2321 = vmatprep.subr.mxu0 0.0
      %2322 = vmatpush1.msra.mxu0 0.0
      %2323 = vmatprep.subr.mxu0 0.0
      %2324 = vmatpush1.msra.mxu0 0.0
      %2325 = vmatprep.subr.mxu0 0.0
      %2326 = vmatpush1.msra.mxu0 0.0
      %2327 = vmatprep.subr.mxu0 0.0
      %2328 = vmatpush1.msra.mxu0 0.0
      %2329 = vmatprep.subr.mxu0 0.0
      %2330 = vmatpush1.msra.mxu0 0.0
      %2331 = vmatprep.subr.mxu0 0.0
      %2332 = vmatpush1.msra.mxu0 0.0
      %2333 = vmatprep.subr.mxu0 0.0
      %2334 = vmatpush1.msra.mxu0 0.0
      %2335 = vmatprep.subr.mxu0 0.0
      %2336 = vmatpush1.msra.mxu0 0.0
      %2337 = vmatprep.subr.mxu0 0.0
      %2338 = vmatpush1.msra.mxu0 0.0
      %2339 = vmatprep.subr.mxu0 0.0
      %2340 = vmatpush1.msra.mxu0 0.0
      %2341 = vmatprep.subr.mxu0 0.0
      %2342 = vmatpush1.msra.mxu0 0.0
      %2343 = vmatprep.mubr.f32.mxu0 0.0
      %v2344 = vand.u32 %v2115, 4294901760
      %v2345 = vsub.f32 %v2115, %v2344
      %2346 = vmatmul.mubr.f32.gmra.mrb[0].mxu0 %v2345
      %v2347 = vpop.f32.mrb[0].mxu0
      %v2348 = vadd.f32 %v2272, %v2347
      %v2349 = vpop.f32.mrb[0].mxu0
      %2350 = vdwg.mxu0
      %2351 = vmatprep.subr.mxu0 0.0
      %v2352 = vand.u32 %v259, 4294901760
      %2353 = vmatpush1.msra.mxu0 %v2352
      %2354 = vmatprep.subr.mxu0 0.0
      %v2355 = vand.u32 %v260, 4294901760
      %2356 = vmatpush1.msra.mxu0 %v2355
      %2357 = vmatprep.subr.mxu0 0.0
      %2358 = vmatpush1.msra.mxu0 0.0
      %2359 = vmatprep.subr.mxu0 0.0
      %2360 = vmatpush1.msra.mxu0 0.0
      %2361 = vmatprep.subr.mxu0 0.0
      %2362 = vmatpush1.msra.mxu0 0.0
      %2363 = vmatprep.subr.mxu0 0.0
      %2364 = vmatpush1.msra.mxu0 0.0
      %2365 = vmatprep.subr.mxu0 0.0
      %2366 = vmatpush1.msra.mxu0 0.0
      %2367 = vmatprep.subr.mxu0 0.0
      %2368 = vmatpush1.msra.mxu0 0.0
      %2369 = vmatprep.subr.mxu0 0.0
      %2370 = vmatpush1.msra.mxu0 0.0
      %2371 = vmatprep.subr.mxu0 0.0
      %2372 = vmatpush1.msra.mxu0 0.0
      %2373 = vmatprep.subr.mxu0 0.0
      %2374 = vmatpush1.msra.mxu0 0.0
      %2375 = vmatprep.subr.mxu0 0.0
      %2376 = vmatpush1.msra.mxu0 0.0
      %2377 = vmatprep.subr.mxu0 0.0
      %2378 = vmatpush1.msra.mxu0 0.0
      %2379 = vmatprep.subr.mxu0 0.0
      %2380 = vmatpush1.msra.mxu0 0.0
      %2381 = vmatprep.subr.mxu0 0.0
      %2382 = vmatpush1.msra.mxu0 0.0
      %2383 = vmatprep.subr.mxu0 0.0
      %2384 = vmatpush1.msra.mxu0 0.0
      %2385 = vmatprep.subr.mxu0 0.0
      %2386 = vmatpush1.msra.mxu0 0.0
      %2387 = vmatprep.subr.mxu0 0.0
      %2388 = vmatpush1.msra.mxu0 0.0
      %2389 = vmatprep.subr.mxu0 0.0
      %2390 = vmatpush1.msra.mxu0 0.0
      %2391 = vmatprep.subr.mxu0 0.0
      %2392 = vmatpush1.msra.mxu0 0.0
      %2393 = vmatprep.subr.mxu0 0.0
      %2394 = vmatpush1.msra.mxu0 0.0
      %2395 = vmatprep.subr.mxu0 0.0
      %2396 = vmatpush1.msra.mxu0 0.0
      %2397 = vmatprep.subr.mxu0 0.0
      %2398 = vmatpush1.msra.mxu0 0.0
      %2399 = vmatprep.subr.mxu0 0.0
      %2400 = vmatpush1.msra.mxu0 0.0
      %2401 = vmatprep.subr.mxu0 0.0
      %2402 = vmatpush1.msra.mxu0 0.0
      %2403 = vmatprep.subr.mxu0 0.0
      %2404 = vmatpush1.msra.mxu0 0.0
      %2405 = vmatprep.subr.mxu0 0.0
      %2406 = vmatpush1.msra.mxu0 0.0
      %2407 = vmatprep.subr.mxu0 0.0
      %2408 = vmatpush1.msra.mxu0 0.0
      %2409 = vmatprep.subr.mxu0 0.0
      %2410 = vmatpush1.msra.mxu0 0.0
      %2411 = vmatprep.subr.mxu0 0.0
      %2412 = vmatpush1.msra.mxu0 0.0
      %2413 = vmatprep.subr.mxu0 0.0
      %2414 = vmatpush1.msra.mxu0 0.0
      %2415 = vmatprep.subr.mxu0 0.0
      %2416 = vmatpush1.msra.mxu0 0.0
      %2417 = vmatprep.mubr.f32.mxu0 0.0
      %v2418 = vand.u32 %v2115, 4294901760
      %v2419 = vsub.f32 %v2115, %v2418
      %v2420 = vand.u32 %v2419, 4294901760
      %2421 = vmatmul.mubr.f32.gmra.mrb[0].mxu0 %v2420
      %v2422 = vpop.f32.mrb[0].mxu0
      %v2423 = vadd.f32 %v2348, %v2422
      %v2424 = vpop.f32.mrb[0].mxu0
      %2425 = vdwg.mxu0
      %2426 = vmatprep.subr.mxu0 0.0
      %v2427 = vand.u32 %v259, 4294901760
      %v2428 = vsub.f32 %v259, %v2427
      %v2429 = vand.u32 %v2428, 4294901760
      %2430 = vmatpush1.msra.mxu0 %v2429
      %2431 = vmatprep.subr.mxu0 0.0
      %v2432 = vand.u32 %v260, 4294901760
      %v2433 = vsub.f32 %v260, %v2432
      %v2434 = vand.u32 %v2433, 4294901760
      %2435 = vmatpush1.msra.mxu0 %v2434
      %2436 = vmatprep.subr.mxu0 0.0
      %2437 = vmatpush1.msra.mxu0 0.0
      %2438 = vmatprep.subr.mxu0 0.0
      %2439 = vmatpush1.msra.mxu0 0.0
      %2440 = vmatprep.subr.mxu0 0.0
      %2441 = vmatpush1.msra.mxu0 0.0
      %2442 = vmatprep.subr.mxu0 0.0
      %2443 = vmatpush1.msra.mxu0 0.0
      %2444 = vmatprep.subr.mxu0 0.0
      %2445 = vmatpush1.msra.mxu0 0.0
      %2446 = vmatprep.subr.mxu0 0.0
      %2447 = vmatpush1.msra.mxu0 0.0
      %2448 = vmatprep.subr.mxu0 0.0
      %2449 = vmatpush1.msra.mxu0 0.0
      %2450 = vmatprep.subr.mxu0 0.0
      %2451 = vmatpush1.msra.mxu0 0.0
      %2452 = vmatprep.subr.mxu0 0.0
      %2453 = vmatpush1.msra.mxu0 0.0
      %2454 = vmatprep.subr.mxu0 0.0
      %2455 = vmatpush1.msra.mxu0 0.0
      %2456 = vmatprep.subr.mxu0 0.0
      %2457 = vmatpush1.msra.mxu0 0.0
      %2458 = vmatprep.subr.mxu0 0.0
      %2459 = vmatpush1.msra.mxu0 0.0
      %2460 = vmatprep.subr.mxu0 0.0
      %2461 = vmatpush1.msra.mxu0 0.0
      %2462 = vmatprep.subr.mxu0 0.0
      %2463 = vmatpush1.msra.mxu0 0.0
      %2464 = vmatprep.subr.mxu0 0.0
      %2465 = vmatpush1.msra.mxu0 0.0
      %2466 = vmatprep.subr.mxu0 0.0
      %2467 = vmatpush1.msra.mxu0 0.0
      %2468 = vmatprep.subr.mxu0 0.0
      %2469 = vmatpush1.msra.mxu0 0.0
      %2470 = vmatprep.subr.mxu0 0.0
      %2471 = vmatpush1.msra.mxu0 0.0
      %2472 = vmatprep.subr.mxu0 0.0
      %2473 = vmatpush1.msra.mxu0 0.0
      %2474 = vmatprep.subr.mxu0 0.0
      %2475 = vmatpush1.msra.mxu0 0.0
      %2476 = vmatprep.subr.mxu0 0.0
      %2477 = vmatpush1.msra.mxu0 0.0
      %2478 = vmatprep.subr.mxu0 0.0
      %2479 = vmatpush1.msra.mxu0 0.0
      %2480 = vmatprep.subr.mxu0 0.0
      %2481 = vmatpush1.msra.mxu0 0.0
      %2482 = vmatprep.subr.mxu0 0.0
      %2483 = vmatpush1.msra.mxu0 0.0
      %2484 = vmatprep.subr.mxu0 0.0
      %2485 = vmatpush1.msra.mxu0 0.0
      %2486 = vmatprep.subr.mxu0 0.0
      %2487 = vmatpush1.msra.mxu0 0.0
      %2488 = vmatprep.subr.mxu0 0.0
      %2489 = vmatpush1.msra.mxu0 0.0
      %2490 = vmatprep.subr.mxu0 0.0
      %2491 = vmatpush1.msra.mxu0 0.0
      %2492 = vmatprep.subr.mxu0 0.0
      %2493 = vmatpush1.msra.mxu0 0.0
      %2494 = vmatprep.subr.mxu0 0.0
      %2495 = vmatpush1.msra.mxu0 0.0
      %2496 = vmatprep.mubr.f32.mxu0 0.0
      %v2497 = vand.u32 %v2115, 4294901760
      %2498 = vmatmul.mubr.f32.gmra.mrb[0].mxu0 %v2497
      %v2499 = vpop.f32.mrb[0].mxu0
      %v2500 = vadd.f32 %v2423, %v2499
      %v2501 = vpop.f32.mrb[0].mxu0
      %2502 = vdwg.mxu0
      %2503 = vmatprep.subr.mxu0 0.0
      %v2504 = vand.u32 %v259, 4294901760
      %2505 = vmatpush1.msra.mxu0 %v2504
      %2506 = vmatprep.subr.mxu0 0.0
      %v2507 = vand.u32 %v260, 4294901760
      %2508 = vmatpush1.msra.mxu0 %v2507
      %2509 = vmatprep.subr.mxu0 0.0
      %2510 = vmatpush1.msra.mxu0 0.0
      %2511 = vmatprep.subr.mxu0 0.0
      %2512 = vmatpush1.msra.mxu0 0.0
      %2513 = vmatprep.subr.mxu0 0.0
      %2514 = vmatpush1.msra.mxu0 0.0
      %2515 = vmatprep.subr.mxu0 0.0
      %2516 = vmatpush1.msra.mxu0 0.0
      %2517 = vmatprep.subr.mxu0 0.0
      %2518 = vmatpush1.msra.mxu0 0.0
      %2519 = vmatprep.subr.mxu0 0.0
      %2520 = vmatpush1.msra.mxu0 0.0
      %2521 = vmatprep.subr.mxu0 0.0
      %2522 = vmatpush1.msra.mxu0 0.0
      %2523 = vmatprep.subr.mxu0 0.0
      %2524 = vmatpush1.msra.mxu0 0.0
      %2525 = vmatprep.subr.mxu0 0.0
      %2526 = vmatpush1.msra.mxu0 0.0
      %2527 = vmatprep.subr.mxu0 0.0
      %2528 = vmatpush1.msra.mxu0 0.0
      %2529 = vmatprep.subr.mxu0 0.0
      %2530 = vmatpush1.msra.mxu0 0.0
      %2531 = vmatprep.subr.mxu0 0.0
      %2532 = vmatpush1.msra.mxu0 0.0
      %2533 = vmatprep.subr.mxu0 0.0
      %2534 = vmatpush1.msra.mxu0 0.0
      %2535 = vmatprep.subr.mxu0 0.0
      %2536 = vmatpush1.msra.mxu0 0.0
      %2537 = vmatprep.subr.mxu0 0.0
      %2538 = vmatpush1.msra.mxu0 0.0
      %2539 = vmatprep.subr.mxu0 0.0
      %2540 = vmatpush1.msra.mxu0 0.0
      %2541 = vmatprep.subr.mxu0 0.0
      %2542 = vmatpush1.msra.mxu0 0.0
      %2543 = vmatprep.subr.mxu0 0.0
      %2544 = vmatpush1.msra.mxu0 0.0
      %2545 = vmatprep.subr.mxu0 0.0
      %2546 = vmatpush1.msra.mxu0 0.0
      %2547 = vmatprep.subr.mxu0 0.0
      %2548 = vmatpush1.msra.mxu0 0.0
      %2549 = vmatprep.subr.mxu0 0.0
      %2550 = vmatpush1.msra.mxu0 0.0
      %2551 = vmatprep.subr.mxu0 0.0
      %2552 = vmatpush1.msra.mxu0 0.0
      %2553 = vmatprep.subr.mxu0 0.0
      %2554 = vmatpush1.msra.mxu0 0.0
      %2555 = vmatprep.subr.mxu0 0.0
      %2556 = vmatpush1.msra.mxu0 0.0
      %2557 = vmatprep.subr.mxu0 0.0
      %2558 = vmatpush1.msra.mxu0 0.0
      %2559 = vmatprep.subr.mxu0 0.0
      %2560 = vmatpush1.msra.mxu0 0.0
      %2561 = vmatprep.subr.mxu0 0.0
      %2562 = vmatpush1.msra.mxu0 0.0
      %2563 = vmatprep.subr.mxu0 0.0
      %2564 = vmatpush1.msra.mxu0 0.0
      %2565 = vmatprep.subr.mxu0 0.0
      %2566 = vmatpush1.msra.mxu0 0.0
      %2567 = vmatprep.subr.mxu0 0.0
      %2568 = vmatpush1.msra.mxu0 0.0
      %2569 = vmatprep.mubr.f32.mxu0 0.0
      %v2570 = vand.u32 %v2115, 4294901760
      %2571 = vmatmul.mubr.f32.gmra.mrb[0].mxu0 %v2570
      %v2572 = vpop.f32.mrb[0].mxu0
      %v2573 = vadd.f32 %v2500, %v2572
      %v2574 = vpop.f32.mrb[0].mxu0
      %2575 = vdwg.mxu0
      %v2577 = vrot.slane %v2573, 4
      %vm2579 = vcmask 1043456
      %v2580 = vsel %vm2579, %v2105, %v2577
      %2582 = vset.pattern.permute.xlu0 0
      %2583 = vperm.xlu0 %2582, %v267
      %v2584 = vpop.permute.xlu0 %2583
      %2587 = vset.pattern.permute.xlu0 0
      %2588 = vperm.xlu0 %2587, %v268
      %v2589 = vpop.permute.xlu0 %2588
      %v2591 = vmul.f32 %v2580, %v2584
      %v2592 = vmul.f32 %v2105, %v2589
      %2593 = vset.pattern.permute.xlu0 1
      %2594 = vperm.xlu0 %2593, %v267
      %v2595 = vpop.permute.xlu0 %2594
      %2597 = vset.pattern.permute.xlu0 1
      %2598 = vperm.xlu0 %2597, %v268
      %v2599 = vpop.permute.xlu0 %2598
      %v2601 = vmul.f32 %v2580, %v2595
      %v2602 = vmul.f32 %v2105, %v2599
      %2605 = vrot.lane.b32.xlu0 %v2601, 127
      %v2606 = vpop.permute.xlu0 %2605
      %2607 = vrot.lane.b32.xlu0 %v2602, 127
      %v2608 = vpop.permute.xlu0 %2607
      %v2611 = vadd.f32 %v2591, %v2606
      %v2612 = vadd.f32 %v2592, %v2608
      %2613 = vset.pattern.permute.xlu0 2
      %2614 = vperm.xlu0 %2613, %v267
      %v2615 = vpop.permute.xlu0 %2614
      %2617 = vset.pattern.permute.xlu0 2
      %2618 = vperm.xlu0 %2617, %v268
      %v2619 = vpop.permute.xlu0 %2618
      %v2621 = vmul.f32 %v2580, %v2615
      %v2622 = vmul.f32 %v2105, %v2619
      %2625 = vrot.lane.b32.xlu0 %v2621, 126
      %v2626 = vpop.permute.xlu0 %2625
      %2627 = vrot.lane.b32.xlu0 %v2622, 126
      %v2628 = vpop.permute.xlu0 %2627
      %v2631 = vadd.f32 %v2611, %v2626
      %v2632 = vadd.f32 %v2612, %v2628
      %2633 = vset.pattern.permute.xlu0 3
      %2634 = vperm.xlu0 %2633, %v267
      %v2635 = vpop.permute.xlu0 %2634
      %2637 = vset.pattern.permute.xlu0 3
      %2638 = vperm.xlu0 %2637, %v268
      %v2639 = vpop.permute.xlu0 %2638
      %v2641 = vadd.f32 %v2631, %v2635
      %v2642 = vadd.f32 %v2632, %v2639
      %v2643 = vmax.f32 %v2641, 0.0
      %v2644 = vmax.f32 %v2642, 0.0
      %2646 = vset.pattern.permute.xlu0 12
      %2647 = vperm.xlu0 %2646, %v269
      %v2648 = vpop.permute.xlu0 %2647
      %v2650 = vlaneseq
      %v2651 = vshrl.u32 %v2650, 7
      %v2652 = vsub.s32 0, %v2651
      %v2653 = vrot.slane %v2648, %v2652
      %vm2654 = vcmask 97280
      %v2655 = vsel %vm2654, %v269, 0
      %v2658 = vsel %vm2579, %v2644, 0
      %2660 = vmatprep.subr.mxu0 0.0
      %v2661 = vand.u32 %v2643, 4294901760
      %2662 = vmatpush1.msra.mxu0 %v2661
      %2663 = vmatprep.subr.mxu0 0.0
      %v2664 = vand.u32 %v2658, 4294901760
      %2665 = vmatpush1.msra.mxu0 %v2664
      %2666 = vmatprep.subr.mxu0 0.0
      %2667 = vmatpush1.msra.mxu0 0.0
      %2668 = vmatprep.subr.mxu0 0.0
      %2669 = vmatpush1.msra.mxu0 0.0
      %2670 = vmatprep.subr.mxu0 0.0
      %2671 = vmatpush1.msra.mxu0 0.0
      %2672 = vmatprep.subr.mxu0 0.0
      %2673 = vmatpush1.msra.mxu0 0.0
      %2674 = vmatprep.subr.mxu0 0.0
      %2675 = vmatpush1.msra.mxu0 0.0
      %2676 = vmatprep.subr.mxu0 0.0
      %2677 = vmatpush1.msra.mxu0 0.0
      %2678 = vmatprep.subr.mxu0 0.0
      %2679 = vmatpush1.msra.mxu0 0.0
      %2680 = vmatprep.subr.mxu0 0.0
      %2681 = vmatpush1.msra.mxu0 0.0
      %2682 = vmatprep.subr.mxu0 0.0
      %2683 = vmatpush1.msra.mxu0 0.0
      %2684 = vmatprep.subr.mxu0 0.0
      %2685 = vmatpush1.msra.mxu0 0.0
      %2686 = vmatprep.subr.mxu0 0.0
      %2687 = vmatpush1.msra.mxu0 0.0
      %2688 = vmatprep.subr.mxu0 0.0
      %2689 = vmatpush1.msra.mxu0 0.0
      %2690 = vmatprep.subr.mxu0 0.0
      %2691 = vmatpush1.msra.mxu0 0.0
      %2692 = vmatprep.subr.mxu0 0.0
      %2693 = vmatpush1.msra.mxu0 0.0
      %2694 = vmatprep.subr.mxu0 0.0
      %2695 = vmatpush1.msra.mxu0 0.0
      %2696 = vmatprep.subr.mxu0 0.0
      %2697 = vmatpush1.msra.mxu0 0.0
      %2698 = vmatprep.subr.mxu0 0.0
      %2699 = vmatpush1.msra.mxu0 0.0
      %2700 = vmatprep.subr.mxu0 0.0
      %2701 = vmatpush1.msra.mxu0 0.0
      %2702 = vmatprep.subr.mxu0 0.0
      %2703 = vmatpush1.msra.mxu0 0.0
      %2704 = vmatprep.subr.mxu0 0.0
      %2705 = vmatpush1.msra.mxu0 0.0
      %2706 = vmatprep.subr.mxu0 0.0
      %2707 = vmatpush1.msra.mxu0 0.0
      %2708 = vmatprep.subr.mxu0 0.0
      %2709 = vmatpush1.msra.mxu0 0.0
      %2710 = vmatprep.subr.mxu0 0.0
      %2711 = vmatpush1.msra.mxu0 0.0
      %2712 = vmatprep.subr.mxu0 0.0
      %2713 = vmatpush1.msra.mxu0 0.0
      %2714 = vmatprep.subr.mxu0 0.0
      %2715 = vmatpush1.msra.mxu0 0.0
      %2716 = vmatprep.subr.mxu0 0.0
      %2717 = vmatpush1.msra.mxu0 0.0
      %2718 = vmatprep.subr.mxu0 0.0
      %2719 = vmatpush1.msra.mxu0 0.0
      %2720 = vmatprep.subr.mxu0 0.0
      %2721 = vmatpush1.msra.mxu0 0.0
      %2722 = vmatprep.subr.mxu0 0.0
      %2723 = vmatpush1.msra.mxu0 0.0
      %2724 = vmatprep.subr.mxu0 0.0
      %2725 = vmatpush1.msra.mxu0 0.0
      %2726 = vmatprep.mubr.f32.mxu0 0.0
      %v2727 = vand.u32 %v2655, 4294901760
      %v2728 = vsub.f32 %v2655, %v2727
      %v2729 = vand.u32 %v2728, 4294901760
      %v2730 = vsub.f32 %v2728, %v2729
      %v2731 = vand.u32 %v2730, 4294901760
      %2732 = vmatmul.mubr.f32.gmra.mrb[0].mxu0 %v2731
      %v2733 = vpop.f32.mrb[0].mxu0
      %v2734 = vadd.f32 %v2653, %v2733
      %v2735 = vpop.f32.mrb[0].mxu0
      %2736 = vdwg.mxu0
      %2737 = vmatprep.subr.mxu0 0.0
      %v2738 = vand.u32 %v2643, 4294901760
      %v2739 = vsub.f32 %v2643, %v2738
      %v2740 = vand.u32 %v2739, 4294901760
      %v2741 = vsub.f32 %v2739, %v2740
      %v2742 = vand.u32 %v2741, 4294901760
      %2743 = vmatpush1.msra.mxu0 %v2742
      %2744 = vmatprep.subr.mxu0 0.0
      %v2745 = vand.u32 %v2658, 4294901760
      %v2746 = vsub.f32 %v2658, %v2745
      %v2747 = vand.u32 %v2746, 4294901760
      %v2748 = vsub.f32 %v2746, %v2747
      %v2749 = vand.u32 %v2748, 4294901760
      %2750 = vmatpush1.msra.mxu0 %v2749
      %2751 = vmatprep.subr.mxu0 0.0
      %2752 = vmatpush1.msra.mxu0 0.0
      %2753 = vmatprep.subr.mxu0 0.0
      %2754 = vmatpush1.msra.mxu0 0.0
      %2755 = vmatprep.subr.mxu0 0.0
      %2756 = vmatpush1.msra.mxu0 0.0
      %2757 = vmatprep.subr.mxu0 0.0
      %2758 = vmatpush1.msra.mxu0 0.0
      %2759 = vmatprep.subr.mxu0 0.0
      %2760 = vmatpush1.msra.mxu0 0.0
      %2761 = vmatprep.subr.mxu0 0.0
      %2762 = vmatpush1.msra.mxu0 0.0
      %2763 = vmatprep.subr.mxu0 0.0
      %2764 = vmatpush1.msra.mxu0 0.0
      %2765 = vmatprep.subr.mxu0 0.0
      %2766 = vmatpush1.msra.mxu0 0.0
      %2767 = vmatprep.subr.mxu0 0.0
      %2768 = vmatpush1.msra.mxu0 0.0
      %2769 = vmatprep.subr.mxu0 0.0
      %2770 = vmatpush1.msra.mxu0 0.0
      %2771 = vmatprep.subr.mxu0 0.0
      %2772 = vmatpush1.msra.mxu0 0.0
      %2773 = vmatprep.subr.mxu0 0.0
      %2774 = vmatpush1.msra.mxu0 0.0
      %2775 = vmatprep.subr.mxu0 0.0
      %2776 = vmatpush1.msra.mxu0 0.0
      %2777 = vmatprep.subr.mxu0 0.0
      %2778 = vmatpush1.msra.mxu0 0.0
      %2779 = vmatprep.subr.mxu0 0.0
      %2780 = vmatpush1.msra.mxu0 0.0
      %2781 = vmatprep.subr.mxu0 0.0
      %2782 = vmatpush1.msra.mxu0 0.0
      %2783 = vmatprep.subr.mxu0 0.0
      %2784 = vmatpush1.msra.mxu0 0.0
      %2785 = vmatprep.subr.mxu0 0.0
      %2786 = vmatpush1.msra.mxu0 0.0
      %2787 = vmatprep.subr.mxu0 0.0
      %2788 = vmatpush1.msra.mxu0 0.0
      %2789 = vmatprep.subr.mxu0 0.0
      %2790 = vmatpush1.msra.mxu0 0.0
      %2791 = vmatprep.subr.mxu0 0.0
      %2792 = vmatpush1.msra.mxu0 0.0
      %2793 = vmatprep.subr.mxu0 0.0
      %2794 = vmatpush1.msra.mxu0 0.0
      %2795 = vmatprep.subr.mxu0 0.0
      %2796 = vmatpush1.msra.mxu0 0.0
      %2797 = vmatprep.subr.mxu0 0.0
      %2798 = vmatpush1.msra.mxu0 0.0
      %2799 = vmatprep.subr.mxu0 0.0
      %2800 = vmatpush1.msra.mxu0 0.0
      %2801 = vmatprep.subr.mxu0 0.0
      %2802 = vmatpush1.msra.mxu0 0.0
      %2803 = vmatprep.subr.mxu0 0.0
      %2804 = vmatpush1.msra.mxu0 0.0
      %2805 = vmatprep.subr.mxu0 0.0
      %2806 = vmatpush1.msra.mxu0 0.0
      %2807 = vmatprep.subr.mxu0 0.0
      %2808 = vmatpush1.msra.mxu0 0.0
      %2809 = vmatprep.subr.mxu0 0.0
      %2810 = vmatpush1.msra.mxu0 0.0
      %2811 = vmatprep.mubr.f32.mxu0 0.0
      %v2812 = vand.u32 %v2655, 4294901760
      %2813 = vmatmul.mubr.f32.gmra.mrb[0].mxu0 %v2812
      %v2814 = vpop.f32.mrb[0].mxu0
      %v2815 = vadd.f32 %v2734, %v2814
      %v2816 = vpop.f32.mrb[0].mxu0
      %2817 = vdwg.mxu0
      %2818 = vmatprep.subr.mxu0 0.0
      %v2819 = vand.u32 %v2643, 4294901760
      %v2820 = vsub.f32 %v2643, %v2819
      %2821 = vmatpush1.msra.mxu0 %v2820
      %2822 = vmatprep.subr.mxu0 0.0
      %v2823 = vand.u32 %v2658, 4294901760
      %v2824 = vsub.f32 %v2658, %v2823
      %2825 = vmatpush1.msra.mxu0 %v2824
      %2826 = vmatprep.subr.mxu0 0.0
      %2827 = vmatpush1.msra.mxu0 0.0
      %2828 = vmatprep.subr.mxu0 0.0
      %2829 = vmatpush1.msra.mxu0 0.0
      %2830 = vmatprep.subr.mxu0 0.0
      %2831 = vmatpush1.msra.mxu0 0.0
      %2832 = vmatprep.subr.mxu0 0.0
      %2833 = vmatpush1.msra.mxu0 0.0
      %2834 = vmatprep.subr.mxu0 0.0
      %2835 = vmatpush1.msra.mxu0 0.0
      %2836 = vmatprep.subr.mxu0 0.0
      %2837 = vmatpush1.msra.mxu0 0.0
      %2838 = vmatprep.subr.mxu0 0.0
      %2839 = vmatpush1.msra.mxu0 0.0
      %2840 = vmatprep.subr.mxu0 0.0
      %2841 = vmatpush1.msra.mxu0 0.0
      %2842 = vmatprep.subr.mxu0 0.0
      %2843 = vmatpush1.msra.mxu0 0.0
      %2844 = vmatprep.subr.mxu0 0.0
      %2845 = vmatpush1.msra.mxu0 0.0
      %2846 = vmatprep.subr.mxu0 0.0
      %2847 = vmatpush1.msra.mxu0 0.0
      %2848 = vmatprep.subr.mxu0 0.0
      %2849 = vmatpush1.msra.mxu0 0.0
      %2850 = vmatprep.subr.mxu0 0.0
      %2851 = vmatpush1.msra.mxu0 0.0
      %2852 = vmatprep.subr.mxu0 0.0
      %2853 = vmatpush1.msra.mxu0 0.0
      %2854 = vmatprep.subr.mxu0 0.0
      %2855 = vmatpush1.msra.mxu0 0.0
      %2856 = vmatprep.subr.mxu0 0.0
      %2857 = vmatpush1.msra.mxu0 0.0
      %2858 = vmatprep.subr.mxu0 0.0
      %2859 = vmatpush1.msra.mxu0 0.0
      %2860 = vmatprep.subr.mxu0 0.0
      %2861 = vmatpush1.msra.mxu0 0.0
      %2862 = vmatprep.subr.mxu0 0.0
      %2863 = vmatpush1.msra.mxu0 0.0
      %2864 = vmatprep.subr.mxu0 0.0
      %2865 = vmatpush1.msra.mxu0 0.0
      %2866 = vmatprep.subr.mxu0 0.0
      %2867 = vmatpush1.msra.mxu0 0.0
      %2868 = vmatprep.subr.mxu0 0.0
      %2869 = vmatpush1.msra.mxu0 0.0
      %2870 = vmatprep.subr.mxu0 0.0
      %2871 = vmatpush1.msra.mxu0 0.0
      %2872 = vmatprep.subr.mxu0 0.0
      %2873 = vmatpush1.msra.mxu0 0.0
      %2874 = vmatprep.subr.mxu0 0.0
      %2875 = vmatpush1.msra.mxu0 0.0
      %2876 = vmatprep.subr.mxu0 0.0
      %2877 = vmatpush1.msra.mxu0 0.0
      %2878 = vmatprep.subr.mxu0 0.0
      %2879 = vmatpush1.msra.mxu0 0.0
      %2880 = vmatprep.subr.mxu0 0.0
      %2881 = vmatpush1.msra.mxu0 0.0
      %2882 = vmatprep.subr.mxu0 0.0
      %2883 = vmatpush1.msra.mxu0 0.0
      %2884 = vmatprep.subr.mxu0 0.0
      %2885 = vmatpush1.msra.mxu0 0.0
      %2886 = vmatprep.mubr.f32.mxu0 0.0
      %v2887 = vand.u32 %v2655, 4294901760
      %v2888 = vsub.f32 %v2655, %v2887
      %2889 = vmatmul.mubr.f32.gmra.mrb[0].mxu0 %v2888
      %v2890 = vpop.f32.mrb[0].mxu0
      %v2891 = vadd.f32 %v2815, %v2890
      %v2892 = vpop.f32.mrb[0].mxu0
      %2893 = vdwg.mxu0
      %2894 = vmatprep.subr.mxu0 0.0
      %v2895 = vand.u32 %v2643, 4294901760
      %2896 = vmatpush1.msra.mxu0 %v2895
      %2897 = vmatprep.subr.mxu0 0.0
      %v2898 = vand.u32 %v2658, 4294901760
      %2899 = vmatpush1.msra.mxu0 %v2898
      %2900 = vmatprep.subr.mxu0 0.0
      %2901 = vmatpush1.msra.mxu0 0.0
      %2902 = vmatprep.subr.mxu0 0.0
      %2903 = vmatpush1.msra.mxu0 0.0
      %2904 = vmatprep.subr.mxu0 0.0
      %2905 = vmatpush1.msra.mxu0 0.0
      %2906 = vmatprep.subr.mxu0 0.0
      %2907 = vmatpush1.msra.mxu0 0.0
      %2908 = vmatprep.subr.mxu0 0.0
      %2909 = vmatpush1.msra.mxu0 0.0
      %2910 = vmatprep.subr.mxu0 0.0
      %2911 = vmatpush1.msra.mxu0 0.0
      %2912 = vmatprep.subr.mxu0 0.0
      %2913 = vmatpush1.msra.mxu0 0.0
      %2914 = vmatprep.subr.mxu0 0.0
      %2915 = vmatpush1.msra.mxu0 0.0
      %2916 = vmatprep.subr.mxu0 0.0
      %2917 = vmatpush1.msra.mxu0 0.0
      %2918 = vmatprep.subr.mxu0 0.0
      %2919 = vmatpush1.msra.mxu0 0.0
      %2920 = vmatprep.subr.mxu0 0.0
      %2921 = vmatpush1.msra.mxu0 0.0
      %2922 = vmatprep.subr.mxu0 0.0
      %2923 = vmatpush1.msra.mxu0 0.0
      %2924 = vmatprep.subr.mxu0 0.0
      %2925 = vmatpush1.msra.mxu0 0.0
      %2926 = vmatprep.subr.mxu0 0.0
      %2927 = vmatpush1.msra.mxu0 0.0
      %2928 = vmatprep.subr.mxu0 0.0
      %2929 = vmatpush1.msra.mxu0 0.0
      %2930 = vmatprep.subr.mxu0 0.0
      %2931 = vmatpush1.msra.mxu0 0.0
      %2932 = vmatprep.subr.mxu0 0.0
      %2933 = vmatpush1.msra.mxu0 0.0
      %2934 = vmatprep.subr.mxu0 0.0
      %2935 = vmatpush1.msra.mxu0 0.0
      %2936 = vmatprep.subr.mxu0 0.0
      %2937 = vmatpush1.msra.mxu0 0.0
      %2938 = vmatprep.subr.mxu0 0.0
      %2939 = vmatpush1.msra.mxu0 0.0
      %2940 = vmatprep.subr.mxu0 0.0
      %2941 = vmatpush1.msra.mxu0 0.0
      %2942 = vmatprep.subr.mxu0 0.0
      %2943 = vmatpush1.msra.mxu0 0.0
      %2944 = vmatprep.subr.mxu0 0.0
      %2945 = vmatpush1.msra.mxu0 0.0
      %2946 = vmatprep.subr.mxu0 0.0
      %2947 = vmatpush1.msra.mxu0 0.0
      %2948 = vmatprep.subr.mxu0 0.0
      %2949 = vmatpush1.msra.mxu0 0.0
      %2950 = vmatprep.subr.mxu0 0.0
      %2951 = vmatpush1.msra.mxu0 0.0
      %2952 = vmatprep.subr.mxu0 0.0
      %2953 = vmatpush1.msra.mxu0 0.0
      %2954 = vmatprep.subr.mxu0 0.0
      %2955 = vmatpush1.msra.mxu0 0.0
      %2956 = vmatprep.subr.mxu0 0.0
      %2957 = vmatpush1.msra.mxu0 0.0
      %2958 = vmatprep.subr.mxu0 0.0
      %2959 = vmatpush1.msra.mxu0 0.0
      %2960 = vmatprep.mubr.f32.mxu0 0.0
      %v2961 = vand.u32 %v2655, 4294901760
      %v2962 = vsub.f32 %v2655, %v2961
      %v2963 = vand.u32 %v2962, 4294901760
      %2964 = vmatmul.mubr.f32.gmra.mrb[0].mxu0 %v2963
      %v2965 = vpop.f32.mrb[0].mxu0
      %v2966 = vadd.f32 %v2891, %v2965
      %v2967 = vpop.f32.mrb[0].mxu0
      %2968 = vdwg.mxu0
      %2969 = vmatprep.subr.mxu0 0.0
      %v2970 = vand.u32 %v2643, 4294901760
      %v2971 = vsub.f32 %v2643, %v2970
      %v2972 = vand.u32 %v2971, 4294901760
      %2973 = vmatpush1.msra.mxu0 %v2972
      %2974 = vmatprep.subr.mxu0 0.0
      %v2975 = vand.u32 %v2658, 4294901760
      %v2976 = vsub.f32 %v2658, %v2975
      %v2977 = vand.u32 %v2976, 4294901760
      %2978 = vmatpush1.msra.mxu0 %v2977
      %2979 = vmatprep.subr.mxu0 0.0
      %2980 = vmatpush1.msra.mxu0 0.0
      %2981 = vmatprep.subr.mxu0 0.0
      %2982 = vmatpush1.msra.mxu0 0.0
      %2983 = vmatprep.subr.mxu0 0.0
      %2984 = vmatpush1.msra.mxu0 0.0
      %2985 = vmatprep.subr.mxu0 0.0
      %2986 = vmatpush1.msra.mxu0 0.0
      %2987 = vmatprep.subr.mxu0 0.0
      %2988 = vmatpush1.msra.mxu0 0.0
      %2989 = vmatprep.subr.mxu0 0.0
      %2990 = vmatpush1.msra.mxu0 0.0
      %2991 = vmatprep.subr.mxu0 0.0
      %2992 = vmatpush1.msra.mxu0 0.0
      %2993 = vmatprep.subr.mxu0 0.0
      %2994 = vmatpush1.msra.mxu0 0.0
      %2995 = vmatprep.subr.mxu0 0.0
      %2996 = vmatpush1.msra.mxu0 0.0
      %2997 = vmatprep.subr.mxu0 0.0
      %2998 = vmatpush1.msra.mxu0 0.0
      %2999 = vmatprep.subr.mxu0 0.0
      %3000 = vmatpush1.msra.mxu0 0.0
      %3001 = vmatprep.subr.mxu0 0.0
      %3002 = vmatpush1.msra.mxu0 0.0
      %3003 = vmatprep.subr.mxu0 0.0
      %3004 = vmatpush1.msra.mxu0 0.0
      %3005 = vmatprep.subr.mxu0 0.0
      %3006 = vmatpush1.msra.mxu0 0.0
      %3007 = vmatprep.subr.mxu0 0.0
      %3008 = vmatpush1.msra.mxu0 0.0
      %3009 = vmatprep.subr.mxu0 0.0
      %3010 = vmatpush1.msra.mxu0 0.0
      %3011 = vmatprep.subr.mxu0 0.0
      %3012 = vmatpush1.msra.mxu0 0.0
      %3013 = vmatprep.subr.mxu0 0.0
      %3014 = vmatpush1.msra.mxu0 0.0
      %3015 = vmatprep.subr.mxu0 0.0
      %3016 = vmatpush1.msra.mxu0 0.0
      %3017 = vmatprep.subr.mxu0 0.0
      %3018 = vmatpush1.msra.mxu0 0.0
      %3019 = vmatprep.subr.mxu0 0.0
      %3020 = vmatpush1.msra.mxu0 0.0
      %3021 = vmatprep.subr.mxu0 0.0
      %3022 = vmatpush1.msra.mxu0 0.0
      %3023 = vmatprep.subr.mxu0 0.0
      %3024 = vmatpush1.msra.mxu0 0.0
      %3025 = vmatprep.subr.mxu0 0.0
      %3026 = vmatpush1.msra.mxu0 0.0
      %3027 = vmatprep.subr.mxu0 0.0
      %3028 = vmatpush1.msra.mxu0 0.0
      %3029 = vmatprep.subr.mxu0 0.0
      %3030 = vmatpush1.msra.mxu0 0.0
      %3031 = vmatprep.subr.mxu0 0.0
      %3032 = vmatpush1.msra.mxu0 0.0
      %3033 = vmatprep.subr.mxu0 0.0
      %3034 = vmatpush1.msra.mxu0 0.0
      %3035 = vmatprep.subr.mxu0 0.0
      %3036 = vmatpush1.msra.mxu0 0.0
      %3037 = vmatprep.subr.mxu0 0.0
      %3038 = vmatpush1.msra.mxu0 0.0
      %3039 = vmatprep.mubr.f32.mxu0 0.0
      %v3040 = vand.u32 %v2655, 4294901760
      %3041 = vmatmul.mubr.f32.gmra.mrb[0].mxu0 %v3040
      %v3042 = vpop.f32.mrb[0].mxu0
      %v3043 = vadd.f32 %v2966, %v3042
      %v3044 = vpop.f32.mrb[0].mxu0
      %3045 = vdwg.mxu0
      %3046 = vmatprep.subr.mxu0 0.0
      %v3047 = vand.u32 %v2643, 4294901760
      %3048 = vmatpush1.msra.mxu0 %v3047
      %3049 = vmatprep.subr.mxu0 0.0
      %v3050 = vand.u32 %v2658, 4294901760
      %3051 = vmatpush1.msra.mxu0 %v3050
      %3052 = vmatprep.subr.mxu0 0.0
      %3053 = vmatpush1.msra.mxu0 0.0
      %3054 = vmatprep.subr.mxu0 0.0
      %3055 = vmatpush1.msra.mxu0 0.0
      %3056 = vmatprep.subr.mxu0 0.0
      %3057 = vmatpush1.msra.mxu0 0.0
      %3058 = vmatprep.subr.mxu0 0.0
      %3059 = vmatpush1.msra.mxu0 0.0
      %3060 = vmatprep.subr.mxu0 0.0
      %3061 = vmatpush1.msra.mxu0 0.0
      %3062 = vmatprep.subr.mxu0 0.0
      %3063 = vmatpush1.msra.mxu0 0.0
      %3064 = vmatprep.subr.mxu0 0.0
      %3065 = vmatpush1.msra.mxu0 0.0
      %3066 = vmatprep.subr.mxu0 0.0
      %3067 = vmatpush1.msra.mxu0 0.0
      %3068 = vmatprep.subr.mxu0 0.0
      %3069 = vmatpush1.msra.mxu0 0.0
      %3070 = vmatprep.subr.mxu0 0.0
      %3071 = vmatpush1.msra.mxu0 0.0
      %3072 = vmatprep.subr.mxu0 0.0
      %3073 = vmatpush1.msra.mxu0 0.0
      %3074 = vmatprep.subr.mxu0 0.0
      %3075 = vmatpush1.msra.mxu0 0.0
      %3076 = vmatprep.subr.mxu0 0.0
      %3077 = vmatpush1.msra.mxu0 0.0
      %3078 = vmatprep.subr.mxu0 0.0
      %3079 = vmatpush1.msra.mxu0 0.0
      %3080 = vmatprep.subr.mxu0 0.0
      %3081 = vmatpush1.msra.mxu0 0.0
      %3082 = vmatprep.subr.mxu0 0.0
      %3083 = vmatpush1.msra.mxu0 0.0
      %3084 = vmatprep.subr.mxu0 0.0
      %3085 = vmatpush1.msra.mxu0 0.0
      %3086 = vmatprep.subr.mxu0 0.0
      %3087 = vmatpush1.msra.mxu0 0.0
      %3088 = vmatprep.subr.mxu0 0.0
      %3089 = vmatpush1.msra.mxu0 0.0
      %3090 = vmatprep.subr.mxu0 0.0
      %3091 = vmatpush1.msra.mxu0 0.0
      %3092 = vmatprep.subr.mxu0 0.0
      %3093 = vmatpush1.msra.mxu0 0.0
      %3094 = vmatprep.subr.mxu0 0.0
      %3095 = vmatpush1.msra.mxu0 0.0
      %3096 = vmatprep.subr.mxu0 0.0
      %3097 = vmatpush1.msra.mxu0 0.0
      %3098 = vmatprep.subr.mxu0 0.0
      %3099 = vmatpush1.msra.mxu0 0.0
      %3100 = vmatprep.subr.mxu0 0.0
      %3101 = vmatpush1.msra.mxu0 0.0
      %3102 = vmatprep.subr.mxu0 0.0
      %3103 = vmatpush1.msra.mxu0 0.0
      %3104 = vmatprep.subr.mxu0 0.0
      %3105 = vmatpush1.msra.mxu0 0.0
      %3106 = vmatprep.subr.mxu0 0.0
      %3107 = vmatpush1.msra.mxu0 0.0
      %3108 = vmatprep.subr.mxu0 0.0
      %3109 = vmatpush1.msra.mxu0 0.0
      %3110 = vmatprep.subr.mxu0 0.0
      %3111 = vmatpush1.msra.mxu0 0.0
      %3112 = vmatprep.mubr.f32.mxu0 0.0
      %v3113 = vand.u32 %v2655, 4294901760
      %3114 = vmatmul.mubr.f32.gmra.mrb[0].mxu0 %v3113
      %v3115 = vpop.f32.mrb[0].mxu0
      %v3116 = vadd.f32 %v3043, %v3115
      %v3117 = vpop.f32.mrb[0].mxu0
      %3118 = vdwg.mxu0
      %v3119 = vmax.f32 %v3116, 0.0
      %3120 = vset.pattern.permute.xlu0 5
      %3121 = vperm.xlu0 %3120, %v267
      %v3122 = vpop.permute.xlu0 %3121
      %3124 = vset.pattern.permute.xlu0 5
      %3125 = vperm.xlu0 %3124, %v268
      %v3126 = vpop.permute.xlu0 %3125
      %3128 = vrot.lane.b32.xlu0 %v267, 124
      %v3129 = vpop.permute.xlu0 %3128
      %3130 = vrot.lane.b32.xlu0 %v268, 124
      %v3131 = vpop.permute.xlu0 %3130
      %vm3132 = vcmask 7168
      %v3133 = vsel %vm3132, %v3129, 0
      %v3135 = vsel %vm3132, %v3131, 0
      %vm3137 = vcmask 1040384
      %v3139 = vsel %vm3137, %v3119, 0
      %3141 = vmatprep.subr.mxu0 0.0
      %v3142 = vand.u32 %v3139, 4294901760
      %3143 = vmatpush1.msra.mxu0 %v3142
      %3144 = vmatprep.subr.mxu0 0.0
      %3145 = vmatpush1.msra.mxu0 0.0
      %3146 = vmatprep.subr.mxu0 0.0
      %3147 = vmatpush1.msra.mxu0 0.0
      %3148 = vmatprep.subr.mxu0 0.0
      %3149 = vmatpush1.msra.mxu0 0.0
      %3150 = vmatprep.subr.mxu0 0.0
      %3151 = vmatpush1.msra.mxu0 0.0
      %3152 = vmatprep.subr.mxu0 0.0
      %3153 = vmatpush1.msra.mxu0 0.0
      %3154 = vmatprep.subr.mxu0 0.0
      %3155 = vmatpush1.msra.mxu0 0.0
      %3156 = vmatprep.subr.mxu0 0.0
      %3157 = vmatpush1.msra.mxu0 0.0
      %3158 = vmatprep.subr.mxu0 0.0
      %3159 = vmatpush1.msra.mxu0 0.0
      %3160 = vmatprep.subr.mxu0 0.0
      %3161 = vmatpush1.msra.mxu0 0.0
      %3162 = vmatprep.subr.mxu0 0.0
      %3163 = vmatpush1.msra.mxu0 0.0
      %3164 = vmatprep.subr.mxu0 0.0
      %3165 = vmatpush1.msra.mxu0 0.0
      %3166 = vmatprep.subr.mxu0 0.0
      %3167 = vmatpush1.msra.mxu0 0.0
      %3168 = vmatprep.subr.mxu0 0.0
      %3169 = vmatpush1.msra.mxu0 0.0
      %3170 = vmatprep.subr.mxu0 0.0
      %3171 = vmatpush1.msra.mxu0 0.0
      %3172 = vmatprep.subr.mxu0 0.0
      %3173 = vmatpush1.msra.mxu0 0.0
      %3174 = vmatprep.subr.mxu0 0.0
      %3175 = vmatpush1.msra.mxu0 0.0
      %3176 = vmatprep.subr.mxu0 0.0
      %3177 = vmatpush1.msra.mxu0 0.0
      %3178 = vmatprep.subr.mxu0 0.0
      %3179 = vmatpush1.msra.mxu0 0.0
      %3180 = vmatprep.subr.mxu0 0.0
      %3181 = vmatpush1.msra.mxu0 0.0
      %3182 = vmatprep.subr.mxu0 0.0
      %3183 = vmatpush1.msra.mxu0 0.0
      %3184 = vmatprep.subr.mxu0 0.0
      %3185 = vmatpush1.msra.mxu0 0.0
      %3186 = vmatprep.subr.mxu0 0.0
      %3187 = vmatpush1.msra.mxu0 0.0
      %3188 = vmatprep.subr.mxu0 0.0
      %3189 = vmatpush1.msra.mxu0 0.0
      %3190 = vmatprep.subr.mxu0 0.0
      %3191 = vmatpush1.msra.mxu0 0.0
      %3192 = vmatprep.subr.mxu0 0.0
      %3193 = vmatpush1.msra.mxu0 0.0
      %3194 = vmatprep.subr.mxu0 0.0
      %3195 = vmatpush1.msra.mxu0 0.0
      %3196 = vmatprep.subr.mxu0 0.0
      %3197 = vmatpush1.msra.mxu0 0.0
      %3198 = vmatprep.subr.mxu0 0.0
      %3199 = vmatpush1.msra.mxu0 0.0
      %3200 = vmatprep.subr.mxu0 0.0
      %3201 = vmatpush1.msra.mxu0 0.0
      %3202 = vmatprep.subr.mxu0 0.0
      %3203 = vmatpush1.msra.mxu0 0.0
      %3204 = vmatprep.subr.mxu0 0.0
      %3205 = vmatpush1.msra.mxu0 0.0
      %3206 = vmatprep.mubr.f32.mxu0 0.0
      %v3207 = vand.u32 %v3133, 4294901760
      %v3208 = vsub.f32 %v3133, %v3207
      %v3209 = vand.u32 %v3208, 4294901760
      %v3210 = vsub.f32 %v3208, %v3209
      %v3211 = vand.u32 %v3210, 4294901760
      %3212 = vmatmul.mubr.f32.gmra.mrb[0].mxu0 %v3211
      %v3213 = vpop.f32.mrb[0].mxu0
      %v3214 = vadd.f32 %v3122, %v3213
      %v3215 = vpop.f32.mrb[0].mxu0
      %3216 = vmatprep.mubr.f32.mxu0 0.0
      %v3217 = vand.u32 %v3135, 4294901760
      %v3218 = vsub.f32 %v3135, %v3217
      %v3219 = vand.u32 %v3218, 4294901760
      %v3220 = vsub.f32 %v3218, %v3219
      %v3221 = vand.u32 %v3220, 4294901760
      %3222 = vmatmul.mubr.f32.gmra.mrb[0].mxu0 %v3221
      %v3223 = vpop.f32.mrb[0].mxu0
      %v3224 = vadd.f32 %v3126, %v3223
      %v3225 = vpop.f32.mrb[0].mxu0
      %3226 = vdwg.mxu0
      %3227 = vmatprep.subr.mxu0 0.0
      %v3228 = vand.u32 %v3139, 4294901760
      %v3229 = vsub.f32 %v3139, %v3228
      %v3230 = vand.u32 %v3229, 4294901760
      %v3231 = vsub.f32 %v3229, %v3230
      %v3232 = vand.u32 %v3231, 4294901760
      %3233 = vmatpush1.msra.mxu0 %v3232
      %3234 = vmatprep.subr.mxu0 0.0
      %3235 = vmatpush1.msra.mxu0 0.0
      %3236 = vmatprep.subr.mxu0 0.0
      %3237 = vmatpush1.msra.mxu0 0.0
      %3238 = vmatprep.subr.mxu0 0.0
      %3239 = vmatpush1.msra.mxu0 0.0
      %3240 = vmatprep.subr.mxu0 0.0
      %3241 = vmatpush1.msra.mxu0 0.0
      %3242 = vmatprep.subr.mxu0 0.0
      %3243 = vmatpush1.msra.mxu0 0.0
      %3244 = vmatprep.subr.mxu0 0.0
      %3245 = vmatpush1.msra.mxu0 0.0
      %3246 = vmatprep.subr.mxu0 0.0
      %3247 = vmatpush1.msra.mxu0 0.0
      %3248 = vmatprep.subr.mxu0 0.0
      %3249 = vmatpush1.msra.mxu0 0.0
      %3250 = vmatprep.subr.mxu0 0.0
      %3251 = vmatpush1.msra.mxu0 0.0
      %3252 = vmatprep.subr.mxu0 0.0
      %3253 = vmatpush1.msra.mxu0 0.0
      %3254 = vmatprep.subr.mxu0 0.0
      %3255 = vmatpush1.msra.mxu0 0.0
      %3256 = vmatprep.subr.mxu0 0.0
      %3257 = vmatpush1.msra.mxu0 0.0
      %3258 = vmatprep.subr.mxu0 0.0
      %3259 = vmatpush1.msra.mxu0 0.0
      %3260 = vmatprep.subr.mxu0 0.0
      %3261 = vmatpush1.msra.mxu0 0.0
      %3262 = vmatprep.subr.mxu0 0.0
      %3263 = vmatpush1.msra.mxu0 0.0
      %3264 = vmatprep.subr.mxu0 0.0
      %3265 = vmatpush1.msra.mxu0 0.0
      %3266 = vmatprep.subr.mxu0 0.0
      %3267 = vmatpush1.msra.mxu0 0.0
      %3268 = vmatprep.subr.mxu0 0.0
      %3269 = vmatpush1.msra.mxu0 0.0
      %3270 = vmatprep.subr.mxu0 0.0
      %3271 = vmatpush1.msra.mxu0 0.0
      %3272 = vmatprep.subr.mxu0 0.0
      %3273 = vmatpush1.msra.mxu0 0.0
      %3274 = vmatprep.subr.mxu0 0.0
      %3275 = vmatpush1.msra.mxu0 0.0
      %3276 = vmatprep.subr.mxu0 0.0
      %3277 = vmatpush1.msra.mxu0 0.0
      %3278 = vmatprep.subr.mxu0 0.0
      %3279 = vmatpush1.msra.mxu0 0.0
      %3280 = vmatprep.subr.mxu0 0.0
      %3281 = vmatpush1.msra.mxu0 0.0
      %3282 = vmatprep.subr.mxu0 0.0
      %3283 = vmatpush1.msra.mxu0 0.0
      %3284 = vmatprep.subr.mxu0 0.0
      %3285 = vmatpush1.msra.mxu0 0.0
      %3286 = vmatprep.subr.mxu0 0.0
      %3287 = vmatpush1.msra.mxu0 0.0
      %3288 = vmatprep.subr.mxu0 0.0
      %3289 = vmatpush1.msra.mxu0 0.0
      %3290 = vmatprep.subr.mxu0 0.0
      %3291 = vmatpush1.msra.mxu0 0.0
      %3292 = vmatprep.subr.mxu0 0.0
      %3293 = vmatpush1.msra.mxu0 0.0
      %3294 = vmatprep.subr.mxu0 0.0
      %3295 = vmatpush1.msra.mxu0 0.0
      %3296 = vmatprep.mubr.f32.mxu0 0.0
      %v3297 = vand.u32 %v3133, 4294901760
      %3298 = vmatmul.mubr.f32.gmra.mrb[0].mxu0 %v3297
      %v3299 = vpop.f32.mrb[0].mxu0
      %v3300 = vadd.f32 %v3214, %v3299
      %v3301 = vpop.f32.mrb[0].mxu0
      %3302 = vmatprep.mubr.f32.mxu0 0.0
      %v3303 = vand.u32 %v3135, 4294901760
      %3304 = vmatmul.mubr.f32.gmra.mrb[0].mxu0 %v3303
      %v3305 = vpop.f32.mrb[0].mxu0
      %v3306 = vadd.f32 %v3224, %v3305
      %v3307 = vpop.f32.mrb[0].mxu0
      %3308 = vdwg.mxu0
      %3309 = vmatprep.subr.mxu0 0.0
      %v3310 = vand.u32 %v3139, 4294901760
      %v3311 = vsub.f32 %v3139, %v3310
      %3312 = vmatpush1.msra.mxu0 %v3311
      %3313 = vmatprep.subr.mxu0 0.0
      %3314 = vmatpush1.msra.mxu0 0.0
      %3315 = vmatprep.subr.mxu0 0.0
      %3316 = vmatpush1.msra.mxu0 0.0
      %3317 = vmatprep.subr.mxu0 0.0
      %3318 = vmatpush1.msra.mxu0 0.0
      %3319 = vmatprep.subr.mxu0 0.0
      %3320 = vmatpush1.msra.mxu0 0.0
      %3321 = vmatprep.subr.mxu0 0.0
      %3322 = vmatpush1.msra.mxu0 0.0
      %3323 = vmatprep.subr.mxu0 0.0
      %3324 = vmatpush1.msra.mxu0 0.0
      %3325 = vmatprep.subr.mxu0 0.0
      %3326 = vmatpush1.msra.mxu0 0.0
      %3327 = vmatprep.subr.mxu0 0.0
      %3328 = vmatpush1.msra.mxu0 0.0
      %3329 = vmatprep.subr.mxu0 0.0
      %3330 = vmatpush1.msra.mxu0 0.0
      %3331 = vmatprep.subr.mxu0 0.0
      %3332 = vmatpush1.msra.mxu0 0.0
      %3333 = vmatprep.subr.mxu0 0.0
      %3334 = vmatpush1.msra.mxu0 0.0
      %3335 = vmatprep.subr.mxu0 0.0
      %3336 = vmatpush1.msra.mxu0 0.0
      %3337 = vmatprep.subr.mxu0 0.0
      %3338 = vmatpush1.msra.mxu0 0.0
      %3339 = vmatprep.subr.mxu0 0.0
      %3340 = vmatpush1.msra.mxu0 0.0
      %3341 = vmatprep.subr.mxu0 0.0
      %3342 = vmatpush1.msra.mxu0 0.0
      %3343 = vmatprep.subr.mxu0 0.0
      %3344 = vmatpush1.msra.mxu0 0.0
      %3345 = vmatprep.subr.mxu0 0.0
      %3346 = vmatpush1.msra.mxu0 0.0
      %3347 = vmatprep.subr.mxu0 0.0
      %3348 = vmatpush1.msra.mxu0 0.0
      %3349 = vmatprep.subr.mxu0 0.0
      %3350 = vmatpush1.msra.mxu0 0.0
      %3351 = vmatprep.subr.mxu0 0.0
      %3352 = vmatpush1.msra.mxu0 0.0
      %3353 = vmatprep.subr.mxu0 0.0
      %3354 = vmatpush1.msra.mxu0 0.0
      %3355 = vmatprep.subr.mxu0 0.0
      %3356 = vmatpush1.msra.mxu0 0.0
      %3357 = vmatprep.subr.mxu0 0.0
      %3358 = vmatpush1.msra.mxu0 0.0
      %3359 = vmatprep.subr.mxu0 0.0
      %3360 = vmatpush1.msra.mxu0 0.0
      %3361 = vmatprep.subr.mxu0 0.0
      %3362 = vmatpush1.msra.mxu0 0.0
      %3363 = vmatprep.subr.mxu0 0.0
      %3364 = vmatpush1.msra.mxu0 0.0
      %3365 = vmatprep.subr.mxu0 0.0
      %3366 = vmatpush1.msra.mxu0 0.0
      %3367 = vmatprep.subr.mxu0 0.0
      %3368 = vmatpush1.msra.mxu0 0.0
      %3369 = vmatprep.subr.mxu0 0.0
      %3370 = vmatpush1.msra.mxu0 0.0
      %3371 = vmatprep.subr.mxu0 0.0
      %3372 = vmatpush1.msra.mxu0 0.0
      %3373 = vmatprep.subr.mxu0 0.0
      %3374 = vmatpush1.msra.mxu0 0.0
      %3375 = vmatprep.mubr.f32.mxu0 0.0
      %v3376 = vand.u32 %v3133, 4294901760
      %v3377 = vsub.f32 %v3133, %v3376
      %3378 = vmatmul.mubr.f32.gmra.mrb[0].mxu0 %v3377
      %v3379 = vpop.f32.mrb[0].mxu0
      %v3380 = vadd.f32 %v3300, %v3379
      %v3381 = vpop.f32.mrb[0].mxu0
      %3382 = vmatprep.mubr.f32.mxu0 0.0
      %v3383 = vand.u32 %v3135, 4294901760
      %v3384 = vsub.f32 %v3135, %v3383
      %3385 = vmatmul.mubr.f32.gmra.mrb[0].mxu0 %v3384
      %v3386 = vpop.f32.mrb[0].mxu0
      %v3387 = vadd.f32 %v3306, %v3386
      %v3388 = vpop.f32.mrb[0].mxu0
      %3389 = vdwg.mxu0
      %3390 = vmatprep.subr.mxu0 0.0
      %v3391 = vand.u32 %v3139, 4294901760
      %3392 = vmatpush1.msra.mxu0 %v3391
      %3393 = vmatprep.subr.mxu0 0.0
      %3394 = vmatpush1.msra.mxu0 0.0
      %3395 = vmatprep.subr.mxu0 0.0
      %3396 = vmatpush1.msra.mxu0 0.0
      %3397 = vmatprep.subr.mxu0 0.0
      %3398 = vmatpush1.msra.mxu0 0.0
      %3399 = vmatprep.subr.mxu0 0.0
      %3400 = vmatpush1.msra.mxu0 0.0
      %3401 = vmatprep.subr.mxu0 0.0
      %3402 = vmatpush1.msra.mxu0 0.0
      %3403 = vmatprep.subr.mxu0 0.0
      %3404 = vmatpush1.msra.mxu0 0.0
      %3405 = vmatprep.subr.mxu0 0.0
      %3406 = vmatpush1.msra.mxu0 0.0
      %3407 = vmatprep.subr.mxu0 0.0
      %3408 = vmatpush1.msra.mxu0 0.0
      %3409 = vmatprep.subr.mxu0 0.0
      %3410 = vmatpush1.msra.mxu0 0.0
      %3411 = vmatprep.subr.mxu0 0.0
      %3412 = vmatpush1.msra.mxu0 0.0
      %3413 = vmatprep.subr.mxu0 0.0
      %3414 = vmatpush1.msra.mxu0 0.0
      %3415 = vmatprep.subr.mxu0 0.0
      %3416 = vmatpush1.msra.mxu0 0.0
      %3417 = vmatprep.subr.mxu0 0.0
      %3418 = vmatpush1.msra.mxu0 0.0
      %3419 = vmatprep.subr.mxu0 0.0
      %3420 = vmatpush1.msra.mxu0 0.0
      %3421 = vmatprep.subr.mxu0 0.0
      %3422 = vmatpush1.msra.mxu0 0.0
      %3423 = vmatprep.subr.mxu0 0.0
      %3424 = vmatpush1.msra.mxu0 0.0
      %3425 = vmatprep.subr.mxu0 0.0
      %3426 = vmatpush1.msra.mxu0 0.0
      %3427 = vmatprep.subr.mxu0 0.0
      %3428 = vmatpush1.msra.mxu0 0.0
      %3429 = vmatprep.subr.mxu0 0.0
      %3430 = vmatpush1.msra.mxu0 0.0
      %3431 = vmatprep.subr.mxu0 0.0
      %3432 = vmatpush1.msra.mxu0 0.0
      %3433 = vmatprep.subr.mxu0 0.0
      %3434 = vmatpush1.msra.mxu0 0.0
      %3435 = vmatprep.subr.mxu0 0.0
      %3436 = vmatpush1.msra.mxu0 0.0
      %3437 = vmatprep.subr.mxu0 0.0
      %3438 = vmatpush1.msra.mxu0 0.0
      %3439 = vmatprep.subr.mxu0 0.0
      %3440 = vmatpush1.msra.mxu0 0.0
      %3441 = vmatprep.subr.mxu0 0.0
      %3442 = vmatpush1.msra.mxu0 0.0
      %3443 = vmatprep.subr.mxu0 0.0
      %3444 = vmatpush1.msra.mxu0 0.0
      %3445 = vmatprep.subr.mxu0 0.0
      %3446 = vmatpush1.msra.mxu0 0.0
      %3447 = vmatprep.subr.mxu0 0.0
      %3448 = vmatpush1.msra.mxu0 0.0
      %3449 = vmatprep.subr.mxu0 0.0
      %3450 = vmatpush1.msra.mxu0 0.0
      %3451 = vmatprep.subr.mxu0 0.0
      %3452 = vmatpush1.msra.mxu0 0.0
      %3453 = vmatprep.subr.mxu0 0.0
      %3454 = vmatpush1.msra.mxu0 0.0
      %3455 = vmatprep.mubr.f32.mxu0 0.0
      %v3456 = vand.u32 %v3133, 4294901760
      %v3457 = vsub.f32 %v3133, %v3456
      %v3458 = vand.u32 %v3457, 4294901760
      %3459 = vmatmul.mubr.f32.gmra.mrb[0].mxu0 %v3458
      %v3460 = vpop.f32.mrb[0].mxu0
      %v3461 = vadd.f32 %v3380, %v3460
      %v3462 = vpop.f32.mrb[0].mxu0
      %3463 = vmatprep.mubr.f32.mxu0 0.0
      %v3464 = vand.u32 %v3135, 4294901760
      %v3465 = vsub.f32 %v3135, %v3464
      %v3466 = vand.u32 %v3465, 4294901760
      %3467 = vmatmul.mubr.f32.gmra.mrb[0].mxu0 %v3466
      %v3468 = vpop.f32.mrb[0].mxu0
      %v3469 = vadd.f32 %v3387, %v3468
      %v3470 = vpop.f32.mrb[0].mxu0
      %3471 = vdwg.mxu0
      %3472 = vmatprep.subr.mxu0 0.0
      %v3473 = vand.u32 %v3139, 4294901760
      %v3474 = vsub.f32 %v3139, %v3473
      %v3475 = vand.u32 %v3474, 4294901760
      %3476 = vmatpush1.msra.mxu0 %v3475
      %3477 = vmatprep.subr.mxu0 0.0
      %3478 = vmatpush1.msra.mxu0 0.0
      %3479 = vmatprep.subr.mxu0 0.0
      %3480 = vmatpush1.msra.mxu0 0.0
      %3481 = vmatprep.subr.mxu0 0.0
      %3482 = vmatpush1.msra.mxu0 0.0
      %3483 = vmatprep.subr.mxu0 0.0
      %3484 = vmatpush1.msra.mxu0 0.0
      %3485 = vmatprep.subr.mxu0 0.0
      %3486 = vmatpush1.msra.mxu0 0.0
      %3487 = vmatprep.subr.mxu0 0.0
      %3488 = vmatpush1.msra.mxu0 0.0
      %3489 = vmatprep.subr.mxu0 0.0
      %3490 = vmatpush1.msra.mxu0 0.0
      %3491 = vmatprep.subr.mxu0 0.0
      %3492 = vmatpush1.msra.mxu0 0.0
      %3493 = vmatprep.subr.mxu0 0.0
      %3494 = vmatpush1.msra.mxu0 0.0
      %3495 = vmatprep.subr.mxu0 0.0
      %3496 = vmatpush1.msra.mxu0 0.0
      %3497 = vmatprep.subr.mxu0 0.0
      %3498 = vmatpush1.msra.mxu0 0.0
      %3499 = vmatprep.subr.mxu0 0.0
      %3500 = vmatpush1.msra.mxu0 0.0
      %3501 = vmatprep.subr.mxu0 0.0
      %3502 = vmatpush1.msra.mxu0 0.0
      %3503 = vmatprep.subr.mxu0 0.0
      %3504 = vmatpush1.msra.mxu0 0.0
      %3505 = vmatprep.subr.mxu0 0.0
      %3506 = vmatpush1.msra.mxu0 0.0
      %3507 = vmatprep.subr.mxu0 0.0
      %3508 = vmatpush1.msra.mxu0 0.0
      %3509 = vmatprep.subr.mxu0 0.0
      %3510 = vmatpush1.msra.mxu0 0.0
      %3511 = vmatprep.subr.mxu0 0.0
      %3512 = vmatpush1.msra.mxu0 0.0
      %3513 = vmatprep.subr.mxu0 0.0
      %3514 = vmatpush1.msra.mxu0 0.0
      %3515 = vmatprep.subr.mxu0 0.0
      %3516 = vmatpush1.msra.mxu0 0.0
      %3517 = vmatprep.subr.mxu0 0.0
      %3518 = vmatpush1.msra.mxu0 0.0
      %3519 = vmatprep.subr.mxu0 0.0
      %3520 = vmatpush1.msra.mxu0 0.0
      %3521 = vmatprep.subr.mxu0 0.0
      %3522 = vmatpush1.msra.mxu0 0.0
      %3523 = vmatprep.subr.mxu0 0.0
      %3524 = vmatpush1.msra.mxu0 0.0
      %3525 = vmatprep.subr.mxu0 0.0
      %3526 = vmatpush1.msra.mxu0 0.0
      %3527 = vmatprep.subr.mxu0 0.0
      %3528 = vmatpush1.msra.mxu0 0.0
      %3529 = vmatprep.subr.mxu0 0.0
      %3530 = vmatpush1.msra.mxu0 0.0
      %3531 = vmatprep.subr.mxu0 0.0
      %3532 = vmatpush1.msra.mxu0 0.0
      %3533 = vmatprep.subr.mxu0 0.0
      %3534 = vmatpush1.msra.mxu0 0.0
      %3535 = vmatprep.subr.mxu0 0.0
      %3536 = vmatpush1.msra.mxu0 0.0
      %3537 = vmatprep.subr.mxu0 0.0
      %3538 = vmatpush1.msra.mxu0 0.0
      %3539 = vmatprep.mubr.f32.mxu0 0.0
      %v3540 = vand.u32 %v3133, 4294901760
      %3541 = vmatmul.mubr.f32.gmra.mrb[0].mxu0 %v3540
      %v3542 = vpop.f32.mrb[0].mxu0
      %v3543 = vadd.f32 %v3461, %v3542
      %v3544 = vpop.f32.mrb[0].mxu0
      %3545 = vmatprep.mubr.f32.mxu0 0.0
      %v3546 = vand.u32 %v3135, 4294901760
      %3547 = vmatmul.mubr.f32.gmra.mrb[0].mxu0 %v3546
      %v3548 = vpop.f32.mrb[0].mxu0
      %v3549 = vadd.f32 %v3469, %v3548
      %v3550 = vpop.f32.mrb[0].mxu0
      %3551 = vdwg.mxu0
      %3552 = vmatprep.subr.mxu0 0.0
      %v3553 = vand.u32 %v3139, 4294901760
      %3554 = vmatpush1.msra.mxu0 %v3553
      %3555 = vmatprep.subr.mxu0 0.0
      %3556 = vmatpush1.msra.mxu0 0.0
      %3557 = vmatprep.subr.mxu0 0.0
      %3558 = vmatpush1.msra.mxu0 0.0
      %3559 = vmatprep.subr.mxu0 0.0
      %3560 = vmatpush1.msra.mxu0 0.0
      %3561 = vmatprep.subr.mxu0 0.0
      %3562 = vmatpush1.msra.mxu0 0.0
      %3563 = vmatprep.subr.mxu0 0.0
      %3564 = vmatpush1.msra.mxu0 0.0
      %3565 = vmatprep.subr.mxu0 0.0
      %3566 = vmatpush1.msra.mxu0 0.0
      %3567 = vmatprep.subr.mxu0 0.0
      %3568 = vmatpush1.msra.mxu0 0.0
      %3569 = vmatprep.subr.mxu0 0.0
      %3570 = vmatpush1.msra.mxu0 0.0
      %3571 = vmatprep.subr.mxu0 0.0
      %3572 = vmatpush1.msra.mxu0 0.0
      %3573 = vmatprep.subr.mxu0 0.0
      %3574 = vmatpush1.msra.mxu0 0.0
      %3575 = vmatprep.subr.mxu0 0.0
      %3576 = vmatpush1.msra.mxu0 0.0
      %3577 = vmatprep.subr.mxu0 0.0
      %3578 = vmatpush1.msra.mxu0 0.0
      %3579 = vmatprep.subr.mxu0 0.0
      %3580 = vmatpush1.msra.mxu0 0.0
      %3581 = vmatprep.subr.mxu0 0.0
      %3582 = vmatpush1.msra.mxu0 0.0
      %3583 = vmatprep.subr.mxu0 0.0
      %3584 = vmatpush1.msra.mxu0 0.0
      %3585 = vmatprep.subr.mxu0 0.0
      %3586 = vmatpush1.msra.mxu0 0.0
      %3587 = vmatprep.subr.mxu0 0.0
      %3588 = vmatpush1.msra.mxu0 0.0
      %3589 = vmatprep.subr.mxu0 0.0
      %3590 = vmatpush1.msra.mxu0 0.0
      %3591 = vmatprep.subr.mxu0 0.0
      %3592 = vmatpush1.msra.mxu0 0.0
      %3593 = vmatprep.subr.mxu0 0.0
      %3594 = vmatpush1.msra.mxu0 0.0
      %3595 = vmatprep.subr.mxu0 0.0
      %3596 = vmatpush1.msra.mxu0 0.0
      %3597 = vmatprep.subr.mxu0 0.0
      %3598 = vmatpush1.msra.mxu0 0.0
      %3599 = vmatprep.subr.mxu0 0.0
      %3600 = vmatpush1.msra.mxu0 0.0
      %3601 = vmatprep.subr.mxu0 0.0
      %3602 = vmatpush1.msra.mxu0 0.0
      %3603 = vmatprep.subr.mxu0 0.0
      %3604 = vmatpush1.msra.mxu0 0.0
      %3605 = vmatprep.subr.mxu0 0.0
      %3606 = vmatpush1.msra.mxu0 0.0
      %3607 = vmatprep.subr.mxu0 0.0
      %3608 = vmatpush1.msra.mxu0 0.0
      %3609 = vmatprep.subr.mxu0 0.0
      %3610 = vmatpush1.msra.mxu0 0.0
      %3611 = vmatprep.subr.mxu0 0.0
      %3612 = vmatpush1.msra.mxu0 0.0
      %3613 = vmatprep.subr.mxu0 0.0
      %3614 = vmatpush1.msra.mxu0 0.0
      %3615 = vmatprep.subr.mxu0 0.0
      %3616 = vmatpush1.msra.mxu0 0.0
      %3617 = vmatprep.mubr.f32.mxu0 0.0
      %v3618 = vand.u32 %v3133, 4294901760
      %3619 = vmatmul.mubr.f32.gmra.mrb[0].mxu0 %v3618
      %v3620 = vpop.f32.mrb[0].mxu0
      %v3621 = vadd.f32 %v3543, %v3620
      %v3622 = vpop.f32.mrb[0].mxu0
      %3623 = vmatprep.mubr.f32.mxu0 0.0
      %v3624 = vand.u32 %v3135, 4294901760
      %3625 = vmatmul.mubr.f32.gmra.mrb[0].mxu0 %v3624
      %v3626 = vpop.f32.mrb[0].mxu0
      %v3627 = vadd.f32 %v3549, %v3626
      %v3628 = vpop.f32.mrb[0].mxu0
      %3629 = vdwg.mxu0
      %v3630 = vxor.u32 %v3621, 2147483648
      %v3631 = vxor.u32 %v3627, 2147483648
      %v3632 = vmul.f32 %v3630, 1.442695
      %v3633 = vpow.pop %v3632
      %v3634 = vmul.f32 %v3631, 1.442695
      %v3635 = vpow.pop %v3634
      %v3636 = vadd.f32 %v3633, 1.0
      %v3637 = vadd.f32 %v3635, 1.0
      %v3638 = vrcp.pop %v3636
      %v3639 = vmul.f32 1.0, %v3638
      %v3640 = vrcp.pop %v3637
      %v3641 = vmul.f32 1.0, %v3640
      %v3642 = vmul.f32 %v3639, %v3641
      %vm3643 = vcmask 113664
      %v3645 = vsel %vm3643, %v3642, 0
      %vm3647 = vcmask 1045504
      %v3649 = vsel %vm3647, %v266, 0
      %3651 = vmatprep.subr.mxu0 0.0
      %v3652 = vand.u32 %v265, 4294901760
      %3653 = vmatpush1.msra.mxu0 %v3652
      %3654 = vmatprep.subr.mxu0 0.0
      %v3655 = vand.u32 %v3649, 4294901760
      %3656 = vmatpush1.msra.mxu0 %v3655
      %3657 = vmatprep.subr.mxu0 0.0
      %3658 = vmatpush1.msra.mxu0 0.0
      %3659 = vmatprep.subr.mxu0 0.0
      %3660 = vmatpush1.msra.mxu0 0.0
      %3661 = vmatprep.subr.mxu0 0.0
      %3662 = vmatpush1.msra.mxu0 0.0
      %3663 = vmatprep.subr.mxu0 0.0
      %3664 = vmatpush1.msra.mxu0 0.0
      %3665 = vmatprep.subr.mxu0 0.0
      %3666 = vmatpush1.msra.mxu0 0.0
      %3667 = vmatprep.subr.mxu0 0.0
      %3668 = vmatpush1.msra.mxu0 0.0
      %3669 = vmatprep.subr.mxu0 0.0
      %3670 = vmatpush1.msra.mxu0 0.0
      %3671 = vmatprep.subr.mxu0 0.0
      %3672 = vmatpush1.msra.mxu0 0.0
      %3673 = vmatprep.subr.mxu0 0.0
      %3674 = vmatpush1.msra.mxu0 0.0
      %3675 = vmatprep.subr.mxu0 0.0
      %3676 = vmatpush1.msra.mxu0 0.0
      %3677 = vmatprep.subr.mxu0 0.0
      %3678 = vmatpush1.msra.mxu0 0.0
      %3679 = vmatprep.subr.mxu0 0.0
      %3680 = vmatpush1.msra.mxu0 0.0
      %3681 = vmatprep.subr.mxu0 0.0
      %3682 = vmatpush1.msra.mxu0 0.0
      %3683 = vmatprep.subr.mxu0 0.0
      %3684 = vmatpush1.msra.mxu0 0.0
      %3685 = vmatprep.subr.mxu0 0.0
      %3686 = vmatpush1.msra.mxu0 0.0
      %3687 = vmatprep.subr.mxu0 0.0
      %3688 = vmatpush1.msra.mxu0 0.0
      %3689 = vmatprep.subr.mxu0 0.0
      %3690 = vmatpush1.msra.mxu0 0.0
      %3691 = vmatprep.subr.mxu0 0.0
      %3692 = vmatpush1.msra.mxu0 0.0
      %3693 = vmatprep.subr.mxu0 0.0
      %3694 = vmatpush1.msra.mxu0 0.0
      %3695 = vmatprep.subr.mxu0 0.0
      %3696 = vmatpush1.msra.mxu0 0.0
      %3697 = vmatprep.subr.mxu0 0.0
      %3698 = vmatpush1.msra.mxu0 0.0
      %3699 = vmatprep.subr.mxu0 0.0
      %3700 = vmatpush1.msra.mxu0 0.0
      %3701 = vmatprep.subr.mxu0 0.0
      %3702 = vmatpush1.msra.mxu0 0.0
      %3703 = vmatprep.subr.mxu0 0.0
      %3704 = vmatpush1.msra.mxu0 0.0
      %3705 = vmatprep.subr.mxu0 0.0
      %3706 = vmatpush1.msra.mxu0 0.0
      %3707 = vmatprep.subr.mxu0 0.0
      %3708 = vmatpush1.msra.mxu0 0.0
      %3709 = vmatprep.subr.mxu0 0.0
      %3710 = vmatpush1.msra.mxu0 0.0
      %3711 = vmatprep.subr.mxu0 0.0
      %3712 = vmatpush1.msra.mxu0 0.0
      %3713 = vmatprep.subr.mxu0 0.0
      %3714 = vmatpush1.msra.mxu0 0.0
      %3715 = vmatprep.subr.mxu0 0.0
      %3716 = vmatpush1.msra.mxu0 0.0
      %3717 = vmatprep.mubr.f32.mxu0 0.0
      %v3718 = vand.u32 %v3645, 4294901760
      %v3719 = vsub.f32 %v3645, %v3718
      %v3720 = vand.u32 %v3719, 4294901760
      %v3721 = vsub.f32 %v3719, %v3720
      %v3722 = vand.u32 %v3721, 4294901760
      %3723 = vmatmul.mubr.f32.gmra.mrb[0].mxu0 %v3722
      %v3724 = vpop.f32.mrb[0].mxu0
      %v3725 = vadd.f32 0.0, %v3724
      %v3726 = vpop.f32.mrb[0].mxu0
      %3727 = vdwg.mxu0
      %3728 = vmatprep.subr.mxu0 0.0
      %v3729 = vand.u32 %v265, 4294901760
      %v3730 = vsub.f32 %v265, %v3729
      %v3731 = vand.u32 %v3730, 4294901760
      %v3732 = vsub.f32 %v3730, %v3731
      %v3733 = vand.u32 %v3732, 4294901760
      %3734 = vmatpush1.msra.mxu0 %v3733
      %3735 = vmatprep.subr.mxu0 0.0
      %v3736 = vand.u32 %v3649, 4294901760
      %v3737 = vsub.f32 %v3649, %v3736
      %v3738 = vand.u32 %v3737, 4294901760
      %v3739 = vsub.f32 %v3737, %v3738
      %v3740 = vand.u32 %v3739, 4294901760
      %3741 = vmatpush1.msra.mxu0 %v3740
      %3742 = vmatprep.subr.mxu0 0.0
      %3743 = vmatpush1.msra.mxu0 0.0
      %3744 = vmatprep.subr.mxu0 0.0
      %3745 = vmatpush1.msra.mxu0 0.0
      %3746 = vmatprep.subr.mxu0 0.0
      %3747 = vmatpush1.msra.mxu0 0.0
      %3748 = vmatprep.subr.mxu0 0.0
      %3749 = vmatpush1.msra.mxu0 0.0
      %3750 = vmatprep.subr.mxu0 0.0
      %3751 = vmatpush1.msra.mxu0 0.0
      %3752 = vmatprep.subr.mxu0 0.0
      %3753 = vmatpush1.msra.mxu0 0.0
      %3754 = vmatprep.subr.mxu0 0.0
      %3755 = vmatpush1.msra.mxu0 0.0
      %3756 = vmatprep.subr.mxu0 0.0
      %3757 = vmatpush1.msra.mxu0 0.0
      %3758 = vmatprep.subr.mxu0 0.0
      %3759 = vmatpush1.msra.mxu0 0.0
      %3760 = vmatprep.subr.mxu0 0.0
      %3761 = vmatpush1.msra.mxu0 0.0
      %3762 = vmatprep.subr.mxu0 0.0
      %3763 = vmatpush1.msra.mxu0 0.0
      %3764 = vmatprep.subr.mxu0 0.0
      %3765 = vmatpush1.msra.mxu0 0.0
      %3766 = vmatprep.subr.mxu0 0.0
      %3767 = vmatpush1.msra.mxu0 0.0
      %3768 = vmatprep.subr.mxu0 0.0
      %3769 = vmatpush1.msra.mxu0 0.0
      %3770 = vmatprep.subr.mxu0 0.0
      %3771 = vmatpush1.msra.mxu0 0.0
      %3772 = vmatprep.subr.mxu0 0.0
      %3773 = vmatpush1.msra.mxu0 0.0
      %3774 = vmatprep.subr.mxu0 0.0
      %3775 = vmatpush1.msra.mxu0 0.0
      %3776 = vmatprep.subr.mxu0 0.0
      %3777 = vmatpush1.msra.mxu0 0.0
      %3778 = vmatprep.subr.mxu0 0.0
      %3779 = vmatpush1.msra.mxu0 0.0
      %3780 = vmatprep.subr.mxu0 0.0
      %3781 = vmatpush1.msra.mxu0 0.0
      %3782 = vmatprep.subr.mxu0 0.0
      %3783 = vmatpush1.msra.mxu0 0.0
      %3784 = vmatprep.subr.mxu0 0.0
      %3785 = vmatpush1.msra.mxu0 0.0
      %3786 = vmatprep.subr.mxu0 0.0
      %3787 = vmatpush1.msra.mxu0 0.0
      %3788 = vmatprep.subr.mxu0 0.0
      %3789 = vmatpush1.msra.mxu0 0.0
      %3790 = vmatprep.subr.mxu0 0.0
      %3791 = vmatpush1.msra.mxu0 0.0
      %3792 = vmatprep.subr.mxu0 0.0
      %3793 = vmatpush1.msra.mxu0 0.0
      %3794 = vmatprep.subr.mxu0 0.0
      %3795 = vmatpush1.msra.mxu0 0.0
      %3796 = vmatprep.subr.mxu0 0.0
      %3797 = vmatpush1.msra.mxu0 0.0
      %3798 = vmatprep.subr.mxu0 0.0
      %3799 = vmatpush1.msra.mxu0 0.0
      %3800 = vmatprep.subr.mxu0 0.0
      %3801 = vmatpush1.msra.mxu0 0.0
      %3802 = vmatprep.mubr.f32.mxu0 0.0
      %v3803 = vand.u32 %v3645, 4294901760
      %3804 = vmatmul.mubr.f32.gmra.mrb[0].mxu0 %v3803
      %v3805 = vpop.f32.mrb[0].mxu0
      %v3806 = vadd.f32 %v3725, %v3805
      %v3807 = vpop.f32.mrb[0].mxu0
      %3808 = vdwg.mxu0
      %3809 = vmatprep.subr.mxu0 0.0
      %v3810 = vand.u32 %v265, 4294901760
      %v3811 = vsub.f32 %v265, %v3810
      %3812 = vmatpush1.msra.mxu0 %v3811
      %3813 = vmatprep.subr.mxu0 0.0
      %v3814 = vand.u32 %v3649, 4294901760
      %v3815 = vsub.f32 %v3649, %v3814
      %3816 = vmatpush1.msra.mxu0 %v3815
      %3817 = vmatprep.subr.mxu0 0.0
      %3818 = vmatpush1.msra.mxu0 0.0
      %3819 = vmatprep.subr.mxu0 0.0
      %3820 = vmatpush1.msra.mxu0 0.0
      %3821 = vmatprep.subr.mxu0 0.0
      %3822 = vmatpush1.msra.mxu0 0.0
      %3823 = vmatprep.subr.mxu0 0.0
      %3824 = vmatpush1.msra.mxu0 0.0
      %3825 = vmatprep.subr.mxu0 0.0
      %3826 = vmatpush1.msra.mxu0 0.0
      %3827 = vmatprep.subr.mxu0 0.0
      %3828 = vmatpush1.msra.mxu0 0.0
      %3829 = vmatprep.subr.mxu0 0.0
      %3830 = vmatpush1.msra.mxu0 0.0
      %3831 = vmatprep.subr.mxu0 0.0
      %3832 = vmatpush1.msra.mxu0 0.0
      %3833 = vmatprep.subr.mxu0 0.0
      %3834 = vmatpush1.msra.mxu0 0.0
      %3835 = vmatprep.subr.mxu0 0.0
      %3836 = vmatpush1.msra.mxu0 0.0
      %3837 = vmatprep.subr.mxu0 0.0
      %3838 = vmatpush1.msra.mxu0 0.0
      %3839 = vmatprep.subr.mxu0 0.0
      %3840 = vmatpush1.msra.mxu0 0.0
      %3841 = vmatprep.subr.mxu0 0.0
      %3842 = vmatpush1.msra.mxu0 0.0
      %3843 = vmatprep.subr.mxu0 0.0
      %3844 = vmatpush1.msra.mxu0 0.0
      %3845 = vmatprep.subr.mxu0 0.0
      %3846 = vmatpush1.msra.mxu0 0.0
      %3847 = vmatprep.subr.mxu0 0.0
      %3848 = vmatpush1.msra.mxu0 0.0
      %3849 = vmatprep.subr.mxu0 0.0
      %3850 = vmatpush1.msra.mxu0 0.0
      %3851 = vmatprep.subr.mxu0 0.0
      %3852 = vmatpush1.msra.mxu0 0.0
      %3853 = vmatprep.subr.mxu0 0.0
      %3854 = vmatpush1.msra.mxu0 0.0
      %3855 = vmatprep.subr.mxu0 0.0
      %3856 = vmatpush1.msra.mxu0 0.0
      %3857 = vmatprep.subr.mxu0 0.0
      %3858 = vmatpush1.msra.mxu0 0.0
      %3859 = vmatprep.subr.mxu0 0.0
      %3860 = vmatpush1.msra.mxu0 0.0
      %3861 = vmatprep.subr.mxu0 0.0
      %3862 = vmatpush1.msra.mxu0 0.0
      %3863 = vmatprep.subr.mxu0 0.0
      %3864 = vmatpush1.msra.mxu0 0.0
      %3865 = vmatprep.subr.mxu0 0.0
      %3866 = vmatpush1.msra.mxu0 0.0
      %3867 = vmatprep.subr.mxu0 0.0
      %3868 = vmatpush1.msra.mxu0 0.0
      %3869 = vmatprep.subr.mxu0 0.0
      %3870 = vmatpush1.msra.mxu0 0.0
      %3871 = vmatprep.subr.mxu0 0.0
      %3872 = vmatpush1.msra.mxu0 0.0
      %3873 = vmatprep.subr.mxu0 0.0
      %3874 = vmatpush1.msra.mxu0 0.0
      %3875 = vmatprep.subr.mxu0 0.0
      %3876 = vmatpush1.msra.mxu0 0.0
      %3877 = vmatprep.mubr.f32.mxu0 0.0
      %v3878 = vand.u32 %v3645, 4294901760
      %v3879 = vsub.f32 %v3645, %v3878
      %3880 = vmatmul.mubr.f32.gmra.mrb[0].mxu0 %v3879
      %v3881 = vpop.f32.mrb[0].mxu0
      %v3882 = vadd.f32 %v3806, %v3881
      %v3883 = vpop.f32.mrb[0].mxu0
      %3884 = vdwg.mxu0
      %3885 = vmatprep.subr.mxu0 0.0
      %v3886 = vand.u32 %v265, 4294901760
      %3887 = vmatpush1.msra.mxu0 %v3886
      %3888 = vmatprep.subr.mxu0 0.0
      %v3889 = vand.u32 %v3649, 4294901760
      %3890 = vmatpush1.msra.mxu0 %v3889
      %3891 = vmatprep.subr.mxu0 0.0
      %3892 = vmatpush1.msra.mxu0 0.0
      %3893 = vmatprep.subr.mxu0 0.0
      %3894 = vmatpush1.msra.mxu0 0.0
      %3895 = vmatprep.subr.mxu0 0.0
      %3896 = vmatpush1.msra.mxu0 0.0
      %3897 = vmatprep.subr.mxu0 0.0
      %3898 = vmatpush1.msra.mxu0 0.0
      %3899 = vmatprep.subr.mxu0 0.0
      %3900 = vmatpush1.msra.mxu0 0.0
      %3901 = vmatprep.subr.mxu0 0.0
      %3902 = vmatpush1.msra.mxu0 0.0
      %3903 = vmatprep.subr.mxu0 0.0
      %3904 = vmatpush1.msra.mxu0 0.0
      %3905 = vmatprep.subr.mxu0 0.0
      %3906 = vmatpush1.msra.mxu0 0.0
      %3907 = vmatprep.subr.mxu0 0.0
      %3908 = vmatpush1.msra.mxu0 0.0
      %3909 = vmatprep.subr.mxu0 0.0
      %3910 = vmatpush1.msra.mxu0 0.0
      %3911 = vmatprep.subr.mxu0 0.0
      %3912 = vmatpush1.msra.mxu0 0.0
      %3913 = vmatprep.subr.mxu0 0.0
      %3914 = vmatpush1.msra.mxu0 0.0
      %3915 = vmatprep.subr.mxu0 0.0
      %3916 = vmatpush1.msra.mxu0 0.0
      %3917 = vmatprep.subr.mxu0 0.0
      %3918 = vmatpush1.msra.mxu0 0.0
      %3919 = vmatprep.subr.mxu0 0.0
      %3920 = vmatpush1.msra.mxu0 0.0
      %3921 = vmatprep.subr.mxu0 0.0
      %3922 = vmatpush1.msra.mxu0 0.0
      %3923 = vmatprep.subr.mxu0 0.0
      %3924 = vmatpush1.msra.mxu0 0.0
      %3925 = vmatprep.subr.mxu0 0.0
      %3926 = vmatpush1.msra.mxu0 0.0
      %3927 = vmatprep.subr.mxu0 0.0
      %3928 = vmatpush1.msra.mxu0 0.0
      %3929 = vmatprep.subr.mxu0 0.0
      %3930 = vmatpush1.msra.mxu0 0.0
      %3931 = vmatprep.subr.mxu0 0.0
      %3932 = vmatpush1.msra.mxu0 0.0
      %3933 = vmatprep.subr.mxu0 0.0
      %3934 = vmatpush1.msra.mxu0 0.0
      %3935 = vmatprep.subr.mxu0 0.0
      %3936 = vmatpush1.msra.mxu0 0.0
      %3937 = vmatprep.subr.mxu0 0.0
      %3938 = vmatpush1.msra.mxu0 0.0
      %3939 = vmatprep.subr.mxu0 0.0
      %3940 = vmatpush1.msra.mxu0 0.0
      %3941 = vmatprep.subr.mxu0 0.0
      %3942 = vmatpush1.msra.mxu0 0.0
      %3943 = vmatprep.subr.mxu0 0.0
      %3944 = vmatpush1.msra.mxu0 0.0
      %3945 = vmatprep.subr.mxu0 0.0
      %3946 = vmatpush1.msra.mxu0 0.0
      %3947 = vmatprep.subr.mxu0 0.0
      %3948 = vmatpush1.msra.mxu0 0.0
      %3949 = vmatprep.subr.mxu0 0.0
      %3950 = vmatpush1.msra.mxu0 0.0
      %3951 = vmatprep.mubr.f32.mxu0 0.0
      %v3952 = vand.u32 %v3645, 4294901760
      %v3953 = vsub.f32 %v3645, %v3952
      %v3954 = vand.u32 %v3953, 4294901760
      %3955 = vmatmul.mubr.f32.gmra.mrb[0].mxu0 %v3954
      %v3956 = vpop.f32.mrb[0].mxu0
      %v3957 = vadd.f32 %v3882, %v3956
      %v3958 = vpop.f32.mrb[0].mxu0
      %3959 = vdwg.mxu0
      %3960 = vmatprep.subr.mxu0 0.0
      %v3961 = vand.u32 %v265, 4294901760
      %v3962 = vsub.f32 %v265, %v3961
      %v3963 = vand.u32 %v3962, 4294901760
      %3964 = vmatpush1.msra.mxu0 %v3963
      %3965 = vmatprep.subr.mxu0 0.0
      %v3966 = vand.u32 %v3649, 4294901760
      %v3967 = vsub.f32 %v3649, %v3966
      %v3968 = vand.u32 %v3967, 4294901760
      %3969 = vmatpush1.msra.mxu0 %v3968
      %3970 = vmatprep.subr.mxu0 0.0
      %3971 = vmatpush1.msra.mxu0 0.0
      %3972 = vmatprep.subr.mxu0 0.0
      %3973 = vmatpush1.msra.mxu0 0.0
      %3974 = vmatprep.subr.mxu0 0.0
      %3975 = vmatpush1.msra.mxu0 0.0
      %3976 = vmatprep.subr.mxu0 0.0
      %3977 = vmatpush1.msra.mxu0 0.0
      %3978 = vmatprep.subr.mxu0 0.0
      %3979 = vmatpush1.msra.mxu0 0.0
      %3980 = vmatprep.subr.mxu0 0.0
      %3981 = vmatpush1.msra.mxu0 0.0
      %3982 = vmatprep.subr.mxu0 0.0
      %3983 = vmatpush1.msra.mxu0 0.0
      %3984 = vmatprep.subr.mxu0 0.0
      %3985 = vmatpush1.msra.mxu0 0.0
      %3986 = vmatprep.subr.mxu0 0.0
      %3987 = vmatpush1.msra.mxu0 0.0
      %3988 = vmatprep.subr.mxu0 0.0
      %3989 = vmatpush1.msra.mxu0 0.0
      %3990 = vmatprep.subr.mxu0 0.0
      %3991 = vmatpush1.msra.mxu0 0.0
      %3992 = vmatprep.subr.mxu0 0.0
      %3993 = vmatpush1.msra.mxu0 0.0
      %3994 = vmatprep.subr.mxu0 0.0
      %3995 = vmatpush1.msra.mxu0 0.0
      %3996 = vmatprep.subr.mxu0 0.0
      %3997 = vmatpush1.msra.mxu0 0.0
      %3998 = vmatprep.subr.mxu0 0.0
      %3999 = vmatpush1.msra.mxu0 0.0
      %4000 = vmatprep.subr.mxu0 0.0
      %4001 = vmatpush1.msra.mxu0 0.0
      %4002 = vmatprep.subr.mxu0 0.0
      %4003 = vmatpush1.msra.mxu0 0.0
      %4004 = vmatprep.subr.mxu0 0.0
      %4005 = vmatpush1.msra.mxu0 0.0
      %4006 = vmatprep.subr.mxu0 0.0
      %4007 = vmatpush1.msra.mxu0 0.0
      %4008 = vmatprep.subr.mxu0 0.0
      %4009 = vmatpush1.msra.mxu0 0.0
      %4010 = vmatprep.subr.mxu0 0.0
      %4011 = vmatpush1.msra.mxu0 0.0
      %4012 = vmatprep.subr.mxu0 0.0
      %4013 = vmatpush1.msra.mxu0 0.0
      %4014 = vmatprep.subr.mxu0 0.0
      %4015 = vmatpush1.msra.mxu0 0.0
      %4016 = vmatprep.subr.mxu0 0.0
      %4017 = vmatpush1.msra.mxu0 0.0
      %4018 = vmatprep.subr.mxu0 0.0
      %4019 = vmatpush1.msra.mxu0 0.0
      %4020 = vmatprep.subr.mxu0 0.0
      %4021 = vmatpush1.msra.mxu0 0.0
      %4022 = vmatprep.subr.mxu0 0.0
      %4023 = vmatpush1.msra.mxu0 0.0
      %4024 = vmatprep.subr.mxu0 0.0
      %4025 = vmatpush1.msra.mxu0 0.0
      %4026 = vmatprep.subr.mxu0 0.0
      %4027 = vmatpush1.msra.mxu0 0.0
      %4028 = vmatprep.subr.mxu0 0.0
      %4029 = vmatpush1.msra.mxu0 0.0
      %4030 = vmatprep.mubr.f32.mxu0 0.0
      %v4031 = vand.u32 %v3645, 4294901760
      %4032 = vmatmul.mubr.f32.gmra.mrb[0].mxu0 %v4031
      %v4033 = vpop.f32.mrb[0].mxu0
      %v4034 = vadd.f32 %v3957, %v4033
      %v4035 = vpop.f32.mrb[0].mxu0
      %4036 = vdwg.mxu0
      %4037 = vmatprep.subr.mxu0 0.0
      %v4038 = vand.u32 %v265, 4294901760
      %4039 = vmatpush1.msra.mxu0 %v4038
      %4040 = vmatprep.subr.mxu0 0.0
      %v4041 = vand.u32 %v3649, 4294901760
      %4042 = vmatpush1.msra.mxu0 %v4041
      %4043 = vmatprep.subr.mxu0 0.0
      %4044 = vmatpush1.msra.mxu0 0.0
      %4045 = vmatprep.subr.mxu0 0.0
      %4046 = vmatpush1.msra.mxu0 0.0
      %4047 = vmatprep.subr.mxu0 0.0
      %4048 = vmatpush1.msra.mxu0 0.0
      %4049 = vmatprep.subr.mxu0 0.0
      %4050 = vmatpush1.msra.mxu0 0.0
      %4051 = vmatprep.subr.mxu0 0.0
      %4052 = vmatpush1.msra.mxu0 0.0
      %4053 = vmatprep.subr.mxu0 0.0
      %4054 = vmatpush1.msra.mxu0 0.0
      %4055 = vmatprep.subr.mxu0 0.0
      %4056 = vmatpush1.msra.mxu0 0.0
      %4057 = vmatprep.subr.mxu0 0.0
      %4058 = vmatpush1.msra.mxu0 0.0
      %4059 = vmatprep.subr.mxu0 0.0
      %4060 = vmatpush1.msra.mxu0 0.0
      %4061 = vmatprep.subr.mxu0 0.0
      %4062 = vmatpush1.msra.mxu0 0.0
      %4063 = vmatprep.subr.mxu0 0.0
      %4064 = vmatpush1.msra.mxu0 0.0
      %4065 = vmatprep.subr.mxu0 0.0
      %4066 = vmatpush1.msra.mxu0 0.0
      %4067 = vmatprep.subr.mxu0 0.0
      %4068 = vmatpush1.msra.mxu0 0.0
      %4069 = vmatprep.subr.mxu0 0.0
      %4070 = vmatpush1.msra.mxu0 0.0
      %4071 = vmatprep.subr.mxu0 0.0
      %4072 = vmatpush1.msra.mxu0 0.0
      %4073 = vmatprep.subr.mxu0 0.0
      %4074 = vmatpush1.msra.mxu0 0.0
      %4075 = vmatprep.subr.mxu0 0.0
      %4076 = vmatpush1.msra.mxu0 0.0
      %4077 = vmatprep.subr.mxu0 0.0
      %4078 = vmatpush1.msra.mxu0 0.0
      %4079 = vmatprep.subr.mxu0 0.0
      %4080 = vmatpush1.msra.mxu0 0.0
      %4081 = vmatprep.subr.mxu0 0.0
      %4082 = vmatpush1.msra.mxu0 0.0
      %4083 = vmatprep.subr.mxu0 0.0
      %4084 = vmatpush1.msra.mxu0 0.0
      %4085 = vmatprep.subr.mxu0 0.0
      %4086 = vmatpush1.msra.mxu0 0.0
      %4087 = vmatprep.subr.mxu0 0.0
      %4088 = vmatpush1.msra.mxu0 0.0
      %4089 = vmatprep.subr.mxu0 0.0
      %4090 = vmatpush1.msra.mxu0 0.0
      %4091 = vmatprep.subr.mxu0 0.0
      %4092 = vmatpush1.msra.mxu0 0.0
      %4093 = vmatprep.subr.mxu0 0.0
      %4094 = vmatpush1.msra.mxu0 0.0
      %4095 = vmatprep.subr.mxu0 0.0
      %4096 = vmatpush1.msra.mxu0 0.0
      %4097 = vmatprep.subr.mxu0 0.0
      %4098 = vmatpush1.msra.mxu0 0.0
      %4099 = vmatprep.subr.mxu0 0.0
      %4100 = vmatpush1.msra.mxu0 0.0
      %4101 = vmatprep.subr.mxu0 0.0
      %4102 = vmatpush1.msra.mxu0 0.0
      %4103 = vmatprep.mubr.f32.mxu0 0.0
      %v4104 = vand.u32 %v3645, 4294901760
      %4105 = vmatmul.mubr.f32.gmra.mrb[0].mxu0 %v4104
      %v4106 = vpop.f32.mrb[0].mxu0
      %v4107 = vadd.f32 %v4034, %v4106
      %v4108 = vpop.f32.mrb[0].mxu0
      %4109 = vdwg.mxu0
      %v4111 = vrot.slane %v3639, 4
      %v4112 = vsel %vm3643, %v4111, 0
      %v4115 = vsel %vm3647, %v263, 0
      %v4118 = vsel %vm3647, %v264, 0
      %v4120 = vand.u32 %v262, 4294901760
      %4121 = vmatprep.subr.mxu0 %v4120
      %v4122 = vand.u32 %v261, 4294901760
      %4123 = vmatpush1.msra.mxu0 %v4122
      %v4124 = vand.u32 %v4118, 4294901760
      %4125 = vmatprep.subr.mxu0 %v4124
      %v4126 = vand.u32 %v4115, 4294901760
      %4127 = vmatpush1.msra.mxu0 %v4126
      %4128 = vmatprep.subr.mxu0 0.0
      %4129 = vmatpush1.msra.mxu0 0.0
      %4130 = vmatprep.subr.mxu0 0.0
      %4131 = vmatpush1.msra.mxu0 0.0
      %4132 = vmatprep.subr.mxu0 0.0
      %4133 = vmatpush1.msra.mxu0 0.0
      %4134 = vmatprep.subr.mxu0 0.0
      %4135 = vmatpush1.msra.mxu0 0.0
      %4136 = vmatprep.subr.mxu0 0.0
      %4137 = vmatpush1.msra.mxu0 0.0
      %4138 = vmatprep.subr.mxu0 0.0
      %4139 = vmatpush1.msra.mxu0 0.0
      %4140 = vmatprep.subr.mxu0 0.0
      %4141 = vmatpush1.msra.mxu0 0.0
      %4142 = vmatprep.subr.mxu0 0.0
      %4143 = vmatpush1.msra.mxu0 0.0
      %4144 = vmatprep.subr.mxu0 0.0
      %4145 = vmatpush1.msra.mxu0 0.0
      %4146 = vmatprep.subr.mxu0 0.0
      %4147 = vmatpush1.msra.mxu0 0.0
      %4148 = vmatprep.subr.mxu0 0.0
      %4149 = vmatpush1.msra.mxu0 0.0
      %4150 = vmatprep.subr.mxu0 0.0
      %4151 = vmatpush1.msra.mxu0 0.0
      %4152 = vmatprep.subr.mxu0 0.0
      %4153 = vmatpush1.msra.mxu0 0.0
      %4154 = vmatprep.subr.mxu0 0.0
      %4155 = vmatpush1.msra.mxu0 0.0
      %4156 = vmatprep.subr.mxu0 0.0
      %4157 = vmatpush1.msra.mxu0 0.0
      %4158 = vmatprep.subr.mxu0 0.0
      %4159 = vmatpush1.msra.mxu0 0.0
      %4160 = vmatprep.subr.mxu0 0.0
      %4161 = vmatpush1.msra.mxu0 0.0
      %4162 = vmatprep.subr.mxu0 0.0
      %4163 = vmatpush1.msra.mxu0 0.0
      %4164 = vmatprep.subr.mxu0 0.0
      %4165 = vmatpush1.msra.mxu0 0.0
      %4166 = vmatprep.subr.mxu0 0.0
      %4167 = vmatpush1.msra.mxu0 0.0
      %4168 = vmatprep.subr.mxu0 0.0
      %4169 = vmatpush1.msra.mxu0 0.0
      %4170 = vmatprep.subr.mxu0 0.0
      %4171 = vmatpush1.msra.mxu0 0.0
      %4172 = vmatprep.subr.mxu0 0.0
      %4173 = vmatpush1.msra.mxu0 0.0
      %4174 = vmatprep.subr.mxu0 0.0
      %4175 = vmatpush1.msra.mxu0 0.0
      %4176 = vmatprep.subr.mxu0 0.0
      %4177 = vmatpush1.msra.mxu0 0.0
      %4178 = vmatprep.subr.mxu0 0.0
      %4179 = vmatpush1.msra.mxu0 0.0
      %4180 = vmatprep.subr.mxu0 0.0
      %4181 = vmatpush1.msra.mxu0 0.0
      %4182 = vmatprep.subr.mxu0 0.0
      %4183 = vmatpush1.msra.mxu0 0.0
      %4184 = vmatprep.subr.mxu0 0.0
      %4185 = vmatpush1.msra.mxu0 0.0
      %4186 = vmatprep.subr.mxu0 0.0
      %4187 = vmatpush1.msra.mxu0 0.0
      %4188 = vmatprep.mubr.f32.mxu0 0.0
      %v4189 = vand.u32 %v4112, 4294901760
      %v4190 = vsub.f32 %v4112, %v4189
      %v4191 = vand.u32 %v4190, 4294901760
      %v4192 = vsub.f32 %v4190, %v4191
      %v4193 = vand.u32 %v4192, 4294901760
      %4194 = vmatmul.mubr.f32.gmra.mrb[0].mxu0 %v4193
      %v4195 = vpop.f32.mrb[0].mxu0
      %v4196 = vadd.f32 0.0, %v4195
      %v4197 = vpop.f32.mrb[0].mxu0
      %v4198 = vadd.f32 0.0, %v4197
      %4199 = vdwg.mxu0
      %v4200 = vand.u32 %v262, 4294901760
      %v4201 = vsub.f32 %v262, %v4200
      %v4202 = vand.u32 %v4201, 4294901760
      %v4203 = vsub.f32 %v4201, %v4202
      %v4204 = vand.u32 %v4203, 4294901760
      %4205 = vmatprep.subr.mxu0 %v4204
      %v4206 = vand.u32 %v261, 4294901760
      %v4207 = vsub.f32 %v261, %v4206
      %v4208 = vand.u32 %v4207, 4294901760
      %v4209 = vsub.f32 %v4207, %v4208
      %v4210 = vand.u32 %v4209, 4294901760
      %4211 = vmatpush1.msra.mxu0 %v4210
      %v4212 = vand.u32 %v4118, 4294901760
      %v4213 = vsub.f32 %v4118, %v4212
      %v4214 = vand.u32 %v4213, 4294901760
      %v4215 = vsub.f32 %v4213, %v4214
      %v4216 = vand.u32 %v4215, 4294901760
      %4217 = vmatprep.subr.mxu0 %v4216
      %v4218 = vand.u32 %v4115, 4294901760
      %v4219 = vsub.f32 %v4115, %v4218
      %v4220 = vand.u32 %v4219, 4294901760
      %v4221 = vsub.f32 %v4219, %v4220
      %v4222 = vand.u32 %v4221, 4294901760
      %4223 = vmatpush1.msra.mxu0 %v4222
      %4224 = vmatprep.subr.mxu0 0.0
      %4225 = vmatpush1.msra.mxu0 0.0
      %4226 = vmatprep.subr.mxu0 0.0
      %4227 = vmatpush1.msra.mxu0 0.0
      %4228 = vmatprep.subr.mxu0 0.0
      %4229 = vmatpush1.msra.mxu0 0.0
      %4230 = vmatprep.subr.mxu0 0.0
      %4231 = vmatpush1.msra.mxu0 0.0
      %4232 = vmatprep.subr.mxu0 0.0
      %4233 = vmatpush1.msra.mxu0 0.0
      %4234 = vmatprep.subr.mxu0 0.0
      %4235 = vmatpush1.msra.mxu0 0.0
      %4236 = vmatprep.subr.mxu0 0.0
      %4237 = vmatpush1.msra.mxu0 0.0
      %4238 = vmatprep.subr.mxu0 0.0
      %4239 = vmatpush1.msra.mxu0 0.0
      %4240 = vmatprep.subr.mxu0 0.0
      %4241 = vmatpush1.msra.mxu0 0.0
      %4242 = vmatprep.subr.mxu0 0.0
      %4243 = vmatpush1.msra.mxu0 0.0
      %4244 = vmatprep.subr.mxu0 0.0
      %4245 = vmatpush1.msra.mxu0 0.0
      %4246 = vmatprep.subr.mxu0 0.0
      %4247 = vmatpush1.msra.mxu0 0.0
      %4248 = vmatprep.subr.mxu0 0.0
      %4249 = vmatpush1.msra.mxu0 0.0
      %4250 = vmatprep.subr.mxu0 0.0
      %4251 = vmatpush1.msra.mxu0 0.0
      %4252 = vmatprep.subr.mxu0 0.0
      %4253 = vmatpush1.msra.mxu0 0.0
      %4254 = vmatprep.subr.mxu0 0.0
      %4255 = vmatpush1.msra.mxu0 0.0
      %4256 = vmatprep.subr.mxu0 0.0
      %4257 = vmatpush1.msra.mxu0 0.0
      %4258 = vmatprep.subr.mxu0 0.0
      %4259 = vmatpush1.msra.mxu0 0.0
      %4260 = vmatprep.subr.mxu0 0.0
      %4261 = vmatpush1.msra.mxu0 0.0
      %4262 = vmatprep.subr.mxu0 0.0
      %4263 = vmatpush1.msra.mxu0 0.0
      %4264 = vmatprep.subr.mxu0 0.0
      %4265 = vmatpush1.msra.mxu0 0.0
      %4266 = vmatprep.subr.mxu0 0.0
      %4267 = vmatpush1.msra.mxu0 0.0
      %4268 = vmatprep.subr.mxu0 0.0
      %4269 = vmatpush1.msra.mxu0 0.0
      %4270 = vmatprep.subr.mxu0 0.0
      %4271 = vmatpush1.msra.mxu0 0.0
      %4272 = vmatprep.subr.mxu0 0.0
      %4273 = vmatpush1.msra.mxu0 0.0
      %4274 = vmatprep.subr.mxu0 0.0
      %4275 = vmatpush1.msra.mxu0 0.0
      %4276 = vmatprep.subr.mxu0 0.0
      %4277 = vmatpush1.msra.mxu0 0.0
      %4278 = vmatprep.subr.mxu0 0.0
      %4279 = vmatpush1.msra.mxu0 0.0
      %4280 = vmatprep.subr.mxu0 0.0
      %4281 = vmatpush1.msra.mxu0 0.0
      %4282 = vmatprep.subr.mxu0 0.0
      %4283 = vmatpush1.msra.mxu0 0.0
      %4284 = vmatprep.mubr.f32.mxu0 0.0
      %v4285 = vand.u32 %v4112, 4294901760
      %4286 = vmatmul.mubr.f32.gmra.mrb[0].mxu0 %v4285
      %v4287 = vpop.f32.mrb[0].mxu0
      %v4288 = vadd.f32 %v4196, %v4287
      %v4289 = vpop.f32.mrb[0].mxu0
      %v4290 = vadd.f32 %v4198, %v4289
      %4291 = vdwg.mxu0
      %v4292 = vand.u32 %v262, 4294901760
      %v4293 = vsub.f32 %v262, %v4292
      %4294 = vmatprep.subr.mxu0 %v4293
      %v4295 = vand.u32 %v261, 4294901760
      %v4296 = vsub.f32 %v261, %v4295
      %4297 = vmatpush1.msra.mxu0 %v4296
      %v4298 = vand.u32 %v4118, 4294901760
      %v4299 = vsub.f32 %v4118, %v4298
      %4300 = vmatprep.subr.mxu0 %v4299
      %v4301 = vand.u32 %v4115, 4294901760
      %v4302 = vsub.f32 %v4115, %v4301
      %4303 = vmatpush1.msra.mxu0 %v4302
      %4304 = vmatprep.subr.mxu0 0.0
      %4305 = vmatpush1.msra.mxu0 0.0
      %4306 = vmatprep.subr.mxu0 0.0
      %4307 = vmatpush1.msra.mxu0 0.0
      %4308 = vmatprep.subr.mxu0 0.0
      %4309 = vmatpush1.msra.mxu0 0.0
      %4310 = vmatprep.subr.mxu0 0.0
      %4311 = vmatpush1.msra.mxu0 0.0
      %4312 = vmatprep.subr.mxu0 0.0
      %4313 = vmatpush1.msra.mxu0 0.0
      %4314 = vmatprep.subr.mxu0 0.0
      %4315 = vmatpush1.msra.mxu0 0.0
      %4316 = vmatprep.subr.mxu0 0.0
      %4317 = vmatpush1.msra.mxu0 0.0
      %4318 = vmatprep.subr.mxu0 0.0
      %4319 = vmatpush1.msra.mxu0 0.0
      %4320 = vmatprep.subr.mxu0 0.0
      %4321 = vmatpush1.msra.mxu0 0.0
      %4322 = vmatprep.subr.mxu0 0.0
      %4323 = vmatpush1.msra.mxu0 0.0
      %4324 = vmatprep.subr.mxu0 0.0
      %4325 = vmatpush1.msra.mxu0 0.0
      %4326 = vmatprep.subr.mxu0 0.0
      %4327 = vmatpush1.msra.mxu0 0.0
      %4328 = vmatprep.subr.mxu0 0.0
      %4329 = vmatpush1.msra.mxu0 0.0
      %4330 = vmatprep.subr.mxu0 0.0
      %4331 = vmatpush1.msra.mxu0 0.0
      %4332 = vmatprep.subr.mxu0 0.0
      %4333 = vmatpush1.msra.mxu0 0.0
      %4334 = vmatprep.subr.mxu0 0.0
      %4335 = vmatpush1.msra.mxu0 0.0
      %4336 = vmatprep.subr.mxu0 0.0
      %4337 = vmatpush1.msra.mxu0 0.0
      %4338 = vmatprep.subr.mxu0 0.0
      %4339 = vmatpush1.msra.mxu0 0.0
      %4340 = vmatprep.subr.mxu0 0.0
      %4341 = vmatpush1.msra.mxu0 0.0
      %4342 = vmatprep.subr.mxu0 0.0
      %4343 = vmatpush1.msra.mxu0 0.0
      %4344 = vmatprep.subr.mxu0 0.0
      %4345 = vmatpush1.msra.mxu0 0.0
      %4346 = vmatprep.subr.mxu0 0.0
      %4347 = vmatpush1.msra.mxu0 0.0
      %4348 = vmatprep.subr.mxu0 0.0
      %4349 = vmatpush1.msra.mxu0 0.0
      %4350 = vmatprep.subr.mxu0 0.0
      %4351 = vmatpush1.msra.mxu0 0.0
      %4352 = vmatprep.subr.mxu0 0.0
      %4353 = vmatpush1.msra.mxu0 0.0
      %4354 = vmatprep.subr.mxu0 0.0
      %4355 = vmatpush1.msra.mxu0 0.0
      %4356 = vmatprep.subr.mxu0 0.0
      %4357 = vmatpush1.msra.mxu0 0.0
      %4358 = vmatprep.subr.mxu0 0.0
      %4359 = vmatpush1.msra.mxu0 0.0
      %4360 = vmatprep.subr.mxu0 0.0
      %4361 = vmatpush1.msra.mxu0 0.0
      %4362 = vmatprep.subr.mxu0 0.0
      %4363 = vmatpush1.msra.mxu0 0.0
      %4364 = vmatprep.mubr.f32.mxu0 0.0
      %v4365 = vand.u32 %v4112, 4294901760
      %v4366 = vsub.f32 %v4112, %v4365
      %4367 = vmatmul.mubr.f32.gmra.mrb[0].mxu0 %v4366
      %v4368 = vpop.f32.mrb[0].mxu0
      %v4369 = vadd.f32 %v4288, %v4368
      %v4370 = vpop.f32.mrb[0].mxu0
      %v4371 = vadd.f32 %v4290, %v4370
      %4372 = vdwg.mxu0
      %v4373 = vand.u32 %v262, 4294901760
      %4374 = vmatprep.subr.mxu0 %v4373
      %v4375 = vand.u32 %v261, 4294901760
      %4376 = vmatpush1.msra.mxu0 %v4375
      %v4377 = vand.u32 %v4118, 4294901760
      %4378 = vmatprep.subr.mxu0 %v4377
      %v4379 = vand.u32 %v4115, 4294901760
      %4380 = vmatpush1.msra.mxu0 %v4379
      %4381 = vmatprep.subr.mxu0 0.0
      %4382 = vmatpush1.msra.mxu0 0.0
      %4383 = vmatprep.subr.mxu0 0.0
      %4384 = vmatpush1.msra.mxu0 0.0
      %4385 = vmatprep.subr.mxu0 0.0
      %4386 = vmatpush1.msra.mxu0 0.0
      %4387 = vmatprep.subr.mxu0 0.0
      %4388 = vmatpush1.msra.mxu0 0.0
      %4389 = vmatprep.subr.mxu0 0.0
      %4390 = vmatpush1.msra.mxu0 0.0
      %4391 = vmatprep.subr.mxu0 0.0
      %4392 = vmatpush1.msra.mxu0 0.0
      %4393 = vmatprep.subr.mxu0 0.0
      %4394 = vmatpush1.msra.mxu0 0.0
      %4395 = vmatprep.subr.mxu0 0.0
      %4396 = vmatpush1.msra.mxu0 0.0
      %4397 = vmatprep.subr.mxu0 0.0
      %4398 = vmatpush1.msra.mxu0 0.0
      %4399 = vmatprep.subr.mxu0 0.0
      %4400 = vmatpush1.msra.mxu0 0.0
      %4401 = vmatprep.subr.mxu0 0.0
      %4402 = vmatpush1.msra.mxu0 0.0
      %4403 = vmatprep.subr.mxu0 0.0
      %4404 = vmatpush1.msra.mxu0 0.0
      %4405 = vmatprep.subr.mxu0 0.0
      %4406 = vmatpush1.msra.mxu0 0.0
      %4407 = vmatprep.subr.mxu0 0.0
      %4408 = vmatpush1.msra.mxu0 0.0
      %4409 = vmatprep.subr.mxu0 0.0
      %4410 = vmatpush1.msra.mxu0 0.0
      %4411 = vmatprep.subr.mxu0 0.0
      %4412 = vmatpush1.msra.mxu0 0.0
      %4413 = vmatprep.subr.mxu0 0.0
      %4414 = vmatpush1.msra.mxu0 0.0
      %4415 = vmatprep.subr.mxu0 0.0
      %4416 = vmatpush1.msra.mxu0 0.0
      %4417 = vmatprep.subr.mxu0 0.0
      %4418 = vmatpush1.msra.mxu0 0.0
      %4419 = vmatprep.subr.mxu0 0.0
      %4420 = vmatpush1.msra.mxu0 0.0
      %4421 = vmatprep.subr.mxu0 0.0
      %4422 = vmatpush1.msra.mxu0 0.0
      %4423 = vmatprep.subr.mxu0 0.0
      %4424 = vmatpush1.msra.mxu0 0.0
      %4425 = vmatprep.subr.mxu0 0.0
      %4426 = vmatpush1.msra.mxu0 0.0
      %4427 = vmatprep.subr.mxu0 0.0
      %4428 = vmatpush1.msra.mxu0 0.0
      %4429 = vmatprep.subr.mxu0 0.0
      %4430 = vmatpush1.msra.mxu0 0.0
      %4431 = vmatprep.subr.mxu0 0.0
      %4432 = vmatpush1.msra.mxu0 0.0
      %4433 = vmatprep.subr.mxu0 0.0
      %4434 = vmatpush1.msra.mxu0 0.0
      %4435 = vmatprep.subr.mxu0 0.0
      %4436 = vmatpush1.msra.mxu0 0.0
      %4437 = vmatprep.subr.mxu0 0.0
      %4438 = vmatpush1.msra.mxu0 0.0
      %4439 = vmatprep.subr.mxu0 0.0
      %4440 = vmatpush1.msra.mxu0 0.0
      %4441 = vmatprep.mubr.f32.mxu0 0.0
      %v4442 = vand.u32 %v4112, 4294901760
      %v4443 = vsub.f32 %v4112, %v4442
      %v4444 = vand.u32 %v4443, 4294901760
      %4445 = vmatmul.mubr.f32.gmra.mrb[0].mxu0 %v4444
      %v4446 = vpop.f32.mrb[0].mxu0
      %v4447 = vadd.f32 %v4369, %v4446
      %v4448 = vpop.f32.mrb[0].mxu0
      %v4449 = vadd.f32 %v4371, %v4448
      %4450 = vdwg.mxu0
      %v4451 = vand.u32 %v262, 4294901760
      %v4452 = vsub.f32 %v262, %v4451
      %v4453 = vand.u32 %v4452, 4294901760
      %4454 = vmatprep.subr.mxu0 %v4453
      %v4455 = vand.u32 %v261, 4294901760
      %v4456 = vsub.f32 %v261, %v4455
      %v4457 = vand.u32 %v4456, 4294901760
      %4458 = vmatpush1.msra.mxu0 %v4457
      %v4459 = vand.u32 %v4118, 4294901760
      %v4460 = vsub.f32 %v4118, %v4459
      %v4461 = vand.u32 %v4460, 4294901760
      %4462 = vmatprep.subr.mxu0 %v4461
      %v4463 = vand.u32 %v4115, 4294901760
      %v4464 = vsub.f32 %v4115, %v4463
      %v4465 = vand.u32 %v4464, 4294901760
      %4466 = vmatpush1.msra.mxu0 %v4465
      %4467 = vmatprep.subr.mxu0 0.0
      %4468 = vmatpush1.msra.mxu0 0.0
      %4469 = vmatprep.subr.mxu0 0.0
      %4470 = vmatpush1.msra.mxu0 0.0
      %4471 = vmatprep.subr.mxu0 0.0
      %4472 = vmatpush1.msra.mxu0 0.0
      %4473 = vmatprep.subr.mxu0 0.0
      %4474 = vmatpush1.msra.mxu0 0.0
      %4475 = vmatprep.subr.mxu0 0.0
      %4476 = vmatpush1.msra.mxu0 0.0
      %4477 = vmatprep.subr.mxu0 0.0
      %4478 = vmatpush1.msra.mxu0 0.0
      %4479 = vmatprep.subr.mxu0 0.0
      %4480 = vmatpush1.msra.mxu0 0.0
      %4481 = vmatprep.subr.mxu0 0.0
      %4482 = vmatpush1.msra.mxu0 0.0
      %4483 = vmatprep.subr.mxu0 0.0
      %4484 = vmatpush1.msra.mxu0 0.0
      %4485 = vmatprep.subr.mxu0 0.0
      %4486 = vmatpush1.msra.mxu0 0.0
      %4487 = vmatprep.subr.mxu0 0.0
      %4488 = vmatpush1.msra.mxu0 0.0
      %4489 = vmatprep.subr.mxu0 0.0
      %4490 = vmatpush1.msra.mxu0 0.0
      %4491 = vmatprep.subr.mxu0 0.0
      %4492 = vmatpush1.msra.mxu0 0.0
      %4493 = vmatprep.subr.mxu0 0.0
      %4494 = vmatpush1.msra.mxu0 0.0
      %4495 = vmatprep.subr.mxu0 0.0
      %4496 = vmatpush1.msra.mxu0 0.0
      %4497 = vmatprep.subr.mxu0 0.0
      %4498 = vmatpush1.msra.mxu0 0.0
      %4499 = vmatprep.subr.mxu0 0.0
      %4500 = vmatpush1.msra.mxu0 0.0
      %4501 = vmatprep.subr.mxu0 0.0
      %4502 = vmatpush1.msra.mxu0 0.0
      %4503 = vmatprep.subr.mxu0 0.0
      %4504 = vmatpush1.msra.mxu0 0.0
      %4505 = vmatprep.subr.mxu0 0.0
      %4506 = vmatpush1.msra.mxu0 0.0
      %4507 = vmatprep.subr.mxu0 0.0
      %4508 = vmatpush1.msra.mxu0 0.0
      %4509 = vmatprep.subr.mxu0 0.0
      %4510 = vmatpush1.msra.mxu0 0.0
      %4511 = vmatprep.subr.mxu0 0.0
      %4512 = vmatpush1.msra.mxu0 0.0
      %4513 = vmatprep.subr.mxu0 0.0
      %4514 = vmatpush1.msra.mxu0 0.0
      %4515 = vmatprep.subr.mxu0 0.0
      %4516 = vmatpush1.msra.mxu0 0.0
      %4517 = vmatprep.subr.mxu0 0.0
      %4518 = vmatpush1.msra.mxu0 0.0
      %4519 = vmatprep.subr.mxu0 0.0
      %4520 = vmatpush1.msra.mxu0 0.0
      %4521 = vmatprep.subr.mxu0 0.0
      %4522 = vmatpush1.msra.mxu0 0.0
      %4523 = vmatprep.subr.mxu0 0.0
      %4524 = vmatpush1.msra.mxu0 0.0
      %4525 = vmatprep.subr.mxu0 0.0
      %4526 = vmatpush1.msra.mxu0 0.0
      %4527 = vmatprep.mubr.f32.mxu0 0.0
      %v4528 = vand.u32 %v4112, 4294901760
      %4529 = vmatmul.mubr.f32.gmra.mrb[0].mxu0 %v4528
      %v4530 = vpop.f32.mrb[0].mxu0
      %v4531 = vadd.f32 %v4447, %v4530
      %v4532 = vpop.f32.mrb[0].mxu0
      %v4533 = vadd.f32 %v4449, %v4532
      %4534 = vdwg.mxu0
      %v4535 = vand.u32 %v262, 4294901760
      %4536 = vmatprep.subr.mxu0 %v4535
      %v4537 = vand.u32 %v261, 4294901760
      %4538 = vmatpush1.msra.mxu0 %v4537
      %v4539 = vand.u32 %v4118, 4294901760
      %4540 = vmatprep.subr.mxu0 %v4539
      %v4541 = vand.u32 %v4115, 4294901760
      %4542 = vmatpush1.msra.mxu0 %v4541
      %4543 = vmatprep.subr.mxu0 0.0
      %4544 = vmatpush1.msra.mxu0 0.0
      %4545 = vmatprep.subr.mxu0 0.0
      %4546 = vmatpush1.msra.mxu0 0.0
      %4547 = vmatprep.subr.mxu0 0.0
      %4548 = vmatpush1.msra.mxu0 0.0
      %4549 = vmatprep.subr.mxu0 0.0
      %4550 = vmatpush1.msra.mxu0 0.0
      %4551 = vmatprep.subr.mxu0 0.0
      %4552 = vmatpush1.msra.mxu0 0.0
      %4553 = vmatprep.subr.mxu0 0.0
      %4554 = vmatpush1.msra.mxu0 0.0
      %4555 = vmatprep.subr.mxu0 0.0
      %4556 = vmatpush1.msra.mxu0 0.0
      %4557 = vmatprep.subr.mxu0 0.0
      %4558 = vmatpush1.msra.mxu0 0.0
      %4559 = vmatprep.subr.mxu0 0.0
      %4560 = vmatpush1.msra.mxu0 0.0
      %4561 = vmatprep.subr.mxu0 0.0
      %4562 = vmatpush1.msra.mxu0 0.0
      %4563 = vmatprep.subr.mxu0 0.0
      %4564 = vmatpush1.msra.mxu0 0.0
      %4565 = vmatprep.subr.mxu0 0.0
      %4566 = vmatpush1.msra.mxu0 0.0
      %4567 = vmatprep.subr.mxu0 0.0
      %4568 = vmatpush1.msra.mxu0 0.0
      %4569 = vmatprep.subr.mxu0 0.0
      %4570 = vmatpush1.msra.mxu0 0.0
      %4571 = vmatprep.subr.mxu0 0.0
      %4572 = vmatpush1.msra.mxu0 0.0
      %4573 = vmatprep.subr.mxu0 0.0
      %4574 = vmatpush1.msra.mxu0 0.0
      %4575 = vmatprep.subr.mxu0 0.0
      %4576 = vmatpush1.msra.mxu0 0.0
      %4577 = vmatprep.subr.mxu0 0.0
      %4578 = vmatpush1.msra.mxu0 0.0
      %4579 = vmatprep.subr.mxu0 0.0
      %4580 = vmatpush1.msra.mxu0 0.0
      %4581 = vmatprep.subr.mxu0 0.0
      %4582 = vmatpush1.msra.mxu0 0.0
      %4583 = vmatprep.subr.mxu0 0.0
      %4584 = vmatpush1.msra.mxu0 0.0
      %4585 = vmatprep.subr.mxu0 0.0
      %4586 = vmatpush1.msra.mxu0 0.0
      %4587 = vmatprep.subr.mxu0 0.0
      %4588 = vmatpush1.msra.mxu0 0.0
      %4589 = vmatprep.subr.mxu0 0.0
      %4590 = vmatpush1.msra.mxu0 0.0
      %4591 = vmatprep.subr.mxu0 0.0
      %4592 = vmatpush1.msra.mxu0 0.0
      %4593 = vmatprep.subr.mxu0 0.0
      %4594 = vmatpush1.msra.mxu0 0.0
      %4595 = vmatprep.subr.mxu0 0.0
      %4596 = vmatpush1.msra.mxu0 0.0
      %4597 = vmatprep.subr.mxu0 0.0
      %4598 = vmatpush1.msra.mxu0 0.0
      %4599 = vmatprep.subr.mxu0 0.0
      %4600 = vmatpush1.msra.mxu0 0.0
      %4601 = vmatprep.subr.mxu0 0.0
      %4602 = vmatpush1.msra.mxu0 0.0
      %4603 = vmatprep.mubr.f32.mxu0 0.0
      %v4604 = vand.u32 %v4112, 4294901760
      %4605 = vmatmul.mubr.f32.gmra.mrb[0].mxu0 %v4604
      %v4606 = vpop.f32.mrb[0].mxu0
      %v4607 = vadd.f32 %v4531, %v4606
      %v4608 = vpop.f32.mrb[0].mxu0
      %v4609 = vadd.f32 %v4533, %v4608
      %4610 = vdwg.mxu0
      %v4611 = vlaneseq
      %v4612 = vshrl.u32 %v4611, 7
      %v4613 = vsub.s32 0, %v4612
      %v4614 = vrot.slane %v4107, %v4613
      %4616 = vbcast.lane.b32.xlu0 %v4614, 256
      %v4617 = vpop.permute.xlu0 %4616
      %s4619 = sor.u32 256, 8
      %4620 = vbcast.lane.b32.xlu0 %v4614, %s4619
      %v4621 = vpop.permute.xlu0 %4620
      %v4622 = vlaneseq
      %v4623 = vshrl.u32 %v4622, 7
      %v4624 = vsub.s32 1, %v4623
      %v4625 = vrot.slane %v4107, %v4624
      %4627 = vbcast.lane.b32.xlu0 %v4625, 256
      %v4628 = vpop.permute.xlu0 %4627
      %s4630 = sor.u32 256, 8
      %4631 = vbcast.lane.b32.xlu0 %v4625, %s4630
      %v4632 = vpop.permute.xlu0 %4631
      %v4633 = vlaneseq
      %v4634 = vshrl.u32 %v4633, 7
      %v4635 = vsub.s32 2, %v4634
      %v4636 = vrot.slane %v4107, %v4635
      %4638 = vbcast.lane.b32.xlu0 %v4636, 256
      %v4639 = vpop.permute.xlu0 %4638
      %s4641 = sor.u32 256, 8
      %4642 = vbcast.lane.b32.xlu0 %v4636, %s4641
      %v4643 = vpop.permute.xlu0 %4642
      %v4644 = vlaneseq
      %v4645 = vshrl.u32 %v4644, 7
      %v4646 = vsub.s32 3, %v4645
      %v4647 = vrot.slane %v4107, %v4646
      %4649 = vbcast.lane.b32.xlu0 %v4647, 256
      %v4650 = vpop.permute.xlu0 %4649
      %s4652 = sor.u32 256, 8
      %4653 = vbcast.lane.b32.xlu0 %v4647, %s4652
      %v4654 = vpop.permute.xlu0 %4653
      %v4655 = vmul.f32 %v270, %v4617
      %v4656 = vmul.f32 %v271, %v4617
      %v4657 = vmul.f32 %v272, %v4621
      %v4658 = vmul.f32 %v273, %v4621
      %v4659 = vmul.f32 %v274, %v4628
      %v4660 = vmul.f32 %v275, %v4628
      %v4661 = vmul.f32 %v276, %v4632
      %v4662 = vmul.f32 %v277, %v4632
      %v4663 = vmul.f32 %v278, %v4639
      %v4664 = vmul.f32 %v279, %v4639
      %v4665 = vmul.f32 %v280, %v4643
      %v4666 = vmul.f32 %v281, %v4643
      %v4667 = vmul.f32 %v282, %v4650
      %v4668 = vmul.f32 %v283, %v4650
      %v4669 = vmul.f32 %v284, %v4654
      %v4670 = vmul.f32 %v285, %v4654
      %v4673 = vcombine.low %v4607, %v4609
      %v4675 = vunpack.c.l.s4 1966171168
      %v4676 = vunpack.c.0.s8 %v4675
      %v4677 = vlaneseq
      %v4678 = vshrl.u32 %v4677, 7
      %v4679 = vsub.s32 %v4676, %v4678
      %v4680 = vrot.slane %v4673, %v4679
      %v4681 = vcombine.high %v4680, %v4680
      %v4683 = vunpack.c.l.s4 1966171168
      %v4684 = vunpack.c.0.s8 %v4683
      %v4685 = vlaneseq
      %v4686 = vshrl.u32 %v4685, 7
      %v4687 = vsub.s32 %v4684, %v4686
      %v4688 = vrot.slane %v4680, %v4687
      %v4690 = vunpack.c.l.s4 1966171168
      %v4691 = vunpack.c.0.s8 %v4690
      %v4692 = vlaneseq
      %v4693 = vshrl.u32 %v4692, 7
      %v4694 = vsub.s32 %v4691, %v4693
      %v4695 = vrot.slane %v4681, %v4694
      %v4696 = vcombine.high %v4688, %v4688
      %v4697 = vcombine.high %v4695, %v4695
      %v4698 = vlaneseq
      %v4699 = vshrl.u32 %v4698, 7
      %v4700 = vsub.s32 0, %v4699
      %v4701 = vrot.slane %v4688, %v4700
      %v4702 = vlaneseq
      %v4703 = vshrl.u32 %v4702, 7
      %v4704 = vsub.s32 1, %v4703
      %v4705 = vrot.slane %v4688, %v4704
      %v4706 = vlaneseq
      %v4707 = vshrl.u32 %v4706, 7
      %v4708 = vsub.s32 0, %v4707
      %v4709 = vrot.slane %v4695, %v4708
      %v4710 = vlaneseq
      %v4711 = vshrl.u32 %v4710, 7
      %v4712 = vsub.s32 1, %v4711
      %v4713 = vrot.slane %v4695, %v4712
      %v4714 = vlaneseq
      %v4715 = vshrl.u32 %v4714, 7
      %v4716 = vsub.s32 0, %v4715
      %v4717 = vrot.slane %v4696, %v4716
      %v4718 = vlaneseq
      %v4719 = vshrl.u32 %v4718, 7
      %v4720 = vsub.s32 1, %v4719
      %v4721 = vrot.slane %v4696, %v4720
      %v4722 = vlaneseq
      %v4723 = vshrl.u32 %v4722, 7
      %v4724 = vsub.s32 0, %v4723
      %v4725 = vrot.slane %v4697, %v4724
      %v4726 = vlaneseq
      %v4727 = vshrl.u32 %v4726, 7
      %v4728 = vsub.s32 1, %v4727
      %v4729 = vrot.slane %v4697, %v4728
      %v4738 = vmul.f32 %v4655, %v4701
      %v4739 = vmul.f32 %v4656, %v4705
      %v4740 = vmul.f32 %v4657, %v4701
      %v4741 = vmul.f32 %v4658, %v4705
      %v4742 = vmul.f32 %v4659, %v4709
      %v4743 = vmul.f32 %v4660, %v4713
      %v4744 = vmul.f32 %v4661, %v4709
      %v4745 = vmul.f32 %v4662, %v4713
      %v4746 = vmul.f32 %v4663, %v4717
      %v4747 = vmul.f32 %v4664, %v4721
      %v4748 = vmul.f32 %v4665, %v4717
      %v4749 = vmul.f32 %v4666, %v4721
      %v4750 = vmul.f32 %v4667, %v4725
      %v4751 = vmul.f32 %v4668, %v4729
      %v4752 = vmul.f32 %v4669, %v4725
      %v4753 = vmul.f32 %v4670, %v4729
      %4754 = vst [vmem:[%s224] sm:$0xff] %v4738
      %4755 = vst [vmem:[%s224 + $0x8] sm:$0xff] %v4739
      %4756 = vst [vmem:[%s224 + $0x10] sm:$0xff] %v4740
      %4757 = vst [vmem:[%s224 + $0x18] sm:$0xff] %v4741
      %4758 = vst [vmem:[%s224 + $0x20] sm:$0xff] %v4742
      %4759 = vst [vmem:[%s224 + $0x28] sm:$0xff] %v4743
      %4760 = vst [vmem:[%s224 + $0x30] sm:$0xff] %v4744
      %4761 = vst [vmem:[%s224 + $0x38] sm:$0xff] %v4745
      %4762 = vst [vmem:[%s224 + $0x40] sm:$0xff] %v4746
      %4763 = vst [vmem:[%s224 + $0x48] sm:$0xff] %v4747
      %4764 = vst [vmem:[%s224 + $0x50] sm:$0xff] %v4748
      %4765 = vst [vmem:[%s224 + $0x58] sm:$0xff] %v4749
      %4766 = vst [vmem:[%s224 + $0x60] sm:$0xff] %v4750
      %4767 = vst [vmem:[%s224 + $0x68] sm:$0xff] %v4751
      %4768 = vst [vmem:[%s224 + $0x70] sm:$0xff] %v4752
      %4769 = vst [vmem:[%s224 + $0x78] sm:$0xff] %v4753
      %p4770 = scmp.lt.s32.totalorder %s16, 1
      %s4771 = scalar_select %p4770, %s16, 1
      %s4772 = smul.addr %s4771, 16
      %s4773 = smul.addr %s4772, 8
      %s4774 = scalar_lea.vmem %s5, %s4773
      // Predicated region
      $region41: #{_forward_impl.1} parent=39 // pred_check
        %p4775 = pneg %p144
      $region42: #{_forward_impl.1} parent=39 // pred_check_branch
        %4777 = sbr.rel (%p4775) target = $region44
      $region43: #{_forward_impl.1} parent=39 // pred_region
        _
      $region44: #{_forward_impl.1} parent=39 // pred_fallthru
        _
    $region40: #{_forward_impl.1} parent=5 // pred_fallthru
      _
    %p4778 = scmp.le.s32.totalorder 2, %s11
    // Predicated region
    $region45: #{_forward_impl.1} parent=5 // pred_check
      %p4779 = pneg %p4778
    $region46: #{_forward_impl.1} parent=5 // pred_check_branch
      %4781 = sbr.rel (%p4779) target = $region48
    $region47: #{_forward_impl.1} parent=5 // pred_region
      %s4782 = ssub.s32 %s11, 2
      // Predicated region
      $region49: #{_forward_impl.1} parent=47 // pred_check
        %p4783 = pneg %p150
      $region50: #{_forward_impl.1} parent=47 // pred_check_branch
        %4785 = sbr.rel (%p4783) target = $region52
      $region51: #{_forward_impl.1} parent=47 // pred_region
        %p4786 = scmp.lt.s32.totalorder %s17, 1
        %s4787 = scalar_select %p4786, %s17, 1
        %s4788 = smul.addr %s4787, 16
        %s4789 = smul.addr %s4788, 8
        %s4790 = scalar_lea.vmem %s5, %s4789
      $region52: #{_forward_impl.1} parent=47 // pred_fallthru
        _
    $region48: #{_forward_impl.1} parent=5 // pred_fallthru
      _
  $region6: #{_forward_impl.1} parent=0 // loop_footer
    %s15 = sadd.s32 1, %s11
  $region7: #{_forward_impl.1} parent=0 // loop_footer_branch
    %10 = sbr.rel target = $region3
  $region8: #{_forward_impl.1} parent=0 // loop_exit
    _

</llo_original>
